<compile_context>
chip_gen: v7x
topology: tpu7x:2x2x1
jax: 0.10.0
libtpu: 0.0.40
codegen_flags: <defaults>
</compile_context>

<pallas_src>
import jax
import jax.numpy as jnp
from jax.experimental import pallas as pl
from jax.experimental.pallas import tpu as pltpu

NEG_SLOPE = 0.01   # nn.LeakyReLU() default
BN_EPS = 1e-5      # nn.BatchNorm2d default

_DEVICE_KIND = jax.devices()[0].device_kind.lower()
_IS_V5 = "v5" in _DEVICE_KIND
_IS_V7 = "v7" in _DEVICE_KIND


def _leaky(x):
    return jnp.where(x > 0, x, NEG_SLOPE * x)


def _choose_fuse_taps(cin: int) -> bool:
    """Trace-time choice: one fused K=9*Cin matmul vs 9 per-tap K=Cin matmuls."""
    mxu_depth = 128 if _IS_V5 else 256      # v5e MXU is 128 deep; v6e/v7x 256 (bf16)
    return cin < mxu_depth                   # fuse only when per-tap K underfills the MXU


def _vmem_limit_bytes(block_bytes: int, scratch_bytes: int) -> int:
    cap = (56 if _IS_V7 else 100) << 20      # headroom under 64 MiB (v7x) / 128 MiB physical
    need = 2 * block_bytes + scratch_bytes   # BlockSpec double-buffers every block
    return int(min(cap, max(32 << 20, 3 * need)))


def _conv3x3_mxu(xpad, w_ref, slab_ref, H, W, Cout, fuse_taps):
    """3x3 'same' cross-correlation of a zero-padded (H+2, W+2, C) bf16 tile.

    fuse_taps=True : 9 shifted taps are written into a bf16 VMEM slab (M, 9*C) and
                     multiplied against the (9*C, Cout) weight in ONE MXU matmul.
    fuse_taps=False: 9 accumulated K=C matmuls (no slab; MRB-friendly on v7x).
    Returns the raw conv output as (H*W, Cout) f32.
    """
    C = xpad.shape[-1]
    M = H * W
    if fuse_taps:
        for dy in range(3):
            for dx in range(3):
                t = dy * 3 + dx
                slab_ref[:, t * C:(t + 1) * C] = xpad[dy:dy + H, dx:dx + W, :].reshape(M, C)
        return jnp.dot(slab_ref[...], w_ref[...], preferred_element_type=jnp.float32)
    acc = jnp.zeros((M, Cout), jnp.float32)
    for dy in range(3):
        for dx in range(3):
            t = dy * 3 + dx
            acc = acc + jnp.dot(xpad[dy:dy + H, dx:dx + W, :].reshape(M, C),
                                w_ref[t * C:(t + 1) * C, :],
                                preferred_element_type=jnp.float32)
    return acc


def _tile_stats(y, st_ref):
    """Per-tile, per-channel mean and centered sum of squares (two-pass, f32)."""
    m = y.shape[0]
    mean_t = jnp.sum(y, axis=0, keepdims=True) * (1.0 / m)
    d = y - mean_t
    st_ref[0:1, :] = mean_t
    st_ref[1:2, :] = jnp.sum(d * d, axis=0, keepdims=True)


def _make_conv1_kernel(fuse_taps):
    def kernel(xp_ref, w_ref, h1_ref, st_ref, *scratch):
        Hp, Wp, _ = xp_ref.shape
        H, W = Hp - 2, Wp - 2
        Cout = w_ref.shape[-1]
        slab = scratch[0] if fuse_taps else None
        y = _conv3x3_mxu(xp_ref[...], w_ref, slab, H, W, Cout, fuse_taps)    # (M, Cout) f32
        h1_ref[...] = y.reshape(H, W, Cout).astype(h1_ref.dtype)             # bf16 intermediate
        _tile_stats(y, st_ref)
    return kernel


def _make_conv2_kernel(fuse_taps):
    def kernel(h1p_ref, s1_ref, b1_ref, w_ref, y2_ref, st_ref, *scratch):
        Hp, Wp, C = h1p_ref.shape
        H, W = Hp - 2, Wp - 2
        Cout = w_ref.shape[-1]
        # BN1 (folded global scale/shift) + LeakyReLU, f32 math, on the padded raw tile.
        a = _leaky(h1p_ref[...].astype(jnp.float32) * s1_ref[...] + b1_ref[...])
        # conv2's zero padding applies AFTER the activation; the affine made the 1-px
        # border non-zero, so mask it back to zero before building the taps.
        r = jax.lax.broadcasted_iota(jnp.int32, (Hp, Wp, C), 0)
        c = jax.lax.broadcasted_iota(jnp.int32, (Hp, Wp, C), 1)
        interior = (r >= 1) & (r <= H) & (c >= 1) & (c <= W)
        a = jnp.where(interior, a, 0.0).astype(jnp.bfloat16)
        slab = scratch[0] if fuse_taps else None
        y = _conv3x3_mxu(a, w_ref, slab, H, W, Cout, fuse_taps)              # (M, Cout) f32
        y2_ref[...] = y.reshape(H, W, Cout)
        _tile_stats(y, st_ref)
    return kernel


def _make_finalize_kernel():
    def kernel(y2_ref, x_ref, s2_ref, b2_ref, o_ref):
        h2 = _leaky(y2_ref[...] * s2_ref[...] + b2_ref[...])    # BN2 + LeakyReLU
        o_ref[...] = _leaky(h2 + x_ref[...])                     # residual + LeakyReLU
    return kernel


def _conv1_call(N, H, W, Cin, Cout, fuse_taps):
    Hp, Wp, M = H + 2, W + 2, H * W
    block_bytes = 2 * Hp * Wp * Cin + 2 * 9 * Cin * Cout + 2 * M * Cout + 4 * 2 * Cout
    scratch_bytes = (2 * M * 9 * Cin if fuse_taps else 0) + 4 * M * Cout
    return pl.pallas_call(
        _make_conv1_kernel(fuse_taps),
        grid=(N,),
        in_specs=[
            pl.BlockSpec((None, Hp, Wp, Cin), lambda n: (n, 0, 0, 0)),
            pl.BlockSpec((9 * Cin, Cout), lambda n: (0, 0)),
        ],
        out_specs=(
            pl.BlockSpec((None, H, W, Cout), lambda n: (n, 0, 0, 0)),
            pl.BlockSpec((None, 2, Cout), lambda n: (n, 0, 0)),
        ),
        out_shape=(
            jax.ShapeDtypeStruct((N, H, W, Cout), jnp.bfloat16),
            jax.ShapeDtypeStruct((N, 2, Cout), jnp.float32),
        ),
        scratch_shapes=([pltpu.VMEM((M, 9 * Cin), jnp.bfloat16)] if fuse_taps else []),
        compiler_params=pltpu.CompilerParams(
            dimension_semantics=("parallel",),
            vmem_limit_bytes=_vmem_limit_bytes(block_bytes, scratch_bytes)),
    )


def _conv2_call(N, H, W, C, fuse_taps):
    Hp, Wp, M = H + 2, W + 2, H * W
    block_bytes = 2 * Hp * Wp * C + 2 * 9 * C * C + 4 * M * C + 4 * 2 * C + 2 * 4 * C
    scratch_bytes = (2 * M * 9 * C if fuse_taps else 0) + 4 * (Hp * Wp * C + M * C)
    return pl.pallas_call(
        _make_conv2_kernel(fuse_taps),
        grid=(N,),
        in_specs=[
            pl.BlockSpec((None, Hp, Wp, C), lambda n: (n, 0, 0, 0)),
            pl.BlockSpec((1, C), lambda n: (0, 0)),
            pl.BlockSpec((1, C), lambda n: (0, 0)),
            pl.BlockSpec((9 * C, C), lambda n: (0, 0)),
        ],
        out_specs=(
            pl.BlockSpec((None, H, W, C), lambda n: (n, 0, 0, 0)),
            pl.BlockSpec((None, 2, C), lambda n: (n, 0, 0)),
        ),
        out_shape=(
            jax.ShapeDtypeStruct((N, H, W, C), jnp.float32),
            jax.ShapeDtypeStruct((N, 2, C), jnp.float32),
        ),
        scratch_shapes=([pltpu.VMEM((M, 9 * C), jnp.bfloat16)] if fuse_taps else []),
        compiler_params=pltpu.CompilerParams(
            dimension_semantics=("parallel",),
            vmem_limit_bytes=_vmem_limit_bytes(block_bytes, scratch_bytes)),
    )


def _finalize_call(N, H, W, C):
    block_bytes = 3 * 4 * H * W * C + 2 * 4 * C
    return pl.pallas_call(
        _make_finalize_kernel(),
        grid=(N,),
        in_specs=[
            pl.BlockSpec((None, H, W, C), lambda n: (n, 0, 0, 0)),
            pl.BlockSpec((None, H, W, C), lambda n: (n, 0, 0, 0)),
            pl.BlockSpec((1, C), lambda n: (0, 0)),
            pl.BlockSpec((1, C), lambda n: (0, 0)),
        ],
        out_specs=pl.BlockSpec((None, H, W, C), lambda n: (n, 0, 0, 0)),
        out_shape=jax.ShapeDtypeStruct((N, H, W, C), jnp.float32),
        compiler_params=pltpu.CompilerParams(
            dimension_semantics=("parallel",),
            vmem_limit_bytes=_vmem_limit_bytes(block_bytes, 0)),
    )


def _bn_scale_shift(stats, gamma, beta, tile_count):
    """Combine per-tile (mean, centered-SS) partials (Chan) into folded BN scale/shift."""
    tile_mean = stats[:, 0, :]                                   # (T, C)
    tile_m2 = stats[:, 1, :]                                     # (T, C)
    n_tiles = stats.shape[0]
    mean = jnp.mean(tile_mean, axis=0)                           # equal tile sizes
    m2 = jnp.sum(tile_m2, axis=0) + tile_count * jnp.sum(jnp.square(tile_mean - mean), axis=0)
    var = m2 / (n_tiles * tile_count)                            # biased var (train-mode BN)
    scale = gamma.astype(jnp.float32) * jax.lax.rsqrt(var + BN_EPS)
    shift = beta.astype(jnp.float32) - mean * scale
    return scale.reshape(1, -1), shift.reshape(1, -1)


@jax.jit
def residual_conv3x3_block(x_nchw, w1, b1, g1, bt1, w2, b2, g2, bt2):
    """x_nchw: (N, C, H, W) f32; w*: (3, 3, Cin, Cout) HWIO; b*/g*/bt*: (Cout,) f32.

    Conv biases b1/b2 are accepted for interface parity but not used: the train-mode
    BatchNorm right after each conv subtracts the batch mean, which absorbs any
    per-channel bias exactly (variance is shift-invariant).
    """
    N, C, H, W = x_nchw.shape
    Cout = w1.shape[-1]
    assert Cout == C, "residual add in the reference forward requires in==out channels"
    del b1, b2  # algebraically cancelled by the train-mode BatchNorm

    fuse = _choose_fuse_taps(C)

    x_nhwc = jnp.transpose(x_nchw, (0, 2, 3, 1)).astype(jnp.float32)
    x_pad_b = jnp.pad(x_nhwc, ((0, 0), (1, 1), (1, 1), (0, 0))).astype(jnp.bfloat16)
    w1k = w1.astype(jnp.float32).reshape(9 * C, Cout).astype(jnp.bfloat16)
    w2k = w2.astype(jnp.float32).reshape(9 * Cout, Cout).astype(jnp.bfloat16)

    # Phase 1: conv1 + per-tile BN1 partial stats.
    h1_raw, st1 = _conv1_call(N, H, W, C, Cout, fuse)(x_pad_b, w1k)
    scale1, shift1 = _bn_scale_shift(st1, g1, bt1, H * W)

    # Phase 2: BN1 apply + LeakyReLU + conv2 + per-tile BN2 partial stats.
    h1_pad = jnp.pad(h1_raw, ((0, 0), (1, 1), (1, 1), (0, 0)))
    y2_raw, st2 = _conv2_call(N, H, W, Cout, fuse)(h1_pad, scale1, shift1, w2k)
    scale2, shift2 = _bn_scale_shift(st2, g2, bt2, H * W)

    # Phase 3: BN2 apply + LeakyReLU + residual + LeakyReLU.
    out_nhwc = _finalize_call(N, H, W, Cout)(y2_raw, x_nhwc, scale2, shift2)
    return jnp.transpose(out_nhwc, (0, 3, 1, 2))


def _reference(x_nchw, params):
    """Pure-JAX reference mirroring the PyTorch forward (train-mode BatchNorm, with bias)."""
    def conv_bn_lrelu(x, w, b, g, bt):
        y = jax.lax.conv_general_dilated(
            x, w, window_strides=(1, 1), padding=((1, 1), (1, 1)),
            dimension_numbers=('NCHW', 'HWIO', 'NCHW'),
            precision=jax.lax.Precision.HIGHEST)
        y = y + b[None, :, None, None]
        mean = jnp.mean(y, axis=(0, 2, 3), keepdims=True)
        var = jnp.mean((y - mean) ** 2, axis=(0, 2, 3), keepdims=True)
        y = (y - mean) * jax.lax.rsqrt(var + BN_EPS)
        y = y * g[None, :, None, None] + bt[None, :, None, None]
        return _leaky(y)

    h = conv_bn_lrelu(x_nchw, *params[0])
    h = conv_bn_lrelu(h, *params[1])
    return _leaky(h + x_nchw)


if __name__ == "__main__":
    # Small shapes consistent with the module (residual add requires in == out channels).
    N, C, H, W = 2, 8, 16, 16
    key = jax.random.PRNGKey(0)
    ks = jax.random.split(key, 9)

    x = jax.random.normal(ks[0], (N, C, H, W), jnp.float32)

    w1 = 0.1 * jax.random.normal(ks[1], (3, 3, C, C), jnp.float32)   # HWIO
    b1 = 0.1 * jax.random.normal(ks[2], (C,), jnp.float32)
    g1 = 1.0 + 0.1 * jax.random.normal(ks[3], (C,), jnp.float32)
    bt1 = 0.1 * jax.random.normal(ks[4], (C,), jnp.float32)
    w2 = 0.1 * jax.random.normal(ks[5], (3, 3, C, C), jnp.float32)
    b2 = 0.1 * jax.random.normal(ks[6], (C,), jnp.float32)
    g2 = 1.0 + 0.1 * jax.random.normal(ks[7], (C,), jnp.float32)
    bt2 = 0.1 * jax.random.normal(ks[8], (C,), jnp.float32)

    out = jax.block_until_ready(
        residual_conv3x3_block(x, w1, b1, g1, bt1, w2, b2, g2, bt2))

    ref = _reference(x, ((w1, b1, g1, bt1), (w2, b2, g2, bt2)))
    err = float(jnp.max(jnp.abs(out - ref)))
    # bf16 MXU operands / bf16 intermediate (f32 accumulation & BN math) vs f32 reference.
    assert out.shape == (N, C, H, W) and err < 5e-2, f"max abs err = {err}"
    print("KERNEL_OK")
</pallas_src>

<mosaic_0001>
module attributes {stable_mosaic.version = 11 : i64} {
  func.func @kernel(%arg0: i32, %arg1: memref<1x16x16x8xf32, #tpu.memory_space<vmem>>, %arg2: memref<1x16x16x8xf32, #tpu.memory_space<vmem>>, %arg3: memref<1x8xf32, #tpu.memory_space<vmem>>, %arg4: memref<1x8xf32, #tpu.memory_space<vmem>>, %arg5: memref<1x16x16x8xf32, #tpu.memory_space<vmem>>) attributes {dimension_semantics = [#tpu.dimension_semantics<parallel>], iteration_bounds = array<i64: 2>, scalar_prefetch = 0 : i64, scratch_operands = 0 : i64, tpu.core_type = #tpu.core_type<tc>, window_params = [{transform_indices = @transform_0, window_bounds = array<i64: 1, 16, 16, 8>}, {transform_indices = @transform_1, window_bounds = array<i64: 1, 16, 16, 8>}, {pipeline_mode = #tpu.pipeline_mode<synchronous>, transform_indices = @transform_2, window_bounds = array<i64: 1, 8>}, {pipeline_mode = #tpu.pipeline_mode<synchronous>, transform_indices = @transform_3, window_bounds = array<i64: 1, 8>}, {transform_indices = @transform_4, window_bounds = array<i64: 1, 16, 16, 8>}]} {
    %c0 = arith.constant 0 : index
    %c0_0 = arith.constant 0 : index
    %c0_1 = arith.constant 0 : index
    %c0_2 = arith.constant 0 : index
    %0 = vector.load %arg1[%c0, %c0_0, %c0_1, %c0_2] : memref<1x16x16x8xf32, #tpu.memory_space<vmem>>, vector<1x16x16x8xf32>
    %1 = vector.shape_cast %0 : vector<1x16x16x8xf32> to vector<16x16x8xf32>
    %c0_3 = arith.constant 0 : index
    %c0_4 = arith.constant 0 : index
    %2 = vector.load %arg3[%c0_3, %c0_4] : memref<1x8xf32, #tpu.memory_space<vmem>>, vector<1x8xf32>
    %3 = vector.shape_cast %2 : vector<1x8xf32> to vector<1x1x8xf32>
    %4 = vector.broadcast %3 : vector<1x1x8xf32> to vector<16x16x8xf32>
    %5 = arith.mulf %1, %4 : vector<16x16x8xf32>
    %c0_5 = arith.constant 0 : index
    %c0_6 = arith.constant 0 : index
    %6 = vector.load %arg4[%c0_5, %c0_6] : memref<1x8xf32, #tpu.memory_space<vmem>>, vector<1x8xf32>
    %7 = vector.shape_cast %6 : vector<1x8xf32> to vector<1x1x8xf32>
    %8 = vector.broadcast %7 : vector<1x1x8xf32> to vector<16x16x8xf32>
    %9 = arith.addf %5, %8 : vector<16x16x8xf32>
    %cst = arith.constant 0.000000e+00 : f32
    %10 = vector.broadcast %cst : f32 to vector<16x16x8xf32>
    %11 = arith.cmpf ogt, %9, %10 : vector<16x16x8xf32>
    %cst_7 = arith.constant 0.00999999977 : f32
    %12 = vector.broadcast %cst_7 : f32 to vector<16x16x8xf32>
    %13 = arith.mulf %12, %9 : vector<16x16x8xf32>
    %14 = arith.select %11, %9, %13 : vector<16x16x8xi1>, vector<16x16x8xf32>
    %c0_8 = arith.constant 0 : index
    %c0_9 = arith.constant 0 : index
    %c0_10 = arith.constant 0 : index
    %c0_11 = arith.constant 0 : index
    %15 = vector.load %arg2[%c0_8, %c0_9, %c0_10, %c0_11] : memref<1x16x16x8xf32, #tpu.memory_space<vmem>>, vector<1x16x16x8xf32>
    %16 = vector.shape_cast %15 : vector<1x16x16x8xf32> to vector<16x16x8xf32>
    %17 = arith.addf %14, %16 : vector<16x16x8xf32>
    %cst_12 = arith.constant 0.000000e+00 : f32
    %18 = vector.broadcast %cst_12 : f32 to vector<16x16x8xf32>
    %19 = arith.cmpf ogt, %17, %18 : vector<16x16x8xf32>
    %cst_13 = arith.constant 0.00999999977 : f32
    %20 = vector.broadcast %cst_13 : f32 to vector<16x16x8xf32>
    %21 = arith.mulf %20, %17 : vector<16x16x8xf32>
    %22 = arith.select %19, %17, %21 : vector<16x16x8xi1>, vector<16x16x8xf32>
    %c0_14 = arith.constant 0 : index
    %c0_15 = arith.constant 0 : index
    %c0_16 = arith.constant 0 : index
    %c0_17 = arith.constant 0 : index
    %23 = vector.load %arg5[%c0_14, %c0_15, %c0_16, %c0_17] : memref<1x16x16x8xf32, #tpu.memory_space<vmem>>, vector<1x16x16x8xf32>
    %24 = vector.shape_cast %23 : vector<1x16x16x8xf32> to vector<16x16x8xf32>
    %25 = vector.shape_cast %22 : vector<16x16x8xf32> to vector<1x16x16x8xf32>
    tpu.vector_store %arg5[%c0_14, %c0_15, %c0_16, %c0_17], %25 {strides = array<i32>} : memref<1x16x16x8xf32, #tpu.memory_space<vmem>>, vector<1x16x16x8xf32>,
    return
  }
  func.func @transform_0(%arg0: i32) -> (i32, i32, i32, i32) {
    %c0_i32 = arith.constant 0 : i32
    %c0_i32_0 = arith.constant 0 : i32
    %c0_i32_1 = arith.constant 0 : i32
    %c0_i32_2 = arith.constant 0 : i32
    return %arg0, %c0_i32, %c0_i32_0, %c0_i32_1 : i32, i32, i32, i32
  }
  func.func @transform_1(%arg0: i32) -> (i32, i32, i32, i32) {
    %c0_i32 = arith.constant 0 : i32
    %c0_i32_0 = arith.constant 0 : i32
    %c0_i32_1 = arith.constant 0 : i32
    %c0_i32_2 = arith.constant 0 : i32
    return %arg0, %c0_i32, %c0_i32_0, %c0_i32_1 : i32, i32, i32, i32
  }
  func.func @transform_2(%arg0: i32) -> (i32, i32) {
    %c0_i32 = arith.constant 0 : i32
    %c0_i32_0 = arith.constant 0 : i32
    %c0_i32_1 = arith.constant 0 : i32
    return %c0_i32, %c0_i32_0 : i32, i32
  }
  func.func @transform_3(%arg0: i32) -> (i32, i32) {
    %c0_i32 = arith.constant 0 : i32
    %c0_i32_0 = arith.constant 0 : i32
    %c0_i32_1 = arith.constant 0 : i32
    return %c0_i32, %c0_i32_0 : i32, i32
  }
  func.func @transform_4(%arg0: i32) -> (i32, i32, i32, i32) {
    %c0_i32 = arith.constant 0 : i32
    %c0_i32_0 = arith.constant 0 : i32
    %c0_i32_1 = arith.constant 0 : i32
    %c0_i32_2 = arith.constant 0 : i32
    return %arg0, %c0_i32, %c0_i32_0, %c0_i32_1 : i32, i32, i32, i32
  }
}

module attributes {stable_mosaic.version = 11 : i64} {
  func.func @kernel(%arg0: i32, %arg1: memref<1x18x18x8xbf16, #tpu.memory_space<vmem>>, %arg2: memref<72x8xbf16, #tpu.memory_space<vmem>>, %arg3: memref<1x16x16x8xbf16, #tpu.memory_space<vmem>>, %arg4: memref<1x2x8xf32, #tpu.memory_space<vmem>>, %arg5: memref<256x72xbf16, #tpu.memory_space<vmem>>) attributes {dimension_semantics = [#tpu.dimension_semantics<parallel>], iteration_bounds = array<i64: 2>, scalar_prefetch = 0 : i64, scratch_operands = 1 : i64, tpu.core_type = #tpu.core_type<tc>, window_params = [{transform_indices = @transform_0, window_bounds = array<i64: 1, 18, 18, 8>}, {pipeline_mode = #tpu.pipeline_mode<synchronous>, transform_indices = @transform_1, window_bounds = array<i64: 72, 8>}, {transform_indices = @transform_2, window_bounds = array<i64: 1, 16, 16, 8>}, {transform_indices = @transform_3, window_bounds = array<i64: 1, 2, 8>}]} {
    %c0 = arith.constant 0 : index
    %c0_0 = arith.constant 0 : index
    %c0_1 = arith.constant 0 : index
    %c0_2 = arith.constant 0 : index
    %0 = vector.load %arg1[%c0, %c0_0, %c0_1, %c0_2] : memref<1x18x18x8xbf16, #tpu.memory_space<vmem>>, vector<1x18x18x8xbf16>
    %1 = vector.shape_cast %0 : vector<1x18x18x8xbf16> to vector<18x18x8xbf16>
    %2 = vector.extract_strided_slice %1 {offsets = [0, 0, 0], sizes = [16, 16, 8], strides = [1, 1, 1]} : vector<18x18x8xbf16> to vector<16x16x8xbf16>
    %3 = vector.shape_cast %2 : vector<16x16x8xbf16> to vector<256x8xbf16>
    %c0_3 = arith.constant 0 : index
    %c0_4 = arith.constant 0 : index
    %4 = vector.load %arg5[%c0_3, %c0_4] : memref<256x72xbf16, #tpu.memory_space<vmem>>, vector<256x8xbf16>
    tpu.vector_store %arg5[%c0_3, %c0_4], %3 {strides = array<i32>} : memref<256x72xbf16, #tpu.memory_space<vmem>>, vector<256x8xbf16>,
    %5 = vector.extract_strided_slice %1 {offsets = [0, 1, 0], sizes = [16, 16, 8], strides = [1, 1, 1]} : vector<18x18x8xbf16> to vector<16x16x8xbf16>
    %6 = vector.shape_cast %5 : vector<16x16x8xbf16> to vector<256x8xbf16>
    %c0_5 = arith.constant 0 : index
    %c8 = arith.constant 8 : index
    %7 = vector.load %arg5[%c0_5, %c8] : memref<256x72xbf16, #tpu.memory_space<vmem>>, vector<256x8xbf16>
    tpu.vector_store %arg5[%c0_5, %c8], %6 {strides = array<i32>} : memref<256x72xbf16, #tpu.memory_space<vmem>>, vector<256x8xbf16>,
    %8 = vector.extract_strided_slice %1 {offsets = [0, 2, 0], sizes = [16, 16, 8], strides = [1, 1, 1]} : vector<18x18x8xbf16> to vector<16x16x8xbf16>
    %9 = vector.shape_cast %8 : vector<16x16x8xbf16> to vector<256x8xbf16>
    %c0_6 = arith.constant 0 : index
    %c16 = arith.constant 16 : index
    %10 = vector.load %arg5[%c0_6, %c16] : memref<256x72xbf16, #tpu.memory_space<vmem>>, vector<256x8xbf16>
    tpu.vector_store %arg5[%c0_6, %c16], %9 {strides = array<i32>} : memref<256x72xbf16, #tpu.memory_space<vmem>>, vector<256x8xbf16>,
    %11 = vector.extract_strided_slice %1 {offsets = [1, 0, 0], sizes = [16, 16, 8], strides = [1, 1, 1]} : vector<18x18x8xbf16> to vector<16x16x8xbf16>
    %12 = vector.shape_cast %11 : vector<16x16x8xbf16> to vector<256x8xbf16>
    %c0_7 = arith.constant 0 : index
    %c24 = arith.constant 24 : index
    %13 = vector.load %arg5[%c0_7, %c24] : memref<256x72xbf16, #tpu.memory_space<vmem>>, vector<256x8xbf16>
    tpu.vector_store %arg5[%c0_7, %c24], %12 {strides = array<i32>} : memref<256x72xbf16, #tpu.memory_space<vmem>>, vector<256x8xbf16>,
    %14 = vector.extract_strided_slice %1 {offsets = [1, 1, 0], sizes = [16, 16, 8], strides = [1, 1, 1]} : vector<18x18x8xbf16> to vector<16x16x8xbf16>
    %15 = vector.shape_cast %14 : vector<16x16x8xbf16> to vector<256x8xbf16>
    %c0_8 = arith.constant 0 : index
    %c32 = arith.constant 32 : index
    %16 = vector.load %arg5[%c0_8, %c32] : memref<256x72xbf16, #tpu.memory_space<vmem>>, vector<256x8xbf16>
    tpu.vector_store %arg5[%c0_8, %c32], %15 {strides = array<i32>} : memref<256x72xbf16, #tpu.memory_space<vmem>>, vector<256x8xbf16>,
    %17 = vector.extract_strided_slice %1 {offsets = [1, 2, 0], sizes = [16, 16, 8], strides = [1, 1, 1]} : vector<18x18x8xbf16> to vector<16x16x8xbf16>
    %18 = vector.shape_cast %17 : vector<16x16x8xbf16> to vector<256x8xbf16>
    %c0_9 = arith.constant 0 : index
    %c40 = arith.constant 40 : index
    %19 = vector.load %arg5[%c0_9, %c40] : memref<256x72xbf16, #tpu.memory_space<vmem>>, vector<256x8xbf16>
    tpu.vector_store %arg5[%c0_9, %c40], %18 {strides = array<i32>} : memref<256x72xbf16, #tpu.memory_space<vmem>>, vector<256x8xbf16>,
    %20 = vector.extract_strided_slice %1 {offsets = [2, 0, 0], sizes = [16, 16, 8], strides = [1, 1, 1]} : vector<18x18x8xbf16> to vector<16x16x8xbf16>
    %21 = vector.shape_cast %20 : vector<16x16x8xbf16> to vector<256x8xbf16>
    %c0_10 = arith.constant 0 : index
    %c48 = arith.constant 48 : index
    %22 = vector.load %arg5[%c0_10, %c48] : memref<256x72xbf16, #tpu.memory_space<vmem>>, vector<256x8xbf16>
    tpu.vector_store %arg5[%c0_10, %c48], %21 {strides = array<i32>} : memref<256x72xbf16, #tpu.memory_space<vmem>>, vector<256x8xbf16>,
    %23 = vector.extract_strided_slice %1 {offsets = [2, 1, 0], sizes = [16, 16, 8], strides = [1, 1, 1]} : vector<18x18x8xbf16> to vector<16x16x8xbf16>
    %24 = vector.shape_cast %23 : vector<16x16x8xbf16> to vector<256x8xbf16>
    %c0_11 = arith.constant 0 : index
    %c56 = arith.constant 56 : index
    %25 = vector.load %arg5[%c0_11, %c56] : memref<256x72xbf16, #tpu.memory_space<vmem>>, vector<256x8xbf16>
    tpu.vector_store %arg5[%c0_11, %c56], %24 {strides = array<i32>} : memref<256x72xbf16, #tpu.memory_space<vmem>>, vector<256x8xbf16>,
    %26 = vector.extract_strided_slice %1 {offsets = [2, 2, 0], sizes = [16, 16, 8], strides = [1, 1, 1]} : vector<18x18x8xbf16> to vector<16x16x8xbf16>
    %27 = vector.shape_cast %26 : vector<16x16x8xbf16> to vector<256x8xbf16>
    %c0_12 = arith.constant 0 : index
    %c64 = arith.constant 64 : index
    %28 = vector.load %arg5[%c0_12, %c64] : memref<256x72xbf16, #tpu.memory_space<vmem>>, vector<256x8xbf16>
    tpu.vector_store %arg5[%c0_12, %c64], %27 {strides = array<i32>} : memref<256x72xbf16, #tpu.memory_space<vmem>>, vector<256x8xbf16>,
    %c0_13 = arith.constant 0 : index
    %c0_14 = arith.constant 0 : index
    %29 = vector.load %arg5[%c0_13, %c0_14] : memref<256x72xbf16, #tpu.memory_space<vmem>>, vector<256x72xbf16>
    %c0_15 = arith.constant 0 : index
    %c0_16 = arith.constant 0 : index
    %30 = vector.load %arg2[%c0_15, %c0_16] : memref<72x8xbf16, #tpu.memory_space<vmem>>, vector<72x8xbf16>
    %cst = arith.constant dense<0.000000e+00> : vector<256x8xf32>
    %31 = tpu.matmul %29, %30, %cst {dimension_numbers = #tpu.dot_dimension_numbers<[1], [0], [0], [1], [0, 0, 1, 1], [], []>} : vector<256x72xbf16>, vector<72x8xbf16>, vector<256x8xf32> -> vector<256x8xf32>
    %32 = vector.shape_cast %31 : vector<256x8xf32> to vector<16x16x8xf32>
    %33 = arith.truncf %32 : vector<16x16x8xf32> to vector<16x16x8xbf16>
    %c0_17 = arith.constant 0 : index
    %c0_18 = arith.constant 0 : index
    %c0_19 = arith.constant 0 : index
    %c0_20 = arith.constant 0 : index
    %34 = vector.load %arg3[%c0_17, %c0_18, %c0_19, %c0_20] : memref<1x16x16x8xbf16, #tpu.memory_space<vmem>>, vector<1x16x16x8xbf16>
    %35 = vector.shape_cast %34 : vector<1x16x16x8xbf16> to vector<16x16x8xbf16>
    %36 = vector.shape_cast %33 : vector<16x16x8xbf16> to vector<1x16x16x8xbf16>
    tpu.vector_store %arg3[%c0_17, %c0_18, %c0_19, %c0_20], %36 {strides = array<i32>} : memref<1x16x16x8xbf16, #tpu.memory_space<vmem>>, vector<1x16x16x8xbf16>,
    %cst_21 = arith.constant dense<0.000000e+00> : vector<8xf32>
    %37 = vector.multi_reduction <add>, %31, %cst_21 [0] : vector<256x8xf32> to vector<8xf32>
    %38 = vector.shape_cast %37 : vector<8xf32> to vector<1x8xf32>
    %cst_22 = arith.constant 3.906250e-03 : f32
    %39 = vector.broadcast %cst_22 : f32 to vector<1x8xf32>
    %40 = arith.mulf %38, %39 : vector<1x8xf32>
    %41 = vector.broadcast %40 : vector<1x8xf32> to vector<256x8xf32>
    %42 = arith.subf %31, %41 : vector<256x8xf32>
    %c0_23 = arith.constant 0 : index
    %c0_24 = arith.constant 0 : index
    %c0_25 = arith.constant 0 : index
    %43 = vector.load %arg4[%c0_23, %c0_24, %c0_25] : memref<1x2x8xf32, #tpu.memory_space<vmem>>, vector<1x1x8xf32>
    %44 = vector.shape_cast %43 : vector<1x1x8xf32> to vector<1x8xf32>
    %45 = vector.shape_cast %40 : vector<1x8xf32> to vector<1x1x8xf32>
    tpu.vector_store %arg4[%c0_23, %c0_24, %c0_25], %45 {strides = array<i32>} : memref<1x2x8xf32, #tpu.memory_space<vmem>>, vector<1x1x8xf32>,
    %46 = arith.mulf %42, %42 : vector<256x8xf32>
    %cst_26 = arith.constant dense<0.000000e+00> : vector<8xf32>
    %47 = vector.multi_reduction <add>, %46, %cst_26 [0] : vector<256x8xf32> to vector<8xf32>
    %48 = vector.shape_cast %47 : vector<8xf32> to vector<1x8xf32>
    %c0_27 = arith.constant 0 : index
    %c1 = arith.constant 1 : index
    %c0_28 = arith.constant 0 : index
    %49 = vector.load %arg4[%c0_27, %c1, %c0_28] : memref<1x2x8xf32, #tpu.memory_space<vmem>>, vector<1x1x8xf32>
    %50 = vector.shape_cast %49 : vector<1x1x8xf32> to vector<1x8xf32>
    %51 = vector.shape_cast %48 : vector<1x8xf32> to vector<1x1x8xf32>
    tpu.vector_store %arg4[%c0_27, %c1, %c0_28], %51 {strides = array<i32>} : memref<1x2x8xf32, #tpu.memory_space<vmem>>, vector<1x1x8xf32>,
    return
  }
  func.func @transform_0(%arg0: i32) -> (i32, i32, i32, i32) {
    %c0_i32 = arith.constant 0 : i32
    %c0_i32_0 = arith.constant 0 : i32
    %c0_i32_1 = arith.constant 0 : i32
    %c0_i32_2 = arith.constant 0 : i32
    return %arg0, %c0_i32, %c0_i32_0, %c0_i32_1 : i32, i32, i32, i32
  }
  func.func @transform_1(%arg0: i32) -> (i32, i32) {
    %c0_i32 = arith.constant 0 : i32
    %c0_i32_0 = arith.constant 0 : i32
    %c0_i32_1 = arith.constant 0 : i32
    return %c0_i32, %c0_i32_0 : i32, i32
  }
  func.func @transform_2(%arg0: i32) -> (i32, i32, i32, i32) {
    %c0_i32 = arith.constant 0 : i32
    %c0_i32_0 = arith.constant 0 : i32
    %c0_i32_1 = arith.constant 0 : i32
    %c0_i32_2 = arith.constant 0 : i32
    return %arg0, %c0_i32, %c0_i32_0, %c0_i32_1 : i32, i32, i32, i32
  }
  func.func @transform_3(%arg0: i32) -> (i32, i32, i32) {
    %c0_i32 = arith.constant 0 : i32
    %c0_i32_0 = arith.constant 0 : i32
    %c0_i32_1 = arith.constant 0 : i32
    return %arg0, %c0_i32, %c0_i32_0 : i32, i32, i32
  }
}

module attributes {stable_mosaic.version = 11 : i64} {
  func.func @kernel(%arg0: i32, %arg1: memref<1x18x18x8xbf16, #tpu.memory_space<vmem>>, %arg2: memref<1x8xf32, #tpu.memory_space<vmem>>, %arg3: memref<1x8xf32, #tpu.memory_space<vmem>>, %arg4: memref<72x8xbf16, #tpu.memory_space<vmem>>, %arg5: memref<1x16x16x8xf32, #tpu.memory_space<vmem>>, %arg6: memref<1x2x8xf32, #tpu.memory_space<vmem>>, %arg7: memref<256x72xbf16, #tpu.memory_space<vmem>>) attributes {dimension_semantics = [#tpu.dimension_semantics<parallel>], iteration_bounds = array<i64: 2>, scalar_prefetch = 0 : i64, scratch_operands = 1 : i64, tpu.core_type = #tpu.core_type<tc>, window_params = [{transform_indices = @transform_0, window_bounds = array<i64: 1, 18, 18, 8>}, {pipeline_mode = #tpu.pipeline_mode<synchronous>, transform_indices = @transform_1, window_bounds = array<i64: 1, 8>}, {pipeline_mode = #tpu.pipeline_mode<synchronous>, transform_indices = @transform_2, window_bounds = array<i64: 1, 8>}, {pipeline_mode = #tpu.pipeline_mode<synchronous>, transform_indices = @transform_3, window_bounds = array<i64: 72, 8>}, {transform_indices = @transform_4, window_bounds = array<i64: 1, 16, 16, 8>}, {transform_indices = @transform_5, window_bounds = array<i64: 1, 2, 8>}]} {
    %c0 = arith.constant 0 : index
    %c0_0 = arith.constant 0 : index
    %c0_1 = arith.constant 0 : index
    %c0_2 = arith.constant 0 : index
    %0 = vector.load %arg1[%c0, %c0_0, %c0_1, %c0_2] : memref<1x18x18x8xbf16, #tpu.memory_space<vmem>>, vector<1x18x18x8xbf16>
    %1 = vector.shape_cast %0 : vector<1x18x18x8xbf16> to vector<18x18x8xbf16>
    %2 = arith.extf %1 : vector<18x18x8xbf16> to vector<18x18x8xf32>
    %c0_3 = arith.constant 0 : index
    %c0_4 = arith.constant 0 : index
    %3 = vector.load %arg2[%c0_3, %c0_4] : memref<1x8xf32, #tpu.memory_space<vmem>>, vector<1x8xf32>
    %4 = vector.shape_cast %3 : vector<1x8xf32> to vector<1x1x8xf32>
    %5 = vector.broadcast %4 : vector<1x1x8xf32> to vector<18x18x8xf32>
    %6 = arith.mulf %2, %5 : vector<18x18x8xf32>
    %c0_5 = arith.constant 0 : index
    %c0_6 = arith.constant 0 : index
    %7 = vector.load %arg3[%c0_5, %c0_6] : memref<1x8xf32, #tpu.memory_space<vmem>>, vector<1x8xf32>
    %8 = vector.shape_cast %7 : vector<1x8xf32> to vector<1x1x8xf32>
    %9 = vector.broadcast %8 : vector<1x1x8xf32> to vector<18x18x8xf32>
    %10 = arith.addf %6, %9 : vector<18x18x8xf32>
    %cst = arith.constant 0.000000e+00 : f32
    %11 = vector.broadcast %cst : f32 to vector<18x18x8xf32>
    %12 = arith.cmpf ogt, %10, %11 : vector<18x18x8xf32>
    %cst_7 = arith.constant 0.00999999977 : f32
    %13 = vector.broadcast %cst_7 : f32 to vector<18x18x8xf32>
    %14 = arith.mulf %13, %10 : vector<18x18x8xf32>
    %15 = arith.select %12, %10, %14 : vector<18x18x8xi1>, vector<18x18x8xf32>
    %16 = tpu.iota {dimensions = array<i32: 0>} : vector<18x18x8xi32>
    %17 = tpu.iota {dimensions = array<i32: 1>} : vector<18x18x8xi32>
    %c1_i32 = arith.constant 1 : i32
    %18 = vector.broadcast %c1_i32 : i32 to vector<18x18x8xi32>
    %19 = arith.cmpi sge, %16, %18 : vector<18x18x8xi32>
    %c16_i32 = arith.constant 16 : i32
    %20 = vector.broadcast %c16_i32 : i32 to vector<18x18x8xi32>
    %21 = arith.cmpi sle, %16, %20 : vector<18x18x8xi32>
    %22 = arith.andi %19, %21 : vector<18x18x8xi1>
    %c1_i32_8 = arith.constant 1 : i32
    %23 = vector.broadcast %c1_i32_8 : i32 to vector<18x18x8xi32>
    %24 = arith.cmpi sge, %17, %23 : vector<18x18x8xi32>
    %25 = arith.andi %22, %24 : vector<18x18x8xi1>
    %c16_i32_9 = arith.constant 16 : i32
    %26 = vector.broadcast %c16_i32_9 : i32 to vector<18x18x8xi32>
    %27 = arith.cmpi sle, %17, %26 : vector<18x18x8xi32>
    %28 = arith.andi %25, %27 : vector<18x18x8xi1>
    %cst_10 = arith.constant 0.000000e+00 : f32
    %29 = vector.broadcast %cst_10 : f32 to vector<18x18x8xf32>
    %30 = arith.select %28, %15, %29 : vector<18x18x8xi1>, vector<18x18x8xf32>
    %31 = arith.truncf %30 : vector<18x18x8xf32> to vector<18x18x8xbf16>
    %32 = vector.extract_strided_slice %31 {offsets = [0, 0, 0], sizes = [16, 16, 8], strides = [1, 1, 1]} : vector<18x18x8xbf16> to vector<16x16x8xbf16>
    %33 = vector.shape_cast %32 : vector<16x16x8xbf16> to vector<256x8xbf16>
    %c0_11 = arith.constant 0 : index
    %c0_12 = arith.constant 0 : index
    %34 = vector.load %arg7[%c0_11, %c0_12] : memref<256x72xbf16, #tpu.memory_space<vmem>>, vector<256x8xbf16>
    tpu.vector_store %arg7[%c0_11, %c0_12], %33 {strides = array<i32>} : memref<256x72xbf16, #tpu.memory_space<vmem>>, vector<256x8xbf16>,
    %35 = vector.extract_strided_slice %31 {offsets = [0, 1, 0], sizes = [16, 16, 8], strides = [1, 1, 1]} : vector<18x18x8xbf16> to vector<16x16x8xbf16>
    %36 = vector.shape_cast %35 : vector<16x16x8xbf16> to vector<256x8xbf16>
    %c0_13 = arith.constant 0 : index
    %c8 = arith.constant 8 : index
    %37 = vector.load %arg7[%c0_13, %c8] : memref<256x72xbf16, #tpu.memory_space<vmem>>, vector<256x8xbf16>
    tpu.vector_store %arg7[%c0_13, %c8], %36 {strides = array<i32>} : memref<256x72xbf16, #tpu.memory_space<vmem>>, vector<256x8xbf16>,
    %38 = vector.extract_strided_slice %31 {offsets = [0, 2, 0], sizes = [16, 16, 8], strides = [1, 1, 1]} : vector<18x18x8xbf16> to vector<16x16x8xbf16>
    %39 = vector.shape_cast %38 : vector<16x16x8xbf16> to vector<256x8xbf16>
    %c0_14 = arith.constant 0 : index
    %c16 = arith.constant 16 : index
    %40 = vector.load %arg7[%c0_14, %c16] : memref<256x72xbf16, #tpu.memory_space<vmem>>, vector<256x8xbf16>
    tpu.vector_store %arg7[%c0_14, %c16], %39 {strides = array<i32>} : memref<256x72xbf16, #tpu.memory_space<vmem>>, vector<256x8xbf16>,
    %41 = vector.extract_strided_slice %31 {offsets = [1, 0, 0], sizes = [16, 16, 8], strides = [1, 1, 1]} : vector<18x18x8xbf16> to vector<16x16x8xbf16>
    %42 = vector.shape_cast %41 : vector<16x16x8xbf16> to vector<256x8xbf16>
    %c0_15 = arith.constant 0 : index
    %c24 = arith.constant 24 : index
    %43 = vector.load %arg7[%c0_15, %c24] : memref<256x72xbf16, #tpu.memory_space<vmem>>, vector<256x8xbf16>
    tpu.vector_store %arg7[%c0_15, %c24], %42 {strides = array<i32>} : memref<256x72xbf16, #tpu.memory_space<vmem>>, vector<256x8xbf16>,
    %44 = vector.extract_strided_slice %31 {offsets = [1, 1, 0], sizes = [16, 16, 8], strides = [1, 1, 1]} : vector<18x18x8xbf16> to vector<16x16x8xbf16>
    %45 = vector.shape_cast %44 : vector<16x16x8xbf16> to vector<256x8xbf16>
    %c0_16 = arith.constant 0 : index
    %c32 = arith.constant 32 : index
    %46 = vector.load %arg7[%c0_16, %c32] : memref<256x72xbf16, #tpu.memory_space<vmem>>, vector<256x8xbf16>
    tpu.vector_store %arg7[%c0_16, %c32], %45 {strides = array<i32>} : memref<256x72xbf16, #tpu.memory_space<vmem>>, vector<256x8xbf16>,
    %47 = vector.extract_strided_slice %31 {offsets = [1, 2, 0], sizes = [16, 16, 8], strides = [1, 1, 1]} : vector<18x18x8xbf16> to vector<16x16x8xbf16>
    %48 = vector.shape_cast %47 : vector<16x16x8xbf16> to vector<256x8xbf16>
    %c0_17 = arith.constant 0 : index
    %c40 = arith.constant 40 : index
    %49 = vector.load %arg7[%c0_17, %c40] : memref<256x72xbf16, #tpu.memory_space<vmem>>, vector<256x8xbf16>
    tpu.vector_store %arg7[%c0_17, %c40], %48 {strides = array<i32>} : memref<256x72xbf16, #tpu.memory_space<vmem>>, vector<256x8xbf16>,
    %50 = vector.extract_strided_slice %31 {offsets = [2, 0, 0], sizes = [16, 16, 8], strides = [1, 1, 1]} : vector<18x18x8xbf16> to vector<16x16x8xbf16>
    %51 = vector.shape_cast %50 : vector<16x16x8xbf16> to vector<256x8xbf16>
    %c0_18 = arith.constant 0 : index
    %c48 = arith.constant 48 : index
    %52 = vector.load %arg7[%c0_18, %c48] : memref<256x72xbf16, #tpu.memory_space<vmem>>, vector<256x8xbf16>
    tpu.vector_store %arg7[%c0_18, %c48], %51 {strides = array<i32>} : memref<256x72xbf16, #tpu.memory_space<vmem>>, vector<256x8xbf16>,
    %53 = vector.extract_strided_slice %31 {offsets = [2, 1, 0], sizes = [16, 16, 8], strides = [1, 1, 1]} : vector<18x18x8xbf16> to vector<16x16x8xbf16>
    %54 = vector.shape_cast %53 : vector<16x16x8xbf16> to vector<256x8xbf16>
    %c0_19 = arith.constant 0 : index
    %c56 = arith.constant 56 : index
    %55 = vector.load %arg7[%c0_19, %c56] : memref<256x72xbf16, #tpu.memory_space<vmem>>, vector<256x8xbf16>
    tpu.vector_store %arg7[%c0_19, %c56], %54 {strides = array<i32>} : memref<256x72xbf16, #tpu.memory_space<vmem>>, vector<256x8xbf16>,
    %56 = vector.extract_strided_slice %31 {offsets = [2, 2, 0], sizes = [16, 16, 8], strides = [1, 1, 1]} : vector<18x18x8xbf16> to vector<16x16x8xbf16>
    %57 = vector.shape_cast %56 : vector<16x16x8xbf16> to vector<256x8xbf16>
    %c0_20 = arith.constant 0 : index
    %c64 = arith.constant 64 : index
    %58 = vector.load %arg7[%c0_20, %c64] : memref<256x72xbf16, #tpu.memory_space<vmem>>, vector<256x8xbf16>
    tpu.vector_store %arg7[%c0_20, %c64], %57 {strides = array<i32>} : memref<256x72xbf16, #tpu.memory_space<vmem>>, vector<256x8xbf16>,
    %c0_21 = arith.constant 0 : index
    %c0_22 = arith.constant 0 : index
    %59 = vector.load %arg7[%c0_21, %c0_22] : memref<256x72xbf16, #tpu.memory_space<vmem>>, vector<256x72xbf16>
    %c0_23 = arith.constant 0 : index
    %c0_24 = arith.constant 0 : index
    %60 = vector.load %arg4[%c0_23, %c0_24] : memref<72x8xbf16, #tpu.memory_space<vmem>>, vector<72x8xbf16>
    %cst_25 = arith.constant dense<0.000000e+00> : vector<256x8xf32>
    %61 = tpu.matmul %59, %60, %cst_25 {dimension_numbers = #tpu.dot_dimension_numbers<[1], [0], [0], [1], [0, 0, 1, 1], [], []>} : vector<256x72xbf16>, vector<72x8xbf16>, vector<256x8xf32> -> vector<256x8xf32>
    %62 = vector.shape_cast %61 : vector<256x8xf32> to vector<16x16x8xf32>
    %c0_26 = arith.constant 0 : index
    %c0_27 = arith.constant 0 : index
    %c0_28 = arith.constant 0 : index
    %c0_29 = arith.constant 0 : index
    %63 = vector.load %arg5[%c0_26, %c0_27, %c0_28, %c0_29] : memref<1x16x16x8xf32, #tpu.memory_space<vmem>>, vector<1x16x16x8xf32>
    %64 = vector.shape_cast %63 : vector<1x16x16x8xf32> to vector<16x16x8xf32>
    %65 = vector.shape_cast %62 : vector<16x16x8xf32> to vector<1x16x16x8xf32>
    tpu.vector_store %arg5[%c0_26, %c0_27, %c0_28, %c0_29], %65 {strides = array<i32>} : memref<1x16x16x8xf32, #tpu.memory_space<vmem>>, vector<1x16x16x8xf32>,
    %cst_30 = arith.constant dense<0.000000e+00> : vector<8xf32>
    %66 = vector.multi_reduction <add>, %61, %cst_30 [0] : vector<256x8xf32> to vector<8xf32>
    %67 = vector.shape_cast %66 : vector<8xf32> to vector<1x8xf32>
    %cst_31 = arith.constant 3.906250e-03 : f32
    %68 = vector.broadcast %cst_31 : f32 to vector<1x8xf32>
    %69 = arith.mulf %67, %68 : vector<1x8xf32>
    %70 = vector.broadcast %69 : vector<1x8xf32> to vector<256x8xf32>
    %71 = arith.subf %61, %70 : vector<256x8xf32>
    %c0_32 = arith.constant 0 : index
    %c0_33 = arith.constant 0 : index
    %c0_34 = arith.constant 0 : index
    %72 = vector.load %arg6[%c0_32, %c0_33, %c0_34] : memref<1x2x8xf32, #tpu.memory_space<vmem>>, vector<1x1x8xf32>
    %73 = vector.shape_cast %72 : vector<1x1x8xf32> to vector<1x8xf32>
    %74 = vector.shape_cast %69 : vector<1x8xf32> to vector<1x1x8xf32>
    tpu.vector_store %arg6[%c0_32, %c0_33, %c0_34], %74 {strides = array<i32>} : memref<1x2x8xf32, #tpu.memory_space<vmem>>, vector<1x1x8xf32>,
    %75 = arith.mulf %71, %71 : vector<256x8xf32>
    %cst_35 = arith.constant dense<0.000000e+00> : vector<8xf32>
    %76 = vector.multi_reduction <add>, %75, %cst_35 [0] : vector<256x8xf32> to vector<8xf32>
    %77 = vector.shape_cast %76 : vector<8xf32> to vector<1x8xf32>
    %c0_36 = arith.constant 0 : index
    %c1 = arith.constant 1 : index
    %c0_37 = arith.constant 0 : index
    %78 = vector.load %arg6[%c0_36, %c1, %c0_37] : memref<1x2x8xf32, #tpu.memory_space<vmem>>, vector<1x1x8xf32>
    %79 = vector.shape_cast %78 : vector<1x1x8xf32> to vector<1x8xf32>
    %80 = vector.shape_cast %77 : vector<1x8xf32> to vector<1x1x8xf32>
    tpu.vector_store %arg6[%c0_36, %c1, %c0_37], %80 {strides = array<i32>} : memref<1x2x8xf32, #tpu.memory_space<vmem>>, vector<1x1x8xf32>,
    return
  }
  func.func @transform_0(%arg0: i32) -> (i32, i32, i32, i32) {
    %c0_i32 = arith.constant 0 : i32
    %c0_i32_0 = arith.constant 0 : i32
    %c0_i32_1 = arith.constant 0 : i32
    %c0_i32_2 = arith.constant 0 : i32
    return %arg0, %c0_i32, %c0_i32_0, %c0_i32_1 : i32, i32, i32, i32
  }
  func.func @transform_1(%arg0: i32) -> (i32, i32) {
    %c0_i32 = arith.constant 0 : i32
    %c0_i32_0 = arith.constant 0 : i32
    %c0_i32_1 = arith.constant 0 : i32
    return %c0_i32, %c0_i32_0 : i32, i32
  }
  func.func @transform_2(%arg0: i32) -> (i32, i32) {
    %c0_i32 = arith.constant 0 : i32
    %c0_i32_0 = arith.constant 0 : i32
    %c0_i32_1 = arith.constant 0 : i32
    return %c0_i32, %c0_i32_0 : i32, i32
  }
  func.func @transform_3(%arg0: i32) -> (i32, i32) {
    %c0_i32 = arith.constant 0 : i32
    %c0_i32_0 = arith.constant 0 : i32
    %c0_i32_1 = arith.constant 0 : i32
    return %c0_i32, %c0_i32_0 : i32, i32
  }
  func.func @transform_4(%arg0: i32) -> (i32, i32, i32, i32) {
    %c0_i32 = arith.constant 0 : i32
    %c0_i32_0 = arith.constant 0 : i32
    %c0_i32_1 = arith.constant 0 : i32
    %c0_i32_2 = arith.constant 0 : i32
    return %arg0, %c0_i32, %c0_i32_0, %c0_i32_1 : i32, i32, i32, i32
  }
  func.func @transform_5(%arg0: i32) -> (i32, i32, i32) {
    %c0_i32 = arith.constant 0 : i32
    %c0_i32_0 = arith.constant 0 : i32
    %c0_i32_1 = arith.constant 0 : i32
    return %arg0, %c0_i32, %c0_i32_0 : i32, i32, i32
  }
}

</mosaic_0001>

<llo_original>
// kernel: residual_conv3x3_block.5
$region0: #{residual_conv3x3_block.5}
  #allocation0 [shape = 'u32[]', space=smem, size = 0x4, offset = 0x4, fixed_abs, tag = 'smem constant byte address 0x4 - core index']
  #allocation1 [shape = 'u32[144,128]{1,0:T(1,128)}', space=vmem, size = 0x12000, scoped, tag = 'internal scratch']
  %s0 = inlined_call_operand.vmem [shape: f32[2,16,16,8], index: 0, kind: input, shape index: {}]
  %s1 = inlined_call_operand.vmem [shape: f32[2,16,16,8], index: 1, kind: input, shape index: {}]
  %s2 = inlined_call_operand.vmem [shape: f32[1,8], index: 2, kind: input, shape index: {}]
  %s3 = inlined_call_operand.vmem [shape: f32[1,8], index: 3, kind: input, shape index: {}]
  %s4 = inlined_call_operand.vmem [shape: f32[2,16,16,8], index: 4, kind: output, shape index: {}]
  %s5 = sld [smem:[#allocation0]]
  $region49: #{residual_conv3x3_block.5} parent=0
    _
  %s7 = ssub.s32 1, %s5
  %s8 = scalar_select 0, %s7, %s5
  loop: start=0, step=1, limit=4
  $region2: #{residual_conv3x3_block.5} parent=0 // loop_pre_header
    _
  $region3: #{residual_conv3x3_block.5} parent=0 // loop_header
    %s10 = sphi 0, %s14
    %p11 = scmp.ge.s32.totalorder %s10, 4
    %s20 = sphi 0, %s22
    %s23 = sphi 0, %s20
    %s24 = sphi 0, %s23
    %s40 = sphi 0, %s24
    %s46 = sphi 0, %s48
    %s49 = sphi 0, %s46
    %s50 = sphi 0, %s49
    %s66 = sphi 0, %s50
    %s70 = sphi 0, %s70
    %s72 = sphi 0, %s70
    %s73 = sphi 0, %s72
    %s87 = sphi 0, %s73
    %s91 = sphi 0, %s91
    %s93 = sphi 0, %s91
    %s94 = sphi 0, %s93
    %s108 = sphi 0, %s94
    %s114 = sphi 0, %s116
    %s117 = sphi 0, %s114
    %s118 = sphi 0, %s117
    %s134 = sphi 0, %s118
  $region4: #{residual_conv3x3_block.5} parent=0 // loop_header_branch
    %13 = sbr.rel (%p11) target = $region8
  $region5: #{residual_conv3x3_block.5} parent=0 // loop_body
    %s15 = ssub.s32 %s10, 1
    %s16 = ssub.s32 %s10, 2
    %s17 = sadd.s32 %s10, 1
    %s18 = ssub.s32 %s10, %s17
    %p19 = scmp.eq.s32.totalorder %s18, 0
    %s21 = sadd.s32 %s20, 1
    %s22 = scalar_select %p19, %s20, %s21
    %p25 = pneg %p19
    %p26 = scmp.eq.s32.totalorder %s10, 1
    %p27 = por %p25, %p26
    %p28 = scmp.ne.s32.totalorder %s20, %s23
    %p29 = scmp.eq.s32.totalorder %s10, 0
    %p30 = por %p28, %p29
    %p31 = scmp.ne.s32.totalorder %s20, %s23
    %p32 = scmp.eq.s32.totalorder %s15, 1
    %p33 = por %p31, %p32
    %p34 = scmp.ne.s32.totalorder %s23, %s24
    %p35 = scmp.eq.s32.totalorder %s15, 0
    %p36 = por %p34, %p35
    %p37 = scmp.ne.s32.totalorder %s23, %s24
    %p38 = scmp.eq.s32.totalorder %s16, 1
    %p39 = por %p37, %p38
    %p41 = scmp.ne.s32.totalorder %s24, %s40
    %p42 = scmp.eq.s32.totalorder %s16, 0
    %p43 = por %p41, %p42
    %s44 = ssub.s32 %s10, %s17
    %p45 = scmp.eq.s32.totalorder %s44, 0
    %s47 = sadd.s32 %s46, 1
    %s48 = scalar_select %p45, %s46, %s47
    %p51 = pneg %p45
    %p52 = scmp.eq.s32.totalorder %s10, 1
    %p53 = por %p51, %p52
    %p54 = scmp.ne.s32.totalorder %s46, %s49
    %p55 = scmp.eq.s32.totalorder %s10, 0
    %p56 = por %p54, %p55
    %p57 = scmp.ne.s32.totalorder %s46, %s49
    %p58 = scmp.eq.s32.totalorder %s15, 1
    %p59 = por %p57, %p58
    %p60 = scmp.ne.s32.totalorder %s49, %s50
    %p61 = scmp.eq.s32.totalorder %s15, 0
    %p62 = por %p60, %p61
    %p63 = scmp.ne.s32.totalorder %s49, %s50
    %p64 = scmp.eq.s32.totalorder %s16, 1
    %p65 = por %p63, %p64
    %p67 = scmp.ne.s32.totalorder %s50, %s66
    %p68 = scmp.eq.s32.totalorder %s16, 0
    %p69 = por %p67, %p68
    %s71 = sadd.s32 %s70, 1
    %p74 = scmp.eq.s32.totalorder %s10, 1
    %p75 = scmp.ne.s32.totalorder %s70, %s72
    %p76 = scmp.eq.s32.totalorder %s10, 0
    %p77 = por %p75, %p76
    %p78 = scmp.ne.s32.totalorder %s70, %s72
    %p79 = scmp.eq.s32.totalorder %s15, 1
    %p80 = por %p78, %p79
    %p81 = scmp.ne.s32.totalorder %s72, %s73
    %p82 = scmp.eq.s32.totalorder %s15, 0
    %p83 = por %p81, %p82
    %p84 = scmp.ne.s32.totalorder %s72, %s73
    %p85 = scmp.eq.s32.totalorder %s16, 1
    %p86 = por %p84, %p85
    %p88 = scmp.ne.s32.totalorder %s73, %s87
    %p89 = scmp.eq.s32.totalorder %s16, 0
    %p90 = por %p88, %p89
    %s92 = sadd.s32 %s91, 1
    %p95 = scmp.eq.s32.totalorder %s10, 1
    %p96 = scmp.ne.s32.totalorder %s91, %s93
    %p97 = scmp.eq.s32.totalorder %s10, 0
    %p98 = por %p96, %p97
    %p99 = scmp.ne.s32.totalorder %s91, %s93
    %p100 = scmp.eq.s32.totalorder %s15, 1
    %p101 = por %p99, %p100
    %p102 = scmp.ne.s32.totalorder %s93, %s94
    %p103 = scmp.eq.s32.totalorder %s15, 0
    %p104 = por %p102, %p103
    %p105 = scmp.ne.s32.totalorder %s93, %s94
    %p106 = scmp.eq.s32.totalorder %s16, 1
    %p107 = por %p105, %p106
    %p109 = scmp.ne.s32.totalorder %s94, %s108
    %p110 = scmp.eq.s32.totalorder %s16, 0
    %p111 = por %p109, %p110
    %s112 = ssub.s32 %s10, %s17
    %p113 = scmp.eq.s32.totalorder %s112, 0
    %s115 = sadd.s32 %s114, 1
    %s116 = scalar_select %p113, %s114, %s115
    %p119 = pneg %p113
    %p120 = scmp.eq.s32.totalorder %s10, 1
    %p121 = por %p119, %p120
    %p122 = scmp.ne.s32.totalorder %s114, %s117
    %p123 = scmp.eq.s32.totalorder %s10, 0
    %p124 = por %p122, %p123
    %p125 = scmp.ne.s32.totalorder %s114, %s117
    %p126 = scmp.eq.s32.totalorder %s15, 1
    %p127 = por %p125, %p126
    %p128 = scmp.ne.s32.totalorder %s117, %s118
    %p129 = scmp.eq.s32.totalorder %s15, 0
    %p130 = por %p128, %p129
    %p131 = scmp.ne.s32.totalorder %s117, %s118
    %p132 = scmp.eq.s32.totalorder %s16, 1
    %p133 = por %p131, %p132
    %p135 = scmp.ne.s32.totalorder %s118, %s134
    %p136 = scmp.eq.s32.totalorder %s16, 0
    %p137 = por %p135, %p136
    %p138 = scmp.le.s32.totalorder 1, %s10
    %p139 = scmp.lt.s32.totalorder %s10, 3
    %p140 = pnand %p138, %p139
    %p141 = pneg %p140
    // Predicated region
    $region9: #{residual_conv3x3_block.5} parent=5 // pred_check
      _
    $region10: #{residual_conv3x3_block.5} parent=5 // pred_check_branch
      %143 = sbr.rel (%p140) target = $region12
    $region11: #{residual_conv3x3_block.5} parent=5 // pred_region
      %s144 = ssub.s32 %s10, 1
      // Predicated region
      $region13: #{residual_conv3x3_block.5} parent=11 // pred_check
        %p145 = pneg %p83
      $region14: #{residual_conv3x3_block.5} parent=11 // pred_check_branch
        %147 = sbr.rel (%p145) target = $region16
      $region15: #{residual_conv3x3_block.5} parent=11 // pred_region
        _
      $region16: #{residual_conv3x3_block.5} parent=11 // pred_fallthru
        _
      // Predicated region
      $region17: #{residual_conv3x3_block.5} parent=11 // pred_check
        %p148 = pneg %p104
      $region18: #{residual_conv3x3_block.5} parent=11 // pred_check_branch
        %150 = sbr.rel (%p148) target = $region20
      $region19: #{residual_conv3x3_block.5} parent=11 // pred_region
        _
      $region20: #{residual_conv3x3_block.5} parent=11 // pred_fallthru
        _
    $region12: #{residual_conv3x3_block.5} parent=5 // pred_fallthru
      _
    %p151 = scmp.lt.s32.totalorder %s10, 2
    // Predicated region
    $region21: #{residual_conv3x3_block.5} parent=5 // pred_check
      %p152 = pneg %p151
    $region22: #{residual_conv3x3_block.5} parent=5 // pred_check_branch
      %154 = sbr.rel (%p152) target = $region24
    $region23: #{residual_conv3x3_block.5} parent=5 // pred_region
      // Predicated region
      $region25: #{residual_conv3x3_block.5} parent=23 // pred_check
        %p155 = pneg %p30
      $region26: #{residual_conv3x3_block.5} parent=23 // pred_check_branch
        %157 = sbr.rel (%p155) target = $region28
      $region27: #{residual_conv3x3_block.5} parent=23 // pred_region
        %p158 = scmp.lt.s32.totalorder %s10, 1
        %s159 = scalar_select %p158, %s10, 1
        %s160 = smul.addr %s159, 32
        %s161 = smul.addr %s160, 8
        %s162 = scalar_lea.vmem %s0, %s161
      $region28: #{residual_conv3x3_block.5} parent=23 // pred_fallthru
        _
      // Predicated region
      $region29: #{residual_conv3x3_block.5} parent=23 // pred_check
        %p163 = pneg %p56
      $region30: #{residual_conv3x3_block.5} parent=23 // pred_check_branch
        %165 = sbr.rel (%p163) target = $region32
      $region31: #{residual_conv3x3_block.5} parent=23 // pred_region
        %p166 = scmp.lt.s32.totalorder %s10, 1
        %s167 = scalar_select %p166, %s10, 1
        %s168 = smul.addr %s167, 32
        %s169 = smul.addr %s168, 8
        %s170 = scalar_lea.vmem %s1, %s169
      $region32: #{residual_conv3x3_block.5} parent=23 // pred_fallthru
        _
    $region24: #{residual_conv3x3_block.5} parent=5 // pred_fallthru
      _
    %p171 = scmp.le.s32.totalorder 1, %s10
    %p172 = scmp.lt.s32.totalorder %s10, 3
    %p173 = pnand %p171, %p172
    %p174 = pneg %p173
    // Predicated region
    $region33: #{residual_conv3x3_block.5} parent=5 // pred_check
      _
    $region34: #{residual_conv3x3_block.5} parent=5 // pred_check_branch
      %176 = sbr.rel (%p173) target = $region36
    $region35: #{residual_conv3x3_block.5} parent=5 // pred_region
      %s177 = ssub.s32 %s10, 1
      %p178 = scmp.lt.s32.totalorder %s15, 1
      %s179 = scalar_select %p178, %s15, 1
      %s180 = smul.addr %s179, 32
      %s181 = smul.addr %s180, 8
      %s182 = scalar_lea.vmem %s0, %s181
      %p183 = pneg %p36
      %p184 = pneg %p33
      %p185 = scmp.lt.s32.totalorder %s15, 1
      %s186 = scalar_select %p185, %s15, 1
      %s187 = smul.addr %s186, 32
      %s188 = smul.addr %s187, 8
      %s189 = scalar_lea.vmem %s1, %s188
      %p190 = pneg %p62
      %p191 = pneg %p59
      %p192 = pneg %p83
      %p193 = pneg %p80
      %p194 = pneg %p104
      %p195 = pneg %p101
      %p196 = pneg %p130
      %p197 = pneg %p127
      %p198 = scmp.lt.s32.totalorder %s15, 1
      %s199 = scalar_select %p198, %s15, 1
      %s200 = smul.addr %s199, 32
      %s201 = smul.addr %s200, 8
      %s202 = scalar_lea.vmem %s4, %s201
      %p203 = scmp.lt.s32.totalorder %s15, 1
      %s204 = scalar_select %p203, %s15, 1
      %s205 = smul.addr %s204, 32
      %s206 = smul.addr %s205, 8
      %s207 = scalar_lea.vmem %s0, %s206
      %p208 = scmp.lt.s32.totalorder %s15, 1
      %s209 = scalar_select %p208, %s15, 1
      %s210 = smul.addr %s209, 32
      %s211 = smul.addr %s210, 8
      %s212 = scalar_lea.vmem %s1, %s211
      %p213 = scmp.lt.s32.totalorder %s15, 1
      %s214 = scalar_select %p213, %s15, 1
      %s215 = smul.addr %s214, 32
      %s216 = smul.addr %s215, 8
      %s217 = scalar_lea.vmem %s4, %s216
      %v218 = vld [vmem:[%s207] sm:$0xff]
      %v219 = vld [vmem:[%s207 + $0x8] sm:$0xff]
      %v220 = vld [vmem:[%s207 + $0x10] sm:$0xff]
      %v221 = vld [vmem:[%s207 + $0x18] sm:$0xff]
      %v222 = vld [vmem:[%s207 + $0x20] sm:$0xff]
      %v223 = vld [vmem:[%s207 + $0x28] sm:$0xff]
      %v224 = vld [vmem:[%s207 + $0x30] sm:$0xff]
      %v225 = vld [vmem:[%s207 + $0x38] sm:$0xff]
      %v226 = vld [vmem:[%s207 + $0x40] sm:$0xff]
      %v227 = vld [vmem:[%s207 + $0x48] sm:$0xff]
      %v228 = vld [vmem:[%s207 + $0x50] sm:$0xff]
      %v229 = vld [vmem:[%s207 + $0x58] sm:$0xff]
      %v230 = vld [vmem:[%s207 + $0x60] sm:$0xff]
      %v231 = vld [vmem:[%s207 + $0x68] sm:$0xff]
      %v232 = vld [vmem:[%s207 + $0x70] sm:$0xff]
      %v233 = vld [vmem:[%s207 + $0x78] sm:$0xff]
      %v234 = vld [vmem:[%s207 + $0x80] sm:$0xff]
      %v235 = vld [vmem:[%s207 + $0x88] sm:$0xff]
      %v236 = vld [vmem:[%s207 + $0x90] sm:$0xff]
      %v237 = vld [vmem:[%s207 + $0x98] sm:$0xff]
      %v238 = vld [vmem:[%s207 + $0xa0] sm:$0xff]
      %v239 = vld [vmem:[%s207 + $0xa8] sm:$0xff]
      %v240 = vld [vmem:[%s207 + $0xb0] sm:$0xff]
      %v241 = vld [vmem:[%s207 + $0xb8] sm:$0xff]
      %v242 = vld [vmem:[%s207 + $0xc0] sm:$0xff]
      %v243 = vld [vmem:[%s207 + $0xc8] sm:$0xff]
      %v244 = vld [vmem:[%s207 + $0xd0] sm:$0xff]
      %v245 = vld [vmem:[%s207 + $0xd8] sm:$0xff]
      %v246 = vld [vmem:[%s207 + $0xe0] sm:$0xff]
      %v247 = vld [vmem:[%s207 + $0xe8] sm:$0xff]
      %v248 = vld [vmem:[%s207 + $0xf0] sm:$0xff]
      %v249 = vld [vmem:[%s207 + $0xf8] sm:$0xff]
      %v250 = vld [vmem:[%s2] sm:$0x1]
      %v252 = vlaneseq
      %v253 = vshrl.u32 %v252, 7
      %v254 = vsub.s32 0, %v253
      %v255 = vrot.slane %v250, %v254
      %v257 = vmul.f32 %v218, %v255
      %v258 = vmul.f32 %v219, %v255
      %v259 = vmul.f32 %v220, %v255
      %v260 = vmul.f32 %v221, %v255
      %v261 = vmul.f32 %v222, %v255
      %v262 = vmul.f32 %v223, %v255
      %v263 = vmul.f32 %v224, %v255
      %v264 = vmul.f32 %v225, %v255
      %v265 = vmul.f32 %v226, %v255
      %v266 = vmul.f32 %v227, %v255
      %v267 = vmul.f32 %v228, %v255
      %v268 = vmul.f32 %v229, %v255
      %v269 = vmul.f32 %v230, %v255
      %v270 = vmul.f32 %v231, %v255
      %v271 = vmul.f32 %v232, %v255
      %v272 = vmul.f32 %v233, %v255
      %v273 = vmul.f32 %v234, %v255
      %v274 = vmul.f32 %v235, %v255
      %v275 = vmul.f32 %v236, %v255
      %v276 = vmul.f32 %v237, %v255
      %v277 = vmul.f32 %v238, %v255
      %v278 = vmul.f32 %v239, %v255
      %v279 = vmul.f32 %v240, %v255
      %v280 = vmul.f32 %v241, %v255
      %v281 = vmul.f32 %v242, %v255
      %v282 = vmul.f32 %v243, %v255
      %v283 = vmul.f32 %v244, %v255
      %v284 = vmul.f32 %v245, %v255
      %v285 = vmul.f32 %v246, %v255
      %v286 = vmul.f32 %v247, %v255
      %v287 = vmul.f32 %v248, %v255
      %v288 = vmul.f32 %v249, %v255
      %v289 = vld [vmem:[%s3] sm:$0x1]
      %v291 = vlaneseq
      %v292 = vshrl.u32 %v291, 7
      %v293 = vsub.s32 0, %v292
      %v294 = vrot.slane %v289, %v293
      %v296 = vadd.f32 %v257, %v294
      %v297 = vadd.f32 %v258, %v294
      %v298 = vadd.f32 %v259, %v294
      %v299 = vadd.f32 %v260, %v294
      %v300 = vadd.f32 %v261, %v294
      %v301 = vadd.f32 %v262, %v294
      %v302 = vadd.f32 %v263, %v294
      %v303 = vadd.f32 %v264, %v294
      %v304 = vadd.f32 %v265, %v294
      %v305 = vadd.f32 %v266, %v294
      %v306 = vadd.f32 %v267, %v294
      %v307 = vadd.f32 %v268, %v294
      %v308 = vadd.f32 %v269, %v294
      %v309 = vadd.f32 %v270, %v294
      %v310 = vadd.f32 %v271, %v294
      %v311 = vadd.f32 %v272, %v294
      %v312 = vadd.f32 %v273, %v294
      %v313 = vadd.f32 %v274, %v294
      %v314 = vadd.f32 %v275, %v294
      %v315 = vadd.f32 %v276, %v294
      %v316 = vadd.f32 %v277, %v294
      %v317 = vadd.f32 %v278, %v294
      %v318 = vadd.f32 %v279, %v294
      %v319 = vadd.f32 %v280, %v294
      %v320 = vadd.f32 %v281, %v294
      %v321 = vadd.f32 %v282, %v294
      %v322 = vadd.f32 %v283, %v294
      %v323 = vadd.f32 %v284, %v294
      %v324 = vadd.f32 %v285, %v294
      %v325 = vadd.f32 %v286, %v294
      %v326 = vadd.f32 %v287, %v294
      %v327 = vadd.f32 %v288, %v294
      %vm328 = vcmp.gt.f32.partialorder %v296, 0.0
      %vm329 = vcmp.gt.f32.partialorder %v297, 0.0
      %vm330 = vcmp.gt.f32.partialorder %v298, 0.0
      %vm331 = vcmp.gt.f32.partialorder %v299, 0.0
      %vm332 = vcmp.gt.f32.partialorder %v300, 0.0
      %vm333 = vcmp.gt.f32.partialorder %v301, 0.0
      %vm334 = vcmp.gt.f32.partialorder %v302, 0.0
      %vm335 = vcmp.gt.f32.partialorder %v303, 0.0
      %vm336 = vcmp.gt.f32.partialorder %v304, 0.0
      %vm337 = vcmp.gt.f32.partialorder %v305, 0.0
      %vm338 = vcmp.gt.f32.partialorder %v306, 0.0
      %vm339 = vcmp.gt.f32.partialorder %v307, 0.0
      %vm340 = vcmp.gt.f32.partialorder %v308, 0.0
      %vm341 = vcmp.gt.f32.partialorder %v309, 0.0
      %vm342 = vcmp.gt.f32.partialorder %v310, 0.0
      %vm343 = vcmp.gt.f32.partialorder %v311, 0.0
      %vm344 = vcmp.gt.f32.partialorder %v312, 0.0
      %vm345 = vcmp.gt.f32.partialorder %v313, 0.0
      %vm346 = vcmp.gt.f32.partialorder %v314, 0.0
      %vm347 = vcmp.gt.f32.partialorder %v315, 0.0
      %vm348 = vcmp.gt.f32.partialorder %v316, 0.0
      %vm349 = vcmp.gt.f32.partialorder %v317, 0.0
      %vm350 = vcmp.gt.f32.partialorder %v318, 0.0
      %vm351 = vcmp.gt.f32.partialorder %v319, 0.0
      %vm352 = vcmp.gt.f32.partialorder %v320, 0.0
      %vm353 = vcmp.gt.f32.partialorder %v321, 0.0
      %vm354 = vcmp.gt.f32.partialorder %v322, 0.0
      %vm355 = vcmp.gt.f32.partialorder %v323, 0.0
      %vm356 = vcmp.gt.f32.partialorder %v324, 0.0
      %vm357 = vcmp.gt.f32.partialorder %v325, 0.0
      %vm358 = vcmp.gt.f32.partialorder %v326, 0.0
      %vm359 = vcmp.gt.f32.partialorder %v327, 0.0
      %v360 = vmul.f32 %v296, 0.01
      %v361 = vmul.f32 %v297, 0.01
      %v362 = vmul.f32 %v298, 0.01
      %v363 = vmul.f32 %v299, 0.01
      %v364 = vmul.f32 %v300, 0.01
      %v365 = vmul.f32 %v301, 0.01
      %v366 = vmul.f32 %v302, 0.01
      %v367 = vmul.f32 %v303, 0.01
      %v368 = vmul.f32 %v304, 0.01
      %v369 = vmul.f32 %v305, 0.01
      %v370 = vmul.f32 %v306, 0.01
      %v371 = vmul.f32 %v307, 0.01
      %v372 = vmul.f32 %v308, 0.01
      %v373 = vmul.f32 %v309, 0.01
      %v374 = vmul.f32 %v310, 0.01
      %v375 = vmul.f32 %v311, 0.01
      %v376 = vmul.f32 %v312, 0.01
      %v377 = vmul.f32 %v313, 0.01
      %v378 = vmul.f32 %v314, 0.01
      %v379 = vmul.f32 %v315, 0.01
      %v380 = vmul.f32 %v316, 0.01
      %v381 = vmul.f32 %v317, 0.01
      %v382 = vmul.f32 %v318, 0.01
      %v383 = vmul.f32 %v319, 0.01
      %v384 = vmul.f32 %v320, 0.01
      %v385 = vmul.f32 %v321, 0.01
      %v386 = vmul.f32 %v322, 0.01
      %v387 = vmul.f32 %v323, 0.01
      %v388 = vmul.f32 %v324, 0.01
      %v389 = vmul.f32 %v325, 0.01
      %v390 = vmul.f32 %v326, 0.01
      %v391 = vmul.f32 %v327, 0.01
      %v392 = vsel %vm328, %v296, %v360
      %v393 = vsel %vm329, %v297, %v361
      %v394 = vsel %vm330, %v298, %v362
      %v395 = vsel %vm331, %v299, %v363
      %v396 = vsel %vm332, %v300, %v364
      %v397 = vsel %vm333, %v301, %v365
      %v398 = vsel %vm334, %v302, %v366
      %v399 = vsel %vm335, %v303, %v367
      %v400 = vsel %vm336, %v304, %v368
      %v401 = vsel %vm337, %v305, %v369
      %v402 = vsel %vm338, %v306, %v370
      %v403 = vsel %vm339, %v307, %v371
      %v404 = vsel %vm340, %v308, %v372
      %v405 = vsel %vm341, %v309, %v373
      %v406 = vsel %vm342, %v310, %v374
      %v407 = vsel %vm343, %v311, %v375
      %v408 = vsel %vm344, %v312, %v376
      %v409 = vsel %vm345, %v313, %v377
      %v410 = vsel %vm346, %v314, %v378
      %v411 = vsel %vm347, %v315, %v379
      %v412 = vsel %vm348, %v316, %v380
      %v413 = vsel %vm349, %v317, %v381
      %v414 = vsel %vm350, %v318, %v382
      %v415 = vsel %vm351, %v319, %v383
      %v416 = vsel %vm352, %v320, %v384
      %v417 = vsel %vm353, %v321, %v385
      %v418 = vsel %vm354, %v322, %v386
      %v419 = vsel %vm355, %v323, %v387
      %v420 = vsel %vm356, %v324, %v388
      %v421 = vsel %vm357, %v325, %v389
      %v422 = vsel %vm358, %v326, %v390
      %v423 = vsel %vm359, %v327, %v391
      %v424 = vld [vmem:[%s212] sm:$0xff]
      %v425 = vld [vmem:[%s212 + $0x8] sm:$0xff]
      %v426 = vld [vmem:[%s212 + $0x10] sm:$0xff]
      %v427 = vld [vmem:[%s212 + $0x18] sm:$0xff]
      %v428 = vld [vmem:[%s212 + $0x20] sm:$0xff]
      %v429 = vld [vmem:[%s212 + $0x28] sm:$0xff]
      %v430 = vld [vmem:[%s212 + $0x30] sm:$0xff]
      %v431 = vld [vmem:[%s212 + $0x38] sm:$0xff]
      %v432 = vld [vmem:[%s212 + $0x40] sm:$0xff]
      %v433 = vld [vmem:[%s212 + $0x48] sm:$0xff]
      %v434 = vld [vmem:[%s212 + $0x50] sm:$0xff]
      %v435 = vld [vmem:[%s212 + $0x58] sm:$0xff]
      %v436 = vld [vmem:[%s212 + $0x60] sm:$0xff]
      %v437 = vld [vmem:[%s212 + $0x68] sm:$0xff]
      %v438 = vld [vmem:[%s212 + $0x70] sm:$0xff]
      %v439 = vld [vmem:[%s212 + $0x78] sm:$0xff]
      %v440 = vld [vmem:[%s212 + $0x80] sm:$0xff]
      %v441 = vld [vmem:[%s212 + $0x88] sm:$0xff]
      %v442 = vld [vmem:[%s212 + $0x90] sm:$0xff]
      %v443 = vld [vmem:[%s212 + $0x98] sm:$0xff]
      %v444 = vld [vmem:[%s212 + $0xa0] sm:$0xff]
      %v445 = vld [vmem:[%s212 + $0xa8] sm:$0xff]
      %v446 = vld [vmem:[%s212 + $0xb0] sm:$0xff]
      %v447 = vld [vmem:[%s212 + $0xb8] sm:$0xff]
      %v448 = vld [vmem:[%s212 + $0xc0] sm:$0xff]
      %v449 = vld [vmem:[%s212 + $0xc8] sm:$0xff]
      %v450 = vld [vmem:[%s212 + $0xd0] sm:$0xff]
      %v451 = vld [vmem:[%s212 + $0xd8] sm:$0xff]
      %v452 = vld [vmem:[%s212 + $0xe0] sm:$0xff]
      %v453 = vld [vmem:[%s212 + $0xe8] sm:$0xff]
      %v454 = vld [vmem:[%s212 + $0xf0] sm:$0xff]
      %v455 = vld [vmem:[%s212 + $0xf8] sm:$0xff]
      %v456 = vadd.f32 %v392, %v424
      %v457 = vadd.f32 %v393, %v425
      %v458 = vadd.f32 %v394, %v426
      %v459 = vadd.f32 %v395, %v427
      %v460 = vadd.f32 %v396, %v428
      %v461 = vadd.f32 %v397, %v429
      %v462 = vadd.f32 %v398, %v430
      %v463 = vadd.f32 %v399, %v431
      %v464 = vadd.f32 %v400, %v432
      %v465 = vadd.f32 %v401, %v433
      %v466 = vadd.f32 %v402, %v434
      %v467 = vadd.f32 %v403, %v435
      %v468 = vadd.f32 %v404, %v436
      %v469 = vadd.f32 %v405, %v437
      %v470 = vadd.f32 %v406, %v438
      %v471 = vadd.f32 %v407, %v439
      %v472 = vadd.f32 %v408, %v440
      %v473 = vadd.f32 %v409, %v441
      %v474 = vadd.f32 %v410, %v442
      %v475 = vadd.f32 %v411, %v443
      %v476 = vadd.f32 %v412, %v444
      %v477 = vadd.f32 %v413, %v445
      %v478 = vadd.f32 %v414, %v446
      %v479 = vadd.f32 %v415, %v447
      %v480 = vadd.f32 %v416, %v448
      %v481 = vadd.f32 %v417, %v449
      %v482 = vadd.f32 %v418, %v450
      %v483 = vadd.f32 %v419, %v451
      %v484 = vadd.f32 %v420, %v452
      %v485 = vadd.f32 %v421, %v453
      %v486 = vadd.f32 %v422, %v454
      %v487 = vadd.f32 %v423, %v455
      %vm488 = vcmp.gt.f32.partialorder %v456, 0.0
      %vm489 = vcmp.gt.f32.partialorder %v457, 0.0
      %vm490 = vcmp.gt.f32.partialorder %v458, 0.0
      %vm491 = vcmp.gt.f32.partialorder %v459, 0.0
      %vm492 = vcmp.gt.f32.partialorder %v460, 0.0
      %vm493 = vcmp.gt.f32.partialorder %v461, 0.0
      %vm494 = vcmp.gt.f32.partialorder %v462, 0.0
      %vm495 = vcmp.gt.f32.partialorder %v463, 0.0
      %vm496 = vcmp.gt.f32.partialorder %v464, 0.0
      %vm497 = vcmp.gt.f32.partialorder %v465, 0.0
      %vm498 = vcmp.gt.f32.partialorder %v466, 0.0
      %vm499 = vcmp.gt.f32.partialorder %v467, 0.0
      %vm500 = vcmp.gt.f32.partialorder %v468, 0.0
      %vm501 = vcmp.gt.f32.partialorder %v469, 0.0
      %vm502 = vcmp.gt.f32.partialorder %v470, 0.0
      %vm503 = vcmp.gt.f32.partialorder %v471, 0.0
      %vm504 = vcmp.gt.f32.partialorder %v472, 0.0
      %vm505 = vcmp.gt.f32.partialorder %v473, 0.0
      %vm506 = vcmp.gt.f32.partialorder %v474, 0.0
      %vm507 = vcmp.gt.f32.partialorder %v475, 0.0
      %vm508 = vcmp.gt.f32.partialorder %v476, 0.0
      %vm509 = vcmp.gt.f32.partialorder %v477, 0.0
      %vm510 = vcmp.gt.f32.partialorder %v478, 0.0
      %vm511 = vcmp.gt.f32.partialorder %v479, 0.0
      %vm512 = vcmp.gt.f32.partialorder %v480, 0.0
      %vm513 = vcmp.gt.f32.partialorder %v481, 0.0
      %vm514 = vcmp.gt.f32.partialorder %v482, 0.0
      %vm515 = vcmp.gt.f32.partialorder %v483, 0.0
      %vm516 = vcmp.gt.f32.partialorder %v484, 0.0
      %vm517 = vcmp.gt.f32.partialorder %v485, 0.0
      %vm518 = vcmp.gt.f32.partialorder %v486, 0.0
      %vm519 = vcmp.gt.f32.partialorder %v487, 0.0
      %v520 = vmul.f32 %v456, 0.01
      %v521 = vmul.f32 %v457, 0.01
      %v522 = vmul.f32 %v458, 0.01
      %v523 = vmul.f32 %v459, 0.01
      %v524 = vmul.f32 %v460, 0.01
      %v525 = vmul.f32 %v461, 0.01
      %v526 = vmul.f32 %v462, 0.01
      %v527 = vmul.f32 %v463, 0.01
      %v528 = vmul.f32 %v464, 0.01
      %v529 = vmul.f32 %v465, 0.01
      %v530 = vmul.f32 %v466, 0.01
      %v531 = vmul.f32 %v467, 0.01
      %v532 = vmul.f32 %v468, 0.01
      %v533 = vmul.f32 %v469, 0.01
      %v534 = vmul.f32 %v470, 0.01
      %v535 = vmul.f32 %v471, 0.01
      %v536 = vmul.f32 %v472, 0.01
      %v537 = vmul.f32 %v473, 0.01
      %v538 = vmul.f32 %v474, 0.01
      %v539 = vmul.f32 %v475, 0.01
      %v540 = vmul.f32 %v476, 0.01
      %v541 = vmul.f32 %v477, 0.01
      %v542 = vmul.f32 %v478, 0.01
      %v543 = vmul.f32 %v479, 0.01
      %v544 = vmul.f32 %v480, 0.01
      %v545 = vmul.f32 %v481, 0.01
      %v546 = vmul.f32 %v482, 0.01
      %v547 = vmul.f32 %v483, 0.01
      %v548 = vmul.f32 %v484, 0.01
      %v549 = vmul.f32 %v485, 0.01
      %v550 = vmul.f32 %v486, 0.01
      %v551 = vmul.f32 %v487, 0.01
      %v552 = vsel %vm488, %v456, %v520
      %v553 = vsel %vm489, %v457, %v521
      %v554 = vsel %vm490, %v458, %v522
      %v555 = vsel %vm491, %v459, %v523
      %v556 = vsel %vm492, %v460, %v524
      %v557 = vsel %vm493, %v461, %v525
      %v558 = vsel %vm494, %v462, %v526
      %v559 = vsel %vm495, %v463, %v527
      %v560 = vsel %vm496, %v464, %v528
      %v561 = vsel %vm497, %v465, %v529
      %v562 = vsel %vm498, %v466, %v530
      %v563 = vsel %vm499, %v467, %v531
      %v564 = vsel %vm500, %v468, %v532
      %v565 = vsel %vm501, %v469, %v533
      %v566 = vsel %vm502, %v470, %v534
      %v567 = vsel %vm503, %v471, %v535
      %v568 = vsel %vm504, %v472, %v536
      %v569 = vsel %vm505, %v473, %v537
      %v570 = vsel %vm506, %v474, %v538
      %v571 = vsel %vm507, %v475, %v539
      %v572 = vsel %vm508, %v476, %v540
      %v573 = vsel %vm509, %v477, %v541
      %v574 = vsel %vm510, %v478, %v542
      %v575 = vsel %vm511, %v479, %v543
      %v576 = vsel %vm512, %v480, %v544
      %v577 = vsel %vm513, %v481, %v545
      %v578 = vsel %vm514, %v482, %v546
      %v579 = vsel %vm515, %v483, %v547
      %v580 = vsel %vm516, %v484, %v548
      %v581 = vsel %vm517, %v485, %v549
      %v582 = vsel %vm518, %v486, %v550
      %v583 = vsel %vm519, %v487, %v551
      %vm584 = vcmask 64512
      %585 = vst.msk [vmem:[%s217] sm:$0xff] %vm584, %v552
      %586 = vst.msk [vmem:[%s217 + $0x8] sm:$0xff] %vm584, %v553
      %587 = vst.msk [vmem:[%s217 + $0x10] sm:$0xff] %vm584, %v554
      %588 = vst.msk [vmem:[%s217 + $0x18] sm:$0xff] %vm584, %v555
      %589 = vst.msk [vmem:[%s217 + $0x20] sm:$0xff] %vm584, %v556
      %590 = vst.msk [vmem:[%s217 + $0x28] sm:$0xff] %vm584, %v557
      %591 = vst.msk [vmem:[%s217 + $0x30] sm:$0xff] %vm584, %v558
      %592 = vst.msk [vmem:[%s217 + $0x38] sm:$0xff] %vm584, %v559
      %593 = vst.msk [vmem:[%s217 + $0x40] sm:$0xff] %vm584, %v560
      %594 = vst.msk [vmem:[%s217 + $0x48] sm:$0xff] %vm584, %v561
      %595 = vst.msk [vmem:[%s217 + $0x50] sm:$0xff] %vm584, %v562
      %596 = vst.msk [vmem:[%s217 + $0x58] sm:$0xff] %vm584, %v563
      %597 = vst.msk [vmem:[%s217 + $0x60] sm:$0xff] %vm584, %v564
      %598 = vst.msk [vmem:[%s217 + $0x68] sm:$0xff] %vm584, %v565
      %599 = vst.msk [vmem:[%s217 + $0x70] sm:$0xff] %vm584, %v566
      %600 = vst.msk [vmem:[%s217 + $0x78] sm:$0xff] %vm584, %v567
      %601 = vst.msk [vmem:[%s217 + $0x80] sm:$0xff] %vm584, %v568
      %602 = vst.msk [vmem:[%s217 + $0x88] sm:$0xff] %vm584, %v569
      %603 = vst.msk [vmem:[%s217 + $0x90] sm:$0xff] %vm584, %v570
      %604 = vst.msk [vmem:[%s217 + $0x98] sm:$0xff] %vm584, %v571
      %605 = vst.msk [vmem:[%s217 + $0xa0] sm:$0xff] %vm584, %v572
      %606 = vst.msk [vmem:[%s217 + $0xa8] sm:$0xff] %vm584, %v573
      %607 = vst.msk [vmem:[%s217 + $0xb0] sm:$0xff] %vm584, %v574
      %608 = vst.msk [vmem:[%s217 + $0xb8] sm:$0xff] %vm584, %v575
      %609 = vst.msk [vmem:[%s217 + $0xc0] sm:$0xff] %vm584, %v576
      %610 = vst.msk [vmem:[%s217 + $0xc8] sm:$0xff] %vm584, %v577
      %611 = vst.msk [vmem:[%s217 + $0xd0] sm:$0xff] %vm584, %v578
      %612 = vst.msk [vmem:[%s217 + $0xd8] sm:$0xff] %vm584, %v579
      %613 = vst.msk [vmem:[%s217 + $0xe0] sm:$0xff] %vm584, %v580
      %614 = vst.msk [vmem:[%s217 + $0xe8] sm:$0xff] %vm584, %v581
      %615 = vst.msk [vmem:[%s217 + $0xf0] sm:$0xff] %vm584, %v582
      %616 = vst.msk [vmem:[%s217 + $0xf8] sm:$0xff] %vm584, %v583
      %p617 = scmp.lt.s32.totalorder %s15, 1
      %s618 = scalar_select %p617, %s15, 1
      %s619 = smul.addr %s618, 32
      %s620 = smul.addr %s619, 8
      %s621 = scalar_lea.vmem %s4, %s620
      // Predicated region
      $region37: #{residual_conv3x3_block.5} parent=35 // pred_check
        %p622 = pneg %p127
      $region38: #{residual_conv3x3_block.5} parent=35 // pred_check_branch
        %624 = sbr.rel (%p622) target = $region40
      $region39: #{residual_conv3x3_block.5} parent=35 // pred_region
        _
      $region40: #{residual_conv3x3_block.5} parent=35 // pred_fallthru
        _
    $region36: #{residual_conv3x3_block.5} parent=5 // pred_fallthru
      _
    %p625 = scmp.le.s32.totalorder 2, %s10
    // Predicated region
    $region41: #{residual_conv3x3_block.5} parent=5 // pred_check
      %p626 = pneg %p625
    $region42: #{residual_conv3x3_block.5} parent=5 // pred_check_branch
      %628 = sbr.rel (%p626) target = $region44
    $region43: #{residual_conv3x3_block.5} parent=5 // pred_region
      %s629 = ssub.s32 %s10, 2
      // Predicated region
      $region45: #{residual_conv3x3_block.5} parent=43 // pred_check
        %p630 = pneg %p133
      $region46: #{residual_conv3x3_block.5} parent=43 // pred_check_branch
        %632 = sbr.rel (%p630) target = $region48
      $region47: #{residual_conv3x3_block.5} parent=43 // pred_region
        %p633 = scmp.lt.s32.totalorder %s16, 1
        %s634 = scalar_select %p633, %s16, 1
        %s635 = smul.addr %s634, 32
        %s636 = smul.addr %s635, 8
        %s637 = scalar_lea.vmem %s4, %s636
      $region48: #{residual_conv3x3_block.5} parent=43 // pred_fallthru
        _
    $region44: #{residual_conv3x3_block.5} parent=5 // pred_fallthru
      _
  $region6: #{residual_conv3x3_block.5} parent=0 // loop_footer
    %s14 = sadd.s32 1, %s10
  $region7: #{residual_conv3x3_block.5} parent=0 // loop_footer_branch
    %9 = sbr.rel target = $region3
  $region8: #{residual_conv3x3_block.5} parent=0 // loop_exit
    _

// kernel: residual_conv3x3_block.4
$region0: #{residual_conv3x3_block.4}
  #allocation0 [shape = 'u32[]', space=smem, size = 0x4, offset = 0x4, fixed_abs, tag = 'smem constant byte address 0x4 - core index']
  #allocation1 [shape = 'u32[144,128]{1,0:T(1,128)}', space=vmem, size = 0x12000, scoped, tag = 'internal scratch']
  #allocation2 [shape = 'bf16[256,72]{1,0:T(16,128)(2,1)}', space=vmem, size = 0x10000, scoped, tag = 'scratch operand']
  %s0 = inlined_call_operand.vmem [shape: bf16[2,18,18,8], index: 0, kind: input, shape index: {}]
  %s1 = inlined_call_operand.vmem [shape: f32[1,8], index: 1, kind: input, shape index: {}]
  %s2 = inlined_call_operand.vmem [shape: f32[1,8], index: 2, kind: input, shape index: {}]
  %s3 = inlined_call_operand.vmem [shape: bf16[72,8], index: 3, kind: input, shape index: {}]
  %s4 = inlined_call_operand.vmem [shape: f32[2,16,16,8], index: 4, kind: output, shape index: {0}]
  %s5 = inlined_call_operand.vmem [shape: f32[2,2,8], index: 5, kind: output, shape index: {1}]
  %6 = xla_tuple %s4, %s5
  %s7 = sld [smem:[#allocation0]]
  $region57: #{residual_conv3x3_block.4} parent=0
    _
  %s9 = ssub.s32 1, %s7
  %s10 = scalar_select 0, %s9, %s7
  loop: start=0, step=1, limit=4
  $region2: #{residual_conv3x3_block.4} parent=0 // loop_pre_header
    _
  $region3: #{residual_conv3x3_block.4} parent=0 // loop_header
    %s12 = sphi 0, %s16
    %p13 = scmp.ge.s32.totalorder %s12, 4
    %s22 = sphi 0, %s24
    %s25 = sphi 0, %s22
    %s26 = sphi 0, %s25
    %s42 = sphi 0, %s26
    %s46 = sphi 0, %s46
    %s48 = sphi 0, %s46
    %s49 = sphi 0, %s48
    %s63 = sphi 0, %s49
    %s67 = sphi 0, %s67
    %s69 = sphi 0, %s67
    %s70 = sphi 0, %s69
    %s84 = sphi 0, %s70
    %s88 = sphi 0, %s88
    %s90 = sphi 0, %s88
    %s91 = sphi 0, %s90
    %s105 = sphi 0, %s91
    %s111 = sphi 0, %s113
    %s114 = sphi 0, %s111
    %s115 = sphi 0, %s114
    %s131 = sphi 0, %s115
    %s137 = sphi 0, %s139
    %s140 = sphi 0, %s137
    %s141 = sphi 0, %s140
    %s157 = sphi 0, %s141
  $region4: #{residual_conv3x3_block.4} parent=0 // loop_header_branch
    %15 = sbr.rel (%p13) target = $region8
  $region5: #{residual_conv3x3_block.4} parent=0 // loop_body
    %s17 = ssub.s32 %s12, 1
    %s18 = ssub.s32 %s12, 2
    %s19 = sadd.s32 %s12, 1
    %s20 = ssub.s32 %s12, %s19
    %p21 = scmp.eq.s32.totalorder %s20, 0
    %s23 = sadd.s32 %s22, 1
    %s24 = scalar_select %p21, %s22, %s23
    %p27 = pneg %p21
    %p28 = scmp.eq.s32.totalorder %s12, 1
    %p29 = por %p27, %p28
    %p30 = scmp.ne.s32.totalorder %s22, %s25
    %p31 = scmp.eq.s32.totalorder %s12, 0
    %p32 = por %p30, %p31
    %p33 = scmp.ne.s32.totalorder %s22, %s25
    %p34 = scmp.eq.s32.totalorder %s17, 1
    %p35 = por %p33, %p34
    %p36 = scmp.ne.s32.totalorder %s25, %s26
    %p37 = scmp.eq.s32.totalorder %s17, 0
    %p38 = por %p36, %p37
    %p39 = scmp.ne.s32.totalorder %s25, %s26
    %p40 = scmp.eq.s32.totalorder %s18, 1
    %p41 = por %p39, %p40
    %p43 = scmp.ne.s32.totalorder %s26, %s42
    %p44 = scmp.eq.s32.totalorder %s18, 0
    %p45 = por %p43, %p44
    %s47 = sadd.s32 %s46, 1
    %p50 = scmp.eq.s32.totalorder %s12, 1
    %p51 = scmp.ne.s32.totalorder %s46, %s48
    %p52 = scmp.eq.s32.totalorder %s12, 0
    %p53 = por %p51, %p52
    %p54 = scmp.ne.s32.totalorder %s46, %s48
    %p55 = scmp.eq.s32.totalorder %s17, 1
    %p56 = por %p54, %p55
    %p57 = scmp.ne.s32.totalorder %s48, %s49
    %p58 = scmp.eq.s32.totalorder %s17, 0
    %p59 = por %p57, %p58
    %p60 = scmp.ne.s32.totalorder %s48, %s49
    %p61 = scmp.eq.s32.totalorder %s18, 1
    %p62 = por %p60, %p61
    %p64 = scmp.ne.s32.totalorder %s49, %s63
    %p65 = scmp.eq.s32.totalorder %s18, 0
    %p66 = por %p64, %p65
    %s68 = sadd.s32 %s67, 1
    %p71 = scmp.eq.s32.totalorder %s12, 1
    %p72 = scmp.ne.s32.totalorder %s67, %s69
    %p73 = scmp.eq.s32.totalorder %s12, 0
    %p74 = por %p72, %p73
    %p75 = scmp.ne.s32.totalorder %s67, %s69
    %p76 = scmp.eq.s32.totalorder %s17, 1
    %p77 = por %p75, %p76
    %p78 = scmp.ne.s32.totalorder %s69, %s70
    %p79 = scmp.eq.s32.totalorder %s17, 0
    %p80 = por %p78, %p79
    %p81 = scmp.ne.s32.totalorder %s69, %s70
    %p82 = scmp.eq.s32.totalorder %s18, 1
    %p83 = por %p81, %p82
    %p85 = scmp.ne.s32.totalorder %s70, %s84
    %p86 = scmp.eq.s32.totalorder %s18, 0
    %p87 = por %p85, %p86
    %s89 = sadd.s32 %s88, 1
    %p92 = scmp.eq.s32.totalorder %s12, 1
    %p93 = scmp.ne.s32.totalorder %s88, %s90
    %p94 = scmp.eq.s32.totalorder %s12, 0
    %p95 = por %p93, %p94
    %p96 = scmp.ne.s32.totalorder %s88, %s90
    %p97 = scmp.eq.s32.totalorder %s17, 1
    %p98 = por %p96, %p97
    %p99 = scmp.ne.s32.totalorder %s90, %s91
    %p100 = scmp.eq.s32.totalorder %s17, 0
    %p101 = por %p99, %p100
    %p102 = scmp.ne.s32.totalorder %s90, %s91
    %p103 = scmp.eq.s32.totalorder %s18, 1
    %p104 = por %p102, %p103
    %p106 = scmp.ne.s32.totalorder %s91, %s105
    %p107 = scmp.eq.s32.totalorder %s18, 0
    %p108 = por %p106, %p107
    %s109 = ssub.s32 %s12, %s19
    %p110 = scmp.eq.s32.totalorder %s109, 0
    %s112 = sadd.s32 %s111, 1
    %s113 = scalar_select %p110, %s111, %s112
    %p116 = pneg %p110
    %p117 = scmp.eq.s32.totalorder %s12, 1
    %p118 = por %p116, %p117
    %p119 = scmp.ne.s32.totalorder %s111, %s114
    %p120 = scmp.eq.s32.totalorder %s12, 0
    %p121 = por %p119, %p120
    %p122 = scmp.ne.s32.totalorder %s111, %s114
    %p123 = scmp.eq.s32.totalorder %s17, 1
    %p124 = por %p122, %p123
    %p125 = scmp.ne.s32.totalorder %s114, %s115
    %p126 = scmp.eq.s32.totalorder %s17, 0
    %p127 = por %p125, %p126
    %p128 = scmp.ne.s32.totalorder %s114, %s115
    %p129 = scmp.eq.s32.totalorder %s18, 1
    %p130 = por %p128, %p129
    %p132 = scmp.ne.s32.totalorder %s115, %s131
    %p133 = scmp.eq.s32.totalorder %s18, 0
    %p134 = por %p132, %p133
    %s135 = ssub.s32 %s12, %s19
    %p136 = scmp.eq.s32.totalorder %s135, 0
    %s138 = sadd.s32 %s137, 1
    %s139 = scalar_select %p136, %s137, %s138
    %p142 = pneg %p136
    %p143 = scmp.eq.s32.totalorder %s12, 1
    %p144 = por %p142, %p143
    %p145 = scmp.ne.s32.totalorder %s137, %s140
    %p146 = scmp.eq.s32.totalorder %s12, 0
    %p147 = por %p145, %p146
    %p148 = scmp.ne.s32.totalorder %s137, %s140
    %p149 = scmp.eq.s32.totalorder %s17, 1
    %p150 = por %p148, %p149
    %p151 = scmp.ne.s32.totalorder %s140, %s141
    %p152 = scmp.eq.s32.totalorder %s17, 0
    %p153 = por %p151, %p152
    %p154 = scmp.ne.s32.totalorder %s140, %s141
    %p155 = scmp.eq.s32.totalorder %s18, 1
    %p156 = por %p154, %p155
    %p158 = scmp.ne.s32.totalorder %s141, %s157
    %p159 = scmp.eq.s32.totalorder %s18, 0
    %p160 = por %p158, %p159
    %p161 = scmp.le.s32.totalorder 1, %s12
    %p162 = scmp.lt.s32.totalorder %s12, 3
    %p163 = pnand %p161, %p162
    %p164 = pneg %p163
    // Predicated region
    $region9: #{residual_conv3x3_block.4} parent=5 // pred_check
      _
    $region10: #{residual_conv3x3_block.4} parent=5 // pred_check_branch
      %166 = sbr.rel (%p163) target = $region12
    $region11: #{residual_conv3x3_block.4} parent=5 // pred_region
      %s167 = ssub.s32 %s12, 1
      // Predicated region
      $region13: #{residual_conv3x3_block.4} parent=11 // pred_check
        %p168 = pneg %p59
      $region14: #{residual_conv3x3_block.4} parent=11 // pred_check_branch
        %170 = sbr.rel (%p168) target = $region16
      $region15: #{residual_conv3x3_block.4} parent=11 // pred_region
        _
      $region16: #{residual_conv3x3_block.4} parent=11 // pred_fallthru
        _
      // Predicated region
      $region17: #{residual_conv3x3_block.4} parent=11 // pred_check
        %p171 = pneg %p80
      $region18: #{residual_conv3x3_block.4} parent=11 // pred_check_branch
        %173 = sbr.rel (%p171) target = $region20
      $region19: #{residual_conv3x3_block.4} parent=11 // pred_region
        _
      $region20: #{residual_conv3x3_block.4} parent=11 // pred_fallthru
        _
      // Predicated region
      $region21: #{residual_conv3x3_block.4} parent=11 // pred_check
        %p174 = pneg %p101
      $region22: #{residual_conv3x3_block.4} parent=11 // pred_check_branch
        %176 = sbr.rel (%p174) target = $region24
      $region23: #{residual_conv3x3_block.4} parent=11 // pred_region
        _
      $region24: #{residual_conv3x3_block.4} parent=11 // pred_fallthru
        _
    $region12: #{residual_conv3x3_block.4} parent=5 // pred_fallthru
      _
    %p177 = scmp.lt.s32.totalorder %s12, 2
    // Predicated region
    $region25: #{residual_conv3x3_block.4} parent=5 // pred_check
      %p178 = pneg %p177
    $region26: #{residual_conv3x3_block.4} parent=5 // pred_check_branch
      %180 = sbr.rel (%p178) target = $region28
    $region27: #{residual_conv3x3_block.4} parent=5 // pred_region
      // Predicated region
      $region29: #{residual_conv3x3_block.4} parent=27 // pred_check
        %p181 = pneg %p32
      $region30: #{residual_conv3x3_block.4} parent=27 // pred_check_branch
        %183 = sbr.rel (%p181) target = $region32
      $region31: #{residual_conv3x3_block.4} parent=27 // pred_region
        %p184 = scmp.lt.s32.totalorder %s12, 1
        %s185 = scalar_select %p184, %s12, 1
        %s186 = smul.addr %s185, 54
        %s187 = smul.addr %s186, 4
        %s188 = scalar_lea.vmem %s0, %s187
      $region32: #{residual_conv3x3_block.4} parent=27 // pred_fallthru
        _
    $region28: #{residual_conv3x3_block.4} parent=5 // pred_fallthru
      _
    %p189 = scmp.le.s32.totalorder 1, %s12
    %p190 = scmp.lt.s32.totalorder %s12, 3
    %p191 = pnand %p189, %p190
    %p192 = pneg %p191
    // Predicated region
    $region33: #{residual_conv3x3_block.4} parent=5 // pred_check
      _
    $region34: #{residual_conv3x3_block.4} parent=5 // pred_check_branch
      %194 = sbr.rel (%p191) target = $region36
    $region35: #{residual_conv3x3_block.4} parent=5 // pred_region
      %s195 = ssub.s32 %s12, 1
      %p196 = scmp.lt.s32.totalorder %s17, 1
      %s197 = scalar_select %p196, %s17, 1
      %s198 = smul.addr %s197, 54
      %s199 = smul.addr %s198, 4
      %s200 = scalar_lea.vmem %s0, %s199
      %p201 = pneg %p38
      %p202 = pneg %p35
      %p203 = pneg %p59
      %p204 = pneg %p56
      %p205 = pneg %p80
      %p206 = pneg %p77
      %p207 = pneg %p101
      %p208 = pneg %p98
      %p209 = pneg %p127
      %p210 = pneg %p124
      %p211 = scmp.lt.s32.totalorder %s17, 1
      %s212 = scalar_select %p211, %s17, 1
      %s213 = smul.addr %s212, 32
      %s214 = smul.addr %s213, 8
      %s215 = scalar_lea.vmem %s4, %s214
      %p216 = pneg %p153
      %p217 = pneg %p150
      %p218 = scmp.lt.s32.totalorder %s17, 1
      %s219 = scalar_select %p218, %s17, 1
      %s220 = smul.addr %s219, 2
      %s221 = scalar_lea.vmem %s5, %s220
      %p222 = scmp.lt.s32.totalorder %s17, 1
      %s223 = scalar_select %p222, %s17, 1
      %s224 = smul.addr %s223, 54
      %s225 = smul.addr %s224, 4
      %s226 = scalar_lea.vmem %s0, %s225
      %p227 = scmp.lt.s32.totalorder %s17, 1
      %s228 = scalar_select %p227, %s17, 1
      %s229 = smul.addr %s228, 32
      %s230 = smul.addr %s229, 8
      %s231 = scalar_lea.vmem %s4, %s230
      %p232 = scmp.lt.s32.totalorder %s17, 1
      %s233 = scalar_select %p232, %s17, 1
      %s234 = smul.addr %s233, 2
      %s235 = scalar_lea.vmem %s5, %s234
      %v237 = vld [vmem:[%s226] sm:$0xf]
      %v238 = vld [vmem:[%s226 + $0x4] sm:$0xf]
      %v239 = vld [vmem:[%s226 + $0x8] sm:$0x1]
      %v240 = vld [vmem:[%s226 + $0xc] sm:$0xf]
      %v241 = vld [vmem:[%s226 + $0x10] sm:$0xf]
      %v242 = vld [vmem:[%s226 + $0x14] sm:$0x1]
      %v243 = vld [vmem:[%s226 + $0x18] sm:$0xf]
      %v244 = vld [vmem:[%s226 + $0x1c] sm:$0xf]
      %v245 = vld [vmem:[%s226 + $0x20] sm:$0x1]
      %v246 = vld [vmem:[%s226 + $0x24] sm:$0xf]
      %v247 = vld [vmem:[%s226 + $0x28] sm:$0xf]
      %v248 = vld [vmem:[%s226 + $0x2c] sm:$0x1]
      %v249 = vld [vmem:[%s226 + $0x30] sm:$0xf]
      %v250 = vld [vmem:[%s226 + $0x34] sm:$0xf]
      %v251 = vld [vmem:[%s226 + $0x38] sm:$0x1]
      %v252 = vld [vmem:[%s226 + $0x3c] sm:$0xf]
      %v253 = vld [vmem:[%s226 + $0x40] sm:$0xf]
      %v254 = vld [vmem:[%s226 + $0x44] sm:$0x1]
      %v255 = vld [vmem:[%s226 + $0x48] sm:$0xf]
      %v256 = vld [vmem:[%s226 + $0x4c] sm:$0xf]
      %v257 = vld [vmem:[%s226 + $0x50] sm:$0x1]
      %v258 = vld [vmem:[%s226 + $0x54] sm:$0xf]
      %v259 = vld [vmem:[%s226 + $0x58] sm:$0xf]
      %v260 = vld [vmem:[%s226 + $0x5c] sm:$0x1]
      %v261 = vld [vmem:[%s226 + $0x60] sm:$0xf]
      %v262 = vld [vmem:[%s226 + $0x64] sm:$0xf]
      %v263 = vld [vmem:[%s226 + $0x68] sm:$0x1]
      %v264 = vld [vmem:[%s226 + $0x6c] sm:$0xf]
      %v265 = vld [vmem:[%s226 + $0x70] sm:$0xf]
      %v266 = vld [vmem:[%s226 + $0x74] sm:$0x1]
      %v267 = vld [vmem:[%s226 + $0x78] sm:$0xf]
      %v268 = vld [vmem:[%s226 + $0x7c] sm:$0xf]
      %v269 = vld [vmem:[%s226 + $0x80] sm:$0x1]
      %v270 = vld [vmem:[%s226 + $0x84] sm:$0xf]
      %v271 = vld [vmem:[%s226 + $0x88] sm:$0xf]
      %v272 = vld [vmem:[%s226 + $0x8c] sm:$0x1]
      %v273 = vld [vmem:[%s226 + $0x90] sm:$0xf]
      %v274 = vld [vmem:[%s226 + $0x94] sm:$0xf]
      %v275 = vld [vmem:[%s226 + $0x98] sm:$0x1]
      %v276 = vld [vmem:[%s226 + $0x9c] sm:$0xf]
      %v277 = vld [vmem:[%s226 + $0xa0] sm:$0xf]
      %v278 = vld [vmem:[%s226 + $0xa4] sm:$0x1]
      %v279 = vld [vmem:[%s226 + $0xa8] sm:$0xf]
      %v280 = vld [vmem:[%s226 + $0xac] sm:$0xf]
      %v281 = vld [vmem:[%s226 + $0xb0] sm:$0x1]
      %v282 = vld [vmem:[%s226 + $0xb4] sm:$0xf]
      %v283 = vld [vmem:[%s226 + $0xb8] sm:$0xf]
      %v284 = vld [vmem:[%s226 + $0xbc] sm:$0x1]
      %v285 = vld [vmem:[%s226 + $0xc0] sm:$0xf]
      %v286 = vld [vmem:[%s226 + $0xc4] sm:$0xf]
      %v287 = vld [vmem:[%s226 + $0xc8] sm:$0x1]
      %v288 = vld [vmem:[%s226 + $0xcc] sm:$0xf]
      %v289 = vld [vmem:[%s226 + $0xd0] sm:$0xf]
      %v290 = vld [vmem:[%s226 + $0xd4] sm:$0x1]
      %v291 = vunpack.c.l.bf16 %v237
      %v292 = vunpack.c.l.bf16 %v238
      %v293 = vunpack.c.l.bf16 %v239
      %v294 = vunpack.c.l.bf16 %v240
      %v295 = vunpack.c.l.bf16 %v241
      %v296 = vunpack.c.l.bf16 %v242
      %v297 = vunpack.c.l.bf16 %v243
      %v298 = vunpack.c.l.bf16 %v244
      %v299 = vunpack.c.l.bf16 %v245
      %v300 = vunpack.c.l.bf16 %v246
      %v301 = vunpack.c.l.bf16 %v247
      %v302 = vunpack.c.l.bf16 %v248
      %v303 = vunpack.c.l.bf16 %v249
      %v304 = vunpack.c.l.bf16 %v250
      %v305 = vunpack.c.l.bf16 %v251
      %v306 = vunpack.c.l.bf16 %v252
      %v307 = vunpack.c.l.bf16 %v253
      %v308 = vunpack.c.l.bf16 %v254
      %v309 = vunpack.c.l.bf16 %v255
      %v310 = vunpack.c.l.bf16 %v256
      %v311 = vunpack.c.l.bf16 %v257
      %v312 = vunpack.c.l.bf16 %v258
      %v313 = vunpack.c.l.bf16 %v259
      %v314 = vunpack.c.l.bf16 %v260
      %v315 = vunpack.c.l.bf16 %v261
      %v316 = vunpack.c.l.bf16 %v262
      %v317 = vunpack.c.l.bf16 %v263
      %v318 = vunpack.c.l.bf16 %v264
      %v319 = vunpack.c.l.bf16 %v265
      %v320 = vunpack.c.l.bf16 %v266
      %v321 = vunpack.c.l.bf16 %v267
      %v322 = vunpack.c.l.bf16 %v268
      %v323 = vunpack.c.l.bf16 %v269
      %v324 = vunpack.c.l.bf16 %v270
      %v325 = vunpack.c.l.bf16 %v271
      %v326 = vunpack.c.l.bf16 %v272
      %v327 = vunpack.c.l.bf16 %v273
      %v328 = vunpack.c.l.bf16 %v274
      %v329 = vunpack.c.l.bf16 %v275
      %v330 = vunpack.c.l.bf16 %v276
      %v331 = vunpack.c.l.bf16 %v277
      %v332 = vunpack.c.l.bf16 %v278
      %v333 = vunpack.c.l.bf16 %v279
      %v334 = vunpack.c.l.bf16 %v280
      %v335 = vunpack.c.l.bf16 %v281
      %v336 = vunpack.c.l.bf16 %v282
      %v337 = vunpack.c.l.bf16 %v283
      %v338 = vunpack.c.l.bf16 %v284
      %v339 = vunpack.c.l.bf16 %v285
      %v340 = vunpack.c.l.bf16 %v286
      %v341 = vunpack.c.l.bf16 %v287
      %v342 = vunpack.c.l.bf16 %v288
      %v343 = vunpack.c.l.bf16 %v289
      %v344 = vunpack.c.l.bf16 %v290
      %v345 = vld [vmem:[%s1] sm:$0x1]
      %v347 = vlaneseq
      %v348 = vshrl.u32 %v347, 7
      %v349 = vsub.s32 0, %v348
      %v350 = vrot.slane %v345, %v349
      %v352 = vmul.f32 %v291, %v350
      %v353 = vmul.f32 %v292, %v350
      %v354 = vmul.f32 %v293, %v350
      %v355 = vmul.f32 %v294, %v350
      %v356 = vmul.f32 %v295, %v350
      %v357 = vmul.f32 %v296, %v350
      %v358 = vmul.f32 %v297, %v350
      %v359 = vmul.f32 %v298, %v350
      %v360 = vmul.f32 %v299, %v350
      %v361 = vmul.f32 %v300, %v350
      %v362 = vmul.f32 %v301, %v350
      %v363 = vmul.f32 %v302, %v350
      %v364 = vmul.f32 %v303, %v350
      %v365 = vmul.f32 %v304, %v350
      %v366 = vmul.f32 %v305, %v350
      %v367 = vmul.f32 %v306, %v350
      %v368 = vmul.f32 %v307, %v350
      %v369 = vmul.f32 %v308, %v350
      %v370 = vmul.f32 %v309, %v350
      %v371 = vmul.f32 %v310, %v350
      %v372 = vmul.f32 %v311, %v350
      %v373 = vmul.f32 %v312, %v350
      %v374 = vmul.f32 %v313, %v350
      %v375 = vmul.f32 %v314, %v350
      %v376 = vmul.f32 %v315, %v350
      %v377 = vmul.f32 %v316, %v350
      %v378 = vmul.f32 %v317, %v350
      %v379 = vmul.f32 %v318, %v350
      %v380 = vmul.f32 %v319, %v350
      %v381 = vmul.f32 %v320, %v350
      %v382 = vmul.f32 %v321, %v350
      %v383 = vmul.f32 %v322, %v350
      %v384 = vmul.f32 %v323, %v350
      %v385 = vmul.f32 %v324, %v350
      %v386 = vmul.f32 %v325, %v350
      %v387 = vmul.f32 %v326, %v350
      %v388 = vmul.f32 %v327, %v350
      %v389 = vmul.f32 %v328, %v350
      %v390 = vmul.f32 %v329, %v350
      %v391 = vmul.f32 %v330, %v350
      %v392 = vmul.f32 %v331, %v350
      %v393 = vmul.f32 %v332, %v350
      %v394 = vmul.f32 %v333, %v350
      %v395 = vmul.f32 %v334, %v350
      %v396 = vmul.f32 %v335, %v350
      %v397 = vmul.f32 %v336, %v350
      %v398 = vmul.f32 %v337, %v350
      %v399 = vmul.f32 %v338, %v350
      %v400 = vmul.f32 %v339, %v350
      %v401 = vmul.f32 %v340, %v350
      %v402 = vmul.f32 %v341, %v350
      %v403 = vmul.f32 %v342, %v350
      %v404 = vmul.f32 %v343, %v350
      %v405 = vmul.f32 %v344, %v350
      %v406 = vld [vmem:[%s2] sm:$0x1]
      %v408 = vlaneseq
      %v409 = vshrl.u32 %v408, 7
      %v410 = vsub.s32 0, %v409
      %v411 = vrot.slane %v406, %v410
      %v413 = vadd.f32 %v352, %v411
      %v414 = vadd.f32 %v353, %v411
      %v415 = vadd.f32 %v354, %v411
      %v416 = vadd.f32 %v355, %v411
      %v417 = vadd.f32 %v356, %v411
      %v418 = vadd.f32 %v357, %v411
      %v419 = vadd.f32 %v358, %v411
      %v420 = vadd.f32 %v359, %v411
      %v421 = vadd.f32 %v360, %v411
      %v422 = vadd.f32 %v361, %v411
      %v423 = vadd.f32 %v362, %v411
      %v424 = vadd.f32 %v363, %v411
      %v425 = vadd.f32 %v364, %v411
      %v426 = vadd.f32 %v365, %v411
      %v427 = vadd.f32 %v366, %v411
      %v428 = vadd.f32 %v367, %v411
      %v429 = vadd.f32 %v368, %v411
      %v430 = vadd.f32 %v369, %v411
      %v431 = vadd.f32 %v370, %v411
      %v432 = vadd.f32 %v371, %v411
      %v433 = vadd.f32 %v372, %v411
      %v434 = vadd.f32 %v373, %v411
      %v435 = vadd.f32 %v374, %v411
      %v436 = vadd.f32 %v375, %v411
      %v437 = vadd.f32 %v376, %v411
      %v438 = vadd.f32 %v377, %v411
      %v439 = vadd.f32 %v378, %v411
      %v440 = vadd.f32 %v379, %v411
      %v441 = vadd.f32 %v380, %v411
      %v442 = vadd.f32 %v381, %v411
      %v443 = vadd.f32 %v382, %v411
      %v444 = vadd.f32 %v383, %v411
      %v445 = vadd.f32 %v384, %v411
      %v446 = vadd.f32 %v385, %v411
      %v447 = vadd.f32 %v386, %v411
      %v448 = vadd.f32 %v387, %v411
      %v449 = vadd.f32 %v388, %v411
      %v450 = vadd.f32 %v389, %v411
      %v451 = vadd.f32 %v390, %v411
      %v452 = vadd.f32 %v391, %v411
      %v453 = vadd.f32 %v392, %v411
      %v454 = vadd.f32 %v393, %v411
      %v455 = vadd.f32 %v394, %v411
      %v456 = vadd.f32 %v395, %v411
      %v457 = vadd.f32 %v396, %v411
      %v458 = vadd.f32 %v397, %v411
      %v459 = vadd.f32 %v398, %v411
      %v460 = vadd.f32 %v399, %v411
      %v461 = vadd.f32 %v400, %v411
      %v462 = vadd.f32 %v401, %v411
      %v463 = vadd.f32 %v402, %v411
      %v464 = vadd.f32 %v403, %v411
      %v465 = vadd.f32 %v404, %v411
      %v466 = vadd.f32 %v405, %v411
      %vm467 = vcmp.gt.f32.partialorder %v413, 0.0
      %vm468 = vcmp.gt.f32.partialorder %v414, 0.0
      %vm469 = vcmp.gt.f32.partialorder %v415, 0.0
      %vm470 = vcmp.gt.f32.partialorder %v416, 0.0
      %vm471 = vcmp.gt.f32.partialorder %v417, 0.0
      %vm472 = vcmp.gt.f32.partialorder %v418, 0.0
      %vm473 = vcmp.gt.f32.partialorder %v419, 0.0
      %vm474 = vcmp.gt.f32.partialorder %v420, 0.0
      %vm475 = vcmp.gt.f32.partialorder %v421, 0.0
      %vm476 = vcmp.gt.f32.partialorder %v422, 0.0
      %vm477 = vcmp.gt.f32.partialorder %v423, 0.0
      %vm478 = vcmp.gt.f32.partialorder %v424, 0.0
      %vm479 = vcmp.gt.f32.partialorder %v425, 0.0
      %vm480 = vcmp.gt.f32.partialorder %v426, 0.0
      %vm481 = vcmp.gt.f32.partialorder %v427, 0.0
      %vm482 = vcmp.gt.f32.partialorder %v428, 0.0
      %vm483 = vcmp.gt.f32.partialorder %v429, 0.0
      %vm484 = vcmp.gt.f32.partialorder %v430, 0.0
      %vm485 = vcmp.gt.f32.partialorder %v431, 0.0
      %vm486 = vcmp.gt.f32.partialorder %v432, 0.0
      %vm487 = vcmp.gt.f32.partialorder %v433, 0.0
      %vm488 = vcmp.gt.f32.partialorder %v434, 0.0
      %vm489 = vcmp.gt.f32.partialorder %v435, 0.0
      %vm490 = vcmp.gt.f32.partialorder %v436, 0.0
      %vm491 = vcmp.gt.f32.partialorder %v437, 0.0
      %vm492 = vcmp.gt.f32.partialorder %v438, 0.0
      %vm493 = vcmp.gt.f32.partialorder %v439, 0.0
      %vm494 = vcmp.gt.f32.partialorder %v440, 0.0
      %vm495 = vcmp.gt.f32.partialorder %v441, 0.0
      %vm496 = vcmp.gt.f32.partialorder %v442, 0.0
      %vm497 = vcmp.gt.f32.partialorder %v443, 0.0
      %vm498 = vcmp.gt.f32.partialorder %v444, 0.0
      %vm499 = vcmp.gt.f32.partialorder %v445, 0.0
      %vm500 = vcmp.gt.f32.partialorder %v446, 0.0
      %vm501 = vcmp.gt.f32.partialorder %v447, 0.0
      %vm502 = vcmp.gt.f32.partialorder %v448, 0.0
      %vm503 = vcmp.gt.f32.partialorder %v449, 0.0
      %vm504 = vcmp.gt.f32.partialorder %v450, 0.0
      %vm505 = vcmp.gt.f32.partialorder %v451, 0.0
      %vm506 = vcmp.gt.f32.partialorder %v452, 0.0
      %vm507 = vcmp.gt.f32.partialorder %v453, 0.0
      %vm508 = vcmp.gt.f32.partialorder %v454, 0.0
      %vm509 = vcmp.gt.f32.partialorder %v455, 0.0
      %vm510 = vcmp.gt.f32.partialorder %v456, 0.0
      %vm511 = vcmp.gt.f32.partialorder %v457, 0.0
      %vm512 = vcmp.gt.f32.partialorder %v458, 0.0
      %vm513 = vcmp.gt.f32.partialorder %v459, 0.0
      %vm514 = vcmp.gt.f32.partialorder %v460, 0.0
      %vm515 = vcmp.gt.f32.partialorder %v461, 0.0
      %vm516 = vcmp.gt.f32.partialorder %v462, 0.0
      %vm517 = vcmp.gt.f32.partialorder %v463, 0.0
      %vm518 = vcmp.gt.f32.partialorder %v464, 0.0
      %vm519 = vcmp.gt.f32.partialorder %v465, 0.0
      %vm520 = vcmp.gt.f32.partialorder %v466, 0.0
      %v521 = vmul.f32 %v413, 0.01
      %v522 = vmul.f32 %v414, 0.01
      %v523 = vmul.f32 %v415, 0.01
      %v524 = vmul.f32 %v416, 0.01
      %v525 = vmul.f32 %v417, 0.01
      %v526 = vmul.f32 %v418, 0.01
      %v527 = vmul.f32 %v419, 0.01
      %v528 = vmul.f32 %v420, 0.01
      %v529 = vmul.f32 %v421, 0.01
      %v530 = vmul.f32 %v422, 0.01
      %v531 = vmul.f32 %v423, 0.01
      %v532 = vmul.f32 %v424, 0.01
      %v533 = vmul.f32 %v425, 0.01
      %v534 = vmul.f32 %v426, 0.01
      %v535 = vmul.f32 %v427, 0.01
      %v536 = vmul.f32 %v428, 0.01
      %v537 = vmul.f32 %v429, 0.01
      %v538 = vmul.f32 %v430, 0.01
      %v539 = vmul.f32 %v431, 0.01
      %v540 = vmul.f32 %v432, 0.01
      %v541 = vmul.f32 %v433, 0.01
      %v542 = vmul.f32 %v434, 0.01
      %v543 = vmul.f32 %v435, 0.01
      %v544 = vmul.f32 %v436, 0.01
      %v545 = vmul.f32 %v437, 0.01
      %v546 = vmul.f32 %v438, 0.01
      %v547 = vmul.f32 %v439, 0.01
      %v548 = vmul.f32 %v440, 0.01
      %v549 = vmul.f32 %v441, 0.01
      %v550 = vmul.f32 %v442, 0.01
      %v551 = vmul.f32 %v443, 0.01
      %v552 = vmul.f32 %v444, 0.01
      %v553 = vmul.f32 %v445, 0.01
      %v554 = vmul.f32 %v446, 0.01
      %v555 = vmul.f32 %v447, 0.01
      %v556 = vmul.f32 %v448, 0.01
      %v557 = vmul.f32 %v449, 0.01
      %v558 = vmul.f32 %v450, 0.01
      %v559 = vmul.f32 %v451, 0.01
      %v560 = vmul.f32 %v452, 0.01
      %v561 = vmul.f32 %v453, 0.01
      %v562 = vmul.f32 %v454, 0.01
      %v563 = vmul.f32 %v455, 0.01
      %v564 = vmul.f32 %v456, 0.01
      %v565 = vmul.f32 %v457, 0.01
      %v566 = vmul.f32 %v458, 0.01
      %v567 = vmul.f32 %v459, 0.01
      %v568 = vmul.f32 %v460, 0.01
      %v569 = vmul.f32 %v461, 0.01
      %v570 = vmul.f32 %v462, 0.01
      %v571 = vmul.f32 %v463, 0.01
      %v572 = vmul.f32 %v464, 0.01
      %v573 = vmul.f32 %v465, 0.01
      %v574 = vmul.f32 %v466, 0.01
      %v575 = vsel %vm467, %v413, %v521
      %v576 = vsel %vm468, %v414, %v522
      %v577 = vsel %vm469, %v415, %v523
      %v578 = vsel %vm470, %v416, %v524
      %v579 = vsel %vm471, %v417, %v525
      %v580 = vsel %vm472, %v418, %v526
      %v581 = vsel %vm473, %v419, %v527
      %v582 = vsel %vm474, %v420, %v528
      %v583 = vsel %vm475, %v421, %v529
      %v584 = vsel %vm476, %v422, %v530
      %v585 = vsel %vm477, %v423, %v531
      %v586 = vsel %vm478, %v424, %v532
      %v587 = vsel %vm479, %v425, %v533
      %v588 = vsel %vm480, %v426, %v534
      %v589 = vsel %vm481, %v427, %v535
      %v590 = vsel %vm482, %v428, %v536
      %v591 = vsel %vm483, %v429, %v537
      %v592 = vsel %vm484, %v430, %v538
      %v593 = vsel %vm485, %v431, %v539
      %v594 = vsel %vm486, %v432, %v540
      %v595 = vsel %vm487, %v433, %v541
      %v596 = vsel %vm488, %v434, %v542
      %v597 = vsel %vm489, %v435, %v543
      %v598 = vsel %vm490, %v436, %v544
      %v599 = vsel %vm491, %v437, %v545
      %v600 = vsel %vm492, %v438, %v546
      %v601 = vsel %vm493, %v439, %v547
      %v602 = vsel %vm494, %v440, %v548
      %v603 = vsel %vm495, %v441, %v549
      %v604 = vsel %vm496, %v442, %v550
      %v605 = vsel %vm497, %v443, %v551
      %v606 = vsel %vm498, %v444, %v552
      %v607 = vsel %vm499, %v445, %v553
      %v608 = vsel %vm500, %v446, %v554
      %v609 = vsel %vm501, %v447, %v555
      %v610 = vsel %vm502, %v448, %v556
      %v611 = vsel %vm503, %v449, %v557
      %v612 = vsel %vm504, %v450, %v558
      %v613 = vsel %vm505, %v451, %v559
      %v614 = vsel %vm506, %v452, %v560
      %v615 = vsel %vm507, %v453, %v561
      %v616 = vsel %vm508, %v454, %v562
      %v617 = vsel %vm509, %v455, %v563
      %v618 = vsel %vm510, %v456, %v564
      %v619 = vsel %vm511, %v457, %v565
      %v620 = vsel %vm512, %v458, %v566
      %v621 = vsel %vm513, %v459, %v567
      %v622 = vsel %vm514, %v460, %v568
      %v623 = vsel %vm515, %v461, %v569
      %v624 = vsel %vm516, %v462, %v570
      %v625 = vsel %vm517, %v463, %v571
      %v626 = vsel %vm518, %v464, %v572
      %v627 = vsel %vm519, %v465, %v573
      %v628 = vsel %vm520, %v466, %v574
      %v629 = vlaneseq
      %v630 = vshrl.u32 %v629, 7
      %v631 = vadd.s32 %v630, 8
      %v632 = vadd.s32 %v630, 16
      %vm633 = vcmp.ge.s32.totalorder %v630, 1
      %vm634 = vcmp.ge.s32.totalorder %v631, 1
      %vm635 = vcmp.ge.s32.totalorder %v632, 1
      %vm636 = vmand 0, %vm633
      %vm637 = vmand 0, %vm634
      %vm638 = vmand 0, %vm635
      %vm639 = vmand 1, %vm633
      %vm640 = vmand 1, %vm634
      %vm641 = vmand 1, %vm635
      %vm642 = vcmp.le.s32.totalorder %v630, 16
      %vm643 = vcmp.le.s32.totalorder %v631, 16
      %vm644 = vcmp.le.s32.totalorder %v632, 16
      %vm645 = vmand %vm636, %vm642
      %vm646 = vmand %vm637, %vm643
      %vm647 = vmand %vm638, %vm644
      %vm648 = vmand %vm639, %vm642
      %vm649 = vmand %vm640, %vm643
      %vm650 = vmand %vm641, %vm644
      %v651 = vsel %vm645, %v575, 0.0
      %v652 = vsel %vm646, %v576, 0.0
      %v653 = vsel %vm647, %v577, 0.0
      %v654 = vsel %vm648, %v578, 0.0
      %v655 = vsel %vm649, %v579, 0.0
      %v656 = vsel %vm650, %v580, 0.0
      %v657 = vsel %vm648, %v581, 0.0
      %v658 = vsel %vm649, %v582, 0.0
      %v659 = vsel %vm650, %v583, 0.0
      %v660 = vsel %vm648, %v584, 0.0
      %v661 = vsel %vm649, %v585, 0.0
      %v662 = vsel %vm650, %v586, 0.0
      %v663 = vsel %vm648, %v587, 0.0
      %v664 = vsel %vm649, %v588, 0.0
      %v665 = vsel %vm650, %v589, 0.0
      %v666 = vsel %vm648, %v590, 0.0
      %v667 = vsel %vm649, %v591, 0.0
      %v668 = vsel %vm650, %v592, 0.0
      %v669 = vsel %vm648, %v593, 0.0
      %v670 = vsel %vm649, %v594, 0.0
      %v671 = vsel %vm650, %v595, 0.0
      %v672 = vsel %vm648, %v596, 0.0
      %v673 = vsel %vm649, %v597, 0.0
      %v674 = vsel %vm650, %v598, 0.0
      %v675 = vsel %vm648, %v599, 0.0
      %v676 = vsel %vm649, %v600, 0.0
      %v677 = vsel %vm650, %v601, 0.0
      %v678 = vsel %vm648, %v602, 0.0
      %v679 = vsel %vm649, %v603, 0.0
      %v680 = vsel %vm650, %v604, 0.0
      %v681 = vsel %vm648, %v605, 0.0
      %v682 = vsel %vm649, %v606, 0.0
      %v683 = vsel %vm650, %v607, 0.0
      %v684 = vsel %vm648, %v608, 0.0
      %v685 = vsel %vm649, %v609, 0.0
      %v686 = vsel %vm650, %v610, 0.0
      %v687 = vsel %vm648, %v611, 0.0
      %v688 = vsel %vm649, %v612, 0.0
      %v689 = vsel %vm650, %v613, 0.0
      %v690 = vsel %vm648, %v614, 0.0
      %v691 = vsel %vm649, %v615, 0.0
      %v692 = vsel %vm650, %v616, 0.0
      %v693 = vsel %vm648, %v617, 0.0
      %v694 = vsel %vm649, %v618, 0.0
      %v695 = vsel %vm650, %v619, 0.0
      %v696 = vsel %vm648, %v620, 0.0
      %v697 = vsel %vm649, %v621, 0.0
      %v698 = vsel %vm650, %v622, 0.0
      %v699 = vsel %vm648, %v623, 0.0
      %v700 = vsel %vm649, %v624, 0.0
      %v701 = vsel %vm650, %v625, 0.0
      %v702 = vsel %vm645, %v626, 0.0
      %v703 = vsel %vm646, %v627, 0.0
      %v704 = vsel %vm647, %v628, 0.0
      %v705 = vpack.c.bf16 %v652, %v651
      %v706 = vpack.c.bf16 %v653, %v653
      %v707 = vpack.c.bf16 %v655, %v654
      %v708 = vpack.c.bf16 %v656, %v656
      %v709 = vpack.c.bf16 %v658, %v657
      %v710 = vpack.c.bf16 %v659, %v659
      %v711 = vpack.c.bf16 %v661, %v660
      %v712 = vpack.c.bf16 %v662, %v662
      %v713 = vpack.c.bf16 %v664, %v663
      %v714 = vpack.c.bf16 %v665, %v665
      %v715 = vpack.c.bf16 %v667, %v666
      %v716 = vpack.c.bf16 %v668, %v668
      %v717 = vpack.c.bf16 %v670, %v669
      %v718 = vpack.c.bf16 %v671, %v671
      %v719 = vpack.c.bf16 %v673, %v672
      %v720 = vpack.c.bf16 %v674, %v674
      %v721 = vpack.c.bf16 %v676, %v675
      %v722 = vpack.c.bf16 %v677, %v677
      %v723 = vpack.c.bf16 %v679, %v678
      %v724 = vpack.c.bf16 %v680, %v680
      %v725 = vpack.c.bf16 %v682, %v681
      %v726 = vpack.c.bf16 %v683, %v683
      %v727 = vpack.c.bf16 %v685, %v684
      %v728 = vpack.c.bf16 %v686, %v686
      %v729 = vpack.c.bf16 %v688, %v687
      %v730 = vpack.c.bf16 %v689, %v689
      %v731 = vpack.c.bf16 %v691, %v690
      %v732 = vpack.c.bf16 %v692, %v692
      %v733 = vpack.c.bf16 %v694, %v693
      %v734 = vpack.c.bf16 %v695, %v695
      %v735 = vpack.c.bf16 %v697, %v696
      %v736 = vpack.c.bf16 %v698, %v698
      %v737 = vpack.c.bf16 %v700, %v699
      %v738 = vpack.c.bf16 %v701, %v701
      %v739 = vpack.c.bf16 %v703, %v702
      %v740 = vpack.c.bf16 %v704, %v704
      %vm741 = vcmask 64512
      %742 = vst.msk [vmem:[#allocation2] sm:$0xff] %vm741, %v705
      %743 = vst.msk [vmem:[#allocation2 + $0x8] sm:$0xff] %vm741, %v707
      %744 = vst.msk [vmem:[#allocation2 + $0x10] sm:$0xff] %vm741, %v709
      %745 = vst.msk [vmem:[#allocation2 + $0x18] sm:$0xff] %vm741, %v711
      %746 = vst.msk [vmem:[#allocation2 + $0x20] sm:$0xff] %vm741, %v713
      %747 = vst.msk [vmem:[#allocation2 + $0x28] sm:$0xff] %vm741, %v715
      %748 = vst.msk [vmem:[#allocation2 + $0x30] sm:$0xff] %vm741, %v717
      %749 = vst.msk [vmem:[#allocation2 + $0x38] sm:$0xff] %vm741, %v719
      %750 = vst.msk [vmem:[#allocation2 + $0x40] sm:$0xff] %vm741, %v721
      %751 = vst.msk [vmem:[#allocation2 + $0x48] sm:$0xff] %vm741, %v723
      %752 = vst.msk [vmem:[#allocation2 + $0x50] sm:$0xff] %vm741, %v725
      %753 = vst.msk [vmem:[#allocation2 + $0x58] sm:$0xff] %vm741, %v727
      %754 = vst.msk [vmem:[#allocation2 + $0x60] sm:$0xff] %vm741, %v729
      %755 = vst.msk [vmem:[#allocation2 + $0x68] sm:$0xff] %vm741, %v731
      %756 = vst.msk [vmem:[#allocation2 + $0x70] sm:$0xff] %vm741, %v733
      %757 = vst.msk [vmem:[#allocation2 + $0x78] sm:$0xff] %vm741, %v735
      %vm758 = vsmask.f32 7424
      %v760 = vshrl.u32 %v705, 16
      %v762 = vshll.u32 %v705, 16
      %v764 = vrot.slane %v762, 1
      %v765 = vor.u32 %v760, %v764
      %v767 = vshll.u32 %v706, 16
      %v769 = vrot.slane %v767, 1
      %v770 = vsel %vm758, %v765, %v769
      %v772 = vshrl.u32 %v707, 16
      %v774 = vshll.u32 %v707, 16
      %v776 = vrot.slane %v774, 1
      %v777 = vor.u32 %v772, %v776
      %v779 = vshll.u32 %v708, 16
      %v781 = vrot.slane %v779, 1
      %v782 = vsel %vm758, %v777, %v781
      %v784 = vshrl.u32 %v709, 16
      %v786 = vshll.u32 %v709, 16
      %v788 = vrot.slane %v786, 1
      %v789 = vor.u32 %v784, %v788
      %v791 = vshll.u32 %v710, 16
      %v793 = vrot.slane %v791, 1
      %v794 = vsel %vm758, %v789, %v793
      %v796 = vshrl.u32 %v711, 16
      %v798 = vshll.u32 %v711, 16
      %v800 = vrot.slane %v798, 1
      %v801 = vor.u32 %v796, %v800
      %v803 = vshll.u32 %v712, 16
      %v805 = vrot.slane %v803, 1
      %v806 = vsel %vm758, %v801, %v805
      %v808 = vshrl.u32 %v713, 16
      %v810 = vshll.u32 %v713, 16
      %v812 = vrot.slane %v810, 1
      %v813 = vor.u32 %v808, %v812
      %v815 = vshll.u32 %v714, 16
      %v817 = vrot.slane %v815, 1
      %v818 = vsel %vm758, %v813, %v817
      %v820 = vshrl.u32 %v715, 16
      %v822 = vshll.u32 %v715, 16
      %v824 = vrot.slane %v822, 1
      %v825 = vor.u32 %v820, %v824
      %v827 = vshll.u32 %v716, 16
      %v829 = vrot.slane %v827, 1
      %v830 = vsel %vm758, %v825, %v829
      %v832 = vshrl.u32 %v717, 16
      %v834 = vshll.u32 %v717, 16
      %v836 = vrot.slane %v834, 1
      %v837 = vor.u32 %v832, %v836
      %v839 = vshll.u32 %v718, 16
      %v841 = vrot.slane %v839, 1
      %v842 = vsel %vm758, %v837, %v841
      %v844 = vshrl.u32 %v719, 16
      %v846 = vshll.u32 %v719, 16
      %v848 = vrot.slane %v846, 1
      %v849 = vor.u32 %v844, %v848
      %v851 = vshll.u32 %v720, 16
      %v853 = vrot.slane %v851, 1
      %v854 = vsel %vm758, %v849, %v853
      %v856 = vshrl.u32 %v721, 16
      %v858 = vshll.u32 %v721, 16
      %v860 = vrot.slane %v858, 1
      %v861 = vor.u32 %v856, %v860
      %v863 = vshll.u32 %v722, 16
      %v865 = vrot.slane %v863, 1
      %v866 = vsel %vm758, %v861, %v865
      %v868 = vshrl.u32 %v723, 16
      %v870 = vshll.u32 %v723, 16
      %v872 = vrot.slane %v870, 1
      %v873 = vor.u32 %v868, %v872
      %v875 = vshll.u32 %v724, 16
      %v877 = vrot.slane %v875, 1
      %v878 = vsel %vm758, %v873, %v877
      %v880 = vshrl.u32 %v725, 16
      %v882 = vshll.u32 %v725, 16
      %v884 = vrot.slane %v882, 1
      %v885 = vor.u32 %v880, %v884
      %v887 = vshll.u32 %v726, 16
      %v889 = vrot.slane %v887, 1
      %v890 = vsel %vm758, %v885, %v889
      %v892 = vshrl.u32 %v727, 16
      %v894 = vshll.u32 %v727, 16
      %v896 = vrot.slane %v894, 1
      %v897 = vor.u32 %v892, %v896
      %v899 = vshll.u32 %v728, 16
      %v901 = vrot.slane %v899, 1
      %v902 = vsel %vm758, %v897, %v901
      %v904 = vshrl.u32 %v729, 16
      %v906 = vshll.u32 %v729, 16
      %v908 = vrot.slane %v906, 1
      %v909 = vor.u32 %v904, %v908
      %v911 = vshll.u32 %v730, 16
      %v913 = vrot.slane %v911, 1
      %v914 = vsel %vm758, %v909, %v913
      %v916 = vshrl.u32 %v731, 16
      %v918 = vshll.u32 %v731, 16
      %v920 = vrot.slane %v918, 1
      %v921 = vor.u32 %v916, %v920
      %v923 = vshll.u32 %v732, 16
      %v925 = vrot.slane %v923, 1
      %v926 = vsel %vm758, %v921, %v925
      %v928 = vshrl.u32 %v733, 16
      %v930 = vshll.u32 %v733, 16
      %v932 = vrot.slane %v930, 1
      %v933 = vor.u32 %v928, %v932
      %v935 = vshll.u32 %v734, 16
      %v937 = vrot.slane %v935, 1
      %v938 = vsel %vm758, %v933, %v937
      %v940 = vshrl.u32 %v735, 16
      %v942 = vshll.u32 %v735, 16
      %v944 = vrot.slane %v942, 1
      %v945 = vor.u32 %v940, %v944
      %v947 = vshll.u32 %v736, 16
      %v949 = vrot.slane %v947, 1
      %v950 = vsel %vm758, %v945, %v949
      %951 = vrot.lane.b32.xlu0 %v770, 8
      %v952 = vpop.permute.xlu0 %951
      %953 = vrot.lane.b32.xlu0 %v782, 8
      %v954 = vpop.permute.xlu0 %953
      %955 = vrot.lane.b32.xlu0 %v794, 8
      %v956 = vpop.permute.xlu0 %955
      %957 = vrot.lane.b32.xlu0 %v806, 8
      %v958 = vpop.permute.xlu0 %957
      %959 = vrot.lane.b32.xlu0 %v818, 8
      %v960 = vpop.permute.xlu0 %959
      %961 = vrot.lane.b32.xlu0 %v830, 8
      %v962 = vpop.permute.xlu0 %961
      %963 = vrot.lane.b32.xlu0 %v842, 8
      %v964 = vpop.permute.xlu0 %963
      %965 = vrot.lane.b32.xlu0 %v854, 8
      %v966 = vpop.permute.xlu0 %965
      %967 = vrot.lane.b32.xlu0 %v866, 8
      %v968 = vpop.permute.xlu0 %967
      %969 = vrot.lane.b32.xlu0 %v878, 8
      %v970 = vpop.permute.xlu0 %969
      %971 = vrot.lane.b32.xlu0 %v890, 8
      %v972 = vpop.permute.xlu0 %971
      %973 = vrot.lane.b32.xlu0 %v902, 8
      %v974 = vpop.permute.xlu0 %973
      %975 = vrot.lane.b32.xlu0 %v914, 8
      %v976 = vpop.permute.xlu0 %975
      %977 = vrot.lane.b32.xlu0 %v926, 8
      %v978 = vpop.permute.xlu0 %977
      %979 = vrot.lane.b32.xlu0 %v938, 8
      %v980 = vpop.permute.xlu0 %979
      %981 = vrot.lane.b32.xlu0 %v950, 8
      %v982 = vpop.permute.xlu0 %981
      %vm999 = vcmask 130112
      %1000 = vst.msk [vmem:[#allocation2] sm:$0xff] %vm999, %v952
      %1001 = vst.msk [vmem:[#allocation2 + $0x8] sm:$0xff] %vm999, %v954
      %1002 = vst.msk [vmem:[#allocation2 + $0x10] sm:$0xff] %vm999, %v956
      %1003 = vst.msk [vmem:[#allocation2 + $0x18] sm:$0xff] %vm999, %v958
      %1004 = vst.msk [vmem:[#allocation2 + $0x20] sm:$0xff] %vm999, %v960
      %1005 = vst.msk [vmem:[#allocation2 + $0x28] sm:$0xff] %vm999, %v962
      %1006 = vst.msk [vmem:[#allocation2 + $0x30] sm:$0xff] %vm999, %v964
      %1007 = vst.msk [vmem:[#allocation2 + $0x38] sm:$0xff] %vm999, %v966
      %1008 = vst.msk [vmem:[#allocation2 + $0x40] sm:$0xff] %vm999, %v968
      %1009 = vst.msk [vmem:[#allocation2 + $0x48] sm:$0xff] %vm999, %v970
      %1010 = vst.msk [vmem:[#allocation2 + $0x50] sm:$0xff] %vm999, %v972
      %1011 = vst.msk [vmem:[#allocation2 + $0x58] sm:$0xff] %vm999, %v974
      %1012 = vst.msk [vmem:[#allocation2 + $0x60] sm:$0xff] %vm999, %v976
      %1013 = vst.msk [vmem:[#allocation2 + $0x68] sm:$0xff] %vm999, %v978
      %1014 = vst.msk [vmem:[#allocation2 + $0x70] sm:$0xff] %vm999, %v980
      %1015 = vst.msk [vmem:[#allocation2 + $0x78] sm:$0xff] %vm999, %v982
      %vm1048 = vcmask 1046528
      %v1049 = vrot.slane %v705, 1
      %v1050 = vrot.slane %v706, 1
      %v1051 = vsel %vm1048, %v1049, %v1050
      %v1052 = vrot.slane %v707, 1
      %v1053 = vrot.slane %v708, 1
      %v1054 = vsel %vm1048, %v1052, %v1053
      %v1055 = vrot.slane %v709, 1
      %v1056 = vrot.slane %v710, 1
      %v1057 = vsel %vm1048, %v1055, %v1056
      %v1058 = vrot.slane %v711, 1
      %v1059 = vrot.slane %v712, 1
      %v1060 = vsel %vm1048, %v1058, %v1059
      %v1061 = vrot.slane %v713, 1
      %v1062 = vrot.slane %v714, 1
      %v1063 = vsel %vm1048, %v1061, %v1062
      %v1064 = vrot.slane %v715, 1
      %v1065 = vrot.slane %v716, 1
      %v1066 = vsel %vm1048, %v1064, %v1065
      %v1067 = vrot.slane %v717, 1
      %v1068 = vrot.slane %v718, 1
      %v1069 = vsel %vm1048, %v1067, %v1068
      %v1070 = vrot.slane %v719, 1
      %v1071 = vrot.slane %v720, 1
      %v1072 = vsel %vm1048, %v1070, %v1071
      %v1073 = vrot.slane %v721, 1
      %v1074 = vrot.slane %v722, 1
      %v1075 = vsel %vm1048, %v1073, %v1074
      %v1076 = vrot.slane %v723, 1
      %v1077 = vrot.slane %v724, 1
      %v1078 = vsel %vm1048, %v1076, %v1077
      %v1079 = vrot.slane %v725, 1
      %v1080 = vrot.slane %v726, 1
      %v1081 = vsel %vm1048, %v1079, %v1080
      %v1082 = vrot.slane %v727, 1
      %v1083 = vrot.slane %v728, 1
      %v1084 = vsel %vm1048, %v1082, %v1083
      %v1085 = vrot.slane %v729, 1
      %v1086 = vrot.slane %v730, 1
      %v1087 = vsel %vm1048, %v1085, %v1086
      %v1088 = vrot.slane %v731, 1
      %v1089 = vrot.slane %v732, 1
      %v1090 = vsel %vm1048, %v1088, %v1089
      %v1091 = vrot.slane %v733, 1
      %v1092 = vrot.slane %v734, 1
      %v1093 = vsel %vm1048, %v1091, %v1092
      %v1094 = vrot.slane %v735, 1
      %v1095 = vrot.slane %v736, 1
      %v1096 = vsel %vm1048, %v1094, %v1095
      %1097 = vrot.lane.b32.xlu0 %v1051, 16
      %v1098 = vpop.permute.xlu0 %1097
      %1099 = vrot.lane.b32.xlu0 %v1054, 16
      %v1100 = vpop.permute.xlu0 %1099
      %1101 = vrot.lane.b32.xlu0 %v1057, 16
      %v1102 = vpop.permute.xlu0 %1101
      %1103 = vrot.lane.b32.xlu0 %v1060, 16
      %v1104 = vpop.permute.xlu0 %1103
      %1105 = vrot.lane.b32.xlu0 %v1063, 16
      %v1106 = vpop.permute.xlu0 %1105
      %1107 = vrot.lane.b32.xlu0 %v1066, 16
      %v1108 = vpop.permute.xlu0 %1107
      %1109 = vrot.lane.b32.xlu0 %v1069, 16
      %v1110 = vpop.permute.xlu0 %1109
      %1111 = vrot.lane.b32.xlu0 %v1072, 16
      %v1112 = vpop.permute.xlu0 %1111
      %1113 = vrot.lane.b32.xlu0 %v1075, 16
      %v1114 = vpop.permute.xlu0 %1113
      %1115 = vrot.lane.b32.xlu0 %v1078, 16
      %v1116 = vpop.permute.xlu0 %1115
      %1117 = vrot.lane.b32.xlu0 %v1081, 16
      %v1118 = vpop.permute.xlu0 %1117
      %1119 = vrot.lane.b32.xlu0 %v1084, 16
      %v1120 = vpop.permute.xlu0 %1119
      %1121 = vrot.lane.b32.xlu0 %v1087, 16
      %v1122 = vpop.permute.xlu0 %1121
      %1123 = vrot.lane.b32.xlu0 %v1090, 16
      %v1124 = vpop.permute.xlu0 %1123
      %1125 = vrot.lane.b32.xlu0 %v1093, 16
      %v1126 = vpop.permute.xlu0 %1125
      %1127 = vrot.lane.b32.xlu0 %v1096, 16
      %v1128 = vpop.permute.xlu0 %1127
      %vm1145 = vcmask 195712
      %1146 = vst.msk [vmem:[#allocation2] sm:$0xff] %vm1145, %v1098
      %1147 = vst.msk [vmem:[#allocation2 + $0x8] sm:$0xff] %vm1145, %v1100
      %1148 = vst.msk [vmem:[#allocation2 + $0x10] sm:$0xff] %vm1145, %v1102
      %1149 = vst.msk [vmem:[#allocation2 + $0x18] sm:$0xff] %vm1145, %v1104
      %1150 = vst.msk [vmem:[#allocation2 + $0x20] sm:$0xff] %vm1145, %v1106
      %1151 = vst.msk [vmem:[#allocation2 + $0x28] sm:$0xff] %vm1145, %v1108
      %1152 = vst.msk [vmem:[#allocation2 + $0x30] sm:$0xff] %vm1145, %v1110
      %1153 = vst.msk [vmem:[#allocation2 + $0x38] sm:$0xff] %vm1145, %v1112
      %1154 = vst.msk [vmem:[#allocation2 + $0x40] sm:$0xff] %vm1145, %v1114
      %1155 = vst.msk [vmem:[#allocation2 + $0x48] sm:$0xff] %vm1145, %v1116
      %1156 = vst.msk [vmem:[#allocation2 + $0x50] sm:$0xff] %vm1145, %v1118
      %1157 = vst.msk [vmem:[#allocation2 + $0x58] sm:$0xff] %vm1145, %v1120
      %1158 = vst.msk [vmem:[#allocation2 + $0x60] sm:$0xff] %vm1145, %v1122
      %1159 = vst.msk [vmem:[#allocation2 + $0x68] sm:$0xff] %vm1145, %v1124
      %1160 = vst.msk [vmem:[#allocation2 + $0x70] sm:$0xff] %vm1145, %v1126
      %1161 = vst.msk [vmem:[#allocation2 + $0x78] sm:$0xff] %vm1145, %v1128
      %1163 = vrot.lane.b32.xlu0 %v707, 24
      %v1164 = vpop.permute.xlu0 %1163
      %1165 = vrot.lane.b32.xlu0 %v709, 24
      %v1166 = vpop.permute.xlu0 %1165
      %1167 = vrot.lane.b32.xlu0 %v711, 24
      %v1168 = vpop.permute.xlu0 %1167
      %1169 = vrot.lane.b32.xlu0 %v713, 24
      %v1170 = vpop.permute.xlu0 %1169
      %1171 = vrot.lane.b32.xlu0 %v715, 24
      %v1172 = vpop.permute.xlu0 %1171
      %1173 = vrot.lane.b32.xlu0 %v717, 24
      %v1174 = vpop.permute.xlu0 %1173
      %1175 = vrot.lane.b32.xlu0 %v719, 24
      %v1176 = vpop.permute.xlu0 %1175
      %1177 = vrot.lane.b32.xlu0 %v721, 24
      %v1178 = vpop.permute.xlu0 %1177
      %1179 = vrot.lane.b32.xlu0 %v723, 24
      %v1180 = vpop.permute.xlu0 %1179
      %1181 = vrot.lane.b32.xlu0 %v725, 24
      %v1182 = vpop.permute.xlu0 %1181
      %1183 = vrot.lane.b32.xlu0 %v727, 24
      %v1184 = vpop.permute.xlu0 %1183
      %1185 = vrot.lane.b32.xlu0 %v729, 24
      %v1186 = vpop.permute.xlu0 %1185
      %1187 = vrot.lane.b32.xlu0 %v731, 24
      %v1188 = vpop.permute.xlu0 %1187
      %1189 = vrot.lane.b32.xlu0 %v733, 24
      %v1190 = vpop.permute.xlu0 %1189
      %1191 = vrot.lane.b32.xlu0 %v735, 24
      %v1192 = vpop.permute.xlu0 %1191
      %1193 = vrot.lane.b32.xlu0 %v737, 24
      %v1194 = vpop.permute.xlu0 %1193
      %vm1211 = vcmask 261312
      %1212 = vst.msk [vmem:[#allocation2] sm:$0xff] %vm1211, %v1164
      %1213 = vst.msk [vmem:[#allocation2 + $0x8] sm:$0xff] %vm1211, %v1166
      %1214 = vst.msk [vmem:[#allocation2 + $0x10] sm:$0xff] %vm1211, %v1168
      %1215 = vst.msk [vmem:[#allocation2 + $0x18] sm:$0xff] %vm1211, %v1170
      %1216 = vst.msk [vmem:[#allocation2 + $0x20] sm:$0xff] %vm1211, %v1172
      %1217 = vst.msk [vmem:[#allocation2 + $0x28] sm:$0xff] %vm1211, %v1174
      %1218 = vst.msk [vmem:[#allocation2 + $0x30] sm:$0xff] %vm1211, %v1176
      %1219 = vst.msk [vmem:[#allocation2 + $0x38] sm:$0xff] %vm1211, %v1178
      %1220 = vst.msk [vmem:[#allocation2 + $0x40] sm:$0xff] %vm1211, %v1180
      %1221 = vst.msk [vmem:[#allocation2 + $0x48] sm:$0xff] %vm1211, %v1182
      %1222 = vst.msk [vmem:[#allocation2 + $0x50] sm:$0xff] %vm1211, %v1184
      %1223 = vst.msk [vmem:[#allocation2 + $0x58] sm:$0xff] %vm1211, %v1186
      %1224 = vst.msk [vmem:[#allocation2 + $0x60] sm:$0xff] %vm1211, %v1188
      %1225 = vst.msk [vmem:[#allocation2 + $0x68] sm:$0xff] %vm1211, %v1190
      %1226 = vst.msk [vmem:[#allocation2 + $0x70] sm:$0xff] %vm1211, %v1192
      %1227 = vst.msk [vmem:[#allocation2 + $0x78] sm:$0xff] %vm1211, %v1194
      %v1229 = vshrl.u32 %v737, 16
      %v1231 = vshll.u32 %v737, 16
      %v1233 = vrot.slane %v1231, 1
      %v1234 = vor.u32 %v1229, %v1233
      %v1236 = vshll.u32 %v738, 16
      %v1238 = vrot.slane %v1236, 1
      %v1239 = vsel %vm758, %v1234, %v1238
      %1240 = vrot.lane.b32.xlu0 %v782, 32
      %v1241 = vpop.permute.xlu0 %1240
      %1242 = vrot.lane.b32.xlu0 %v794, 32
      %v1243 = vpop.permute.xlu0 %1242
      %1244 = vrot.lane.b32.xlu0 %v806, 32
      %v1245 = vpop.permute.xlu0 %1244
      %1246 = vrot.lane.b32.xlu0 %v818, 32
      %v1247 = vpop.permute.xlu0 %1246
      %1248 = vrot.lane.b32.xlu0 %v830, 32
      %v1249 = vpop.permute.xlu0 %1248
      %1250 = vrot.lane.b32.xlu0 %v842, 32
      %v1251 = vpop.permute.xlu0 %1250
      %1252 = vrot.lane.b32.xlu0 %v854, 32
      %v1253 = vpop.permute.xlu0 %1252
      %1254 = vrot.lane.b32.xlu0 %v866, 32
      %v1255 = vpop.permute.xlu0 %1254
      %1256 = vrot.lane.b32.xlu0 %v878, 32
      %v1257 = vpop.permute.xlu0 %1256
      %1258 = vrot.lane.b32.xlu0 %v890, 32
      %v1259 = vpop.permute.xlu0 %1258
      %1260 = vrot.lane.b32.xlu0 %v902, 32
      %v1261 = vpop.permute.xlu0 %1260
      %1262 = vrot.lane.b32.xlu0 %v914, 32
      %v1263 = vpop.permute.xlu0 %1262
      %1264 = vrot.lane.b32.xlu0 %v926, 32
      %v1265 = vpop.permute.xlu0 %1264
      %1266 = vrot.lane.b32.xlu0 %v938, 32
      %v1267 = vpop.permute.xlu0 %1266
      %1268 = vrot.lane.b32.xlu0 %v950, 32
      %v1269 = vpop.permute.xlu0 %1268
      %1270 = vrot.lane.b32.xlu0 %v1239, 32
      %v1271 = vpop.permute.xlu0 %1270
      %vm1288 = vcmask 326912
      %1289 = vst.msk [vmem:[#allocation2] sm:$0xff] %vm1288, %v1241
      %1290 = vst.msk [vmem:[#allocation2 + $0x8] sm:$0xff] %vm1288, %v1243
      %1291 = vst.msk [vmem:[#allocation2 + $0x10] sm:$0xff] %vm1288, %v1245
      %1292 = vst.msk [vmem:[#allocation2 + $0x18] sm:$0xff] %vm1288, %v1247
      %1293 = vst.msk [vmem:[#allocation2 + $0x20] sm:$0xff] %vm1288, %v1249
      %1294 = vst.msk [vmem:[#allocation2 + $0x28] sm:$0xff] %vm1288, %v1251
      %1295 = vst.msk [vmem:[#allocation2 + $0x30] sm:$0xff] %vm1288, %v1253
      %1296 = vst.msk [vmem:[#allocation2 + $0x38] sm:$0xff] %vm1288, %v1255
      %1297 = vst.msk [vmem:[#allocation2 + $0x40] sm:$0xff] %vm1288, %v1257
      %1298 = vst.msk [vmem:[#allocation2 + $0x48] sm:$0xff] %vm1288, %v1259
      %1299 = vst.msk [vmem:[#allocation2 + $0x50] sm:$0xff] %vm1288, %v1261
      %1300 = vst.msk [vmem:[#allocation2 + $0x58] sm:$0xff] %vm1288, %v1263
      %1301 = vst.msk [vmem:[#allocation2 + $0x60] sm:$0xff] %vm1288, %v1265
      %1302 = vst.msk [vmem:[#allocation2 + $0x68] sm:$0xff] %vm1288, %v1267
      %1303 = vst.msk [vmem:[#allocation2 + $0x70] sm:$0xff] %vm1288, %v1269
      %1304 = vst.msk [vmem:[#allocation2 + $0x78] sm:$0xff] %vm1288, %v1271
      %v1306 = vrot.slane %v737, 1
      %v1307 = vrot.slane %v738, 1
      %v1308 = vsel %vm1048, %v1306, %v1307
      %1309 = vrot.lane.b32.xlu0 %v1054, 40
      %v1310 = vpop.permute.xlu0 %1309
      %1311 = vrot.lane.b32.xlu0 %v1057, 40
      %v1312 = vpop.permute.xlu0 %1311
      %1313 = vrot.lane.b32.xlu0 %v1060, 40
      %v1314 = vpop.permute.xlu0 %1313
      %1315 = vrot.lane.b32.xlu0 %v1063, 40
      %v1316 = vpop.permute.xlu0 %1315
      %1317 = vrot.lane.b32.xlu0 %v1066, 40
      %v1318 = vpop.permute.xlu0 %1317
      %1319 = vrot.lane.b32.xlu0 %v1069, 40
      %v1320 = vpop.permute.xlu0 %1319
      %1321 = vrot.lane.b32.xlu0 %v1072, 40
      %v1322 = vpop.permute.xlu0 %1321
      %1323 = vrot.lane.b32.xlu0 %v1075, 40
      %v1324 = vpop.permute.xlu0 %1323
      %1325 = vrot.lane.b32.xlu0 %v1078, 40
      %v1326 = vpop.permute.xlu0 %1325
      %1327 = vrot.lane.b32.xlu0 %v1081, 40
      %v1328 = vpop.permute.xlu0 %1327
      %1329 = vrot.lane.b32.xlu0 %v1084, 40
      %v1330 = vpop.permute.xlu0 %1329
      %1331 = vrot.lane.b32.xlu0 %v1087, 40
      %v1332 = vpop.permute.xlu0 %1331
      %1333 = vrot.lane.b32.xlu0 %v1090, 40
      %v1334 = vpop.permute.xlu0 %1333
      %1335 = vrot.lane.b32.xlu0 %v1093, 40
      %v1336 = vpop.permute.xlu0 %1335
      %1337 = vrot.lane.b32.xlu0 %v1096, 40
      %v1338 = vpop.permute.xlu0 %1337
      %1339 = vrot.lane.b32.xlu0 %v1308, 40
      %v1340 = vpop.permute.xlu0 %1339
      %vm1357 = vcmask 392512
      %1358 = vst.msk [vmem:[#allocation2] sm:$0xff] %vm1357, %v1310
      %1359 = vst.msk [vmem:[#allocation2 + $0x8] sm:$0xff] %vm1357, %v1312
      %1360 = vst.msk [vmem:[#allocation2 + $0x10] sm:$0xff] %vm1357, %v1314
      %1361 = vst.msk [vmem:[#allocation2 + $0x18] sm:$0xff] %vm1357, %v1316
      %1362 = vst.msk [vmem:[#allocation2 + $0x20] sm:$0xff] %vm1357, %v1318
      %1363 = vst.msk [vmem:[#allocation2 + $0x28] sm:$0xff] %vm1357, %v1320
      %1364 = vst.msk [vmem:[#allocation2 + $0x30] sm:$0xff] %vm1357, %v1322
      %1365 = vst.msk [vmem:[#allocation2 + $0x38] sm:$0xff] %vm1357, %v1324
      %1366 = vst.msk [vmem:[#allocation2 + $0x40] sm:$0xff] %vm1357, %v1326
      %1367 = vst.msk [vmem:[#allocation2 + $0x48] sm:$0xff] %vm1357, %v1328
      %1368 = vst.msk [vmem:[#allocation2 + $0x50] sm:$0xff] %vm1357, %v1330
      %1369 = vst.msk [vmem:[#allocation2 + $0x58] sm:$0xff] %vm1357, %v1332
      %1370 = vst.msk [vmem:[#allocation2 + $0x60] sm:$0xff] %vm1357, %v1334
      %1371 = vst.msk [vmem:[#allocation2 + $0x68] sm:$0xff] %vm1357, %v1336
      %1372 = vst.msk [vmem:[#allocation2 + $0x70] sm:$0xff] %vm1357, %v1338
      %1373 = vst.msk [vmem:[#allocation2 + $0x78] sm:$0xff] %vm1357, %v1340
      %1375 = vrot.lane.b32.xlu0 %v709, 48
      %v1376 = vpop.permute.xlu0 %1375
      %1377 = vrot.lane.b32.xlu0 %v711, 48
      %v1378 = vpop.permute.xlu0 %1377
      %1379 = vrot.lane.b32.xlu0 %v713, 48
      %v1380 = vpop.permute.xlu0 %1379
      %1381 = vrot.lane.b32.xlu0 %v715, 48
      %v1382 = vpop.permute.xlu0 %1381
      %1383 = vrot.lane.b32.xlu0 %v717, 48
      %v1384 = vpop.permute.xlu0 %1383
      %1385 = vrot.lane.b32.xlu0 %v719, 48
      %v1386 = vpop.permute.xlu0 %1385
      %1387 = vrot.lane.b32.xlu0 %v721, 48
      %v1388 = vpop.permute.xlu0 %1387
      %1389 = vrot.lane.b32.xlu0 %v723, 48
      %v1390 = vpop.permute.xlu0 %1389
      %1391 = vrot.lane.b32.xlu0 %v725, 48
      %v1392 = vpop.permute.xlu0 %1391
      %1393 = vrot.lane.b32.xlu0 %v727, 48
      %v1394 = vpop.permute.xlu0 %1393
      %1395 = vrot.lane.b32.xlu0 %v729, 48
      %v1396 = vpop.permute.xlu0 %1395
      %1397 = vrot.lane.b32.xlu0 %v731, 48
      %v1398 = vpop.permute.xlu0 %1397
      %1399 = vrot.lane.b32.xlu0 %v733, 48
      %v1400 = vpop.permute.xlu0 %1399
      %1401 = vrot.lane.b32.xlu0 %v735, 48
      %v1402 = vpop.permute.xlu0 %1401
      %1403 = vrot.lane.b32.xlu0 %v737, 48
      %v1404 = vpop.permute.xlu0 %1403
      %1405 = vrot.lane.b32.xlu0 %v739, 48
      %v1406 = vpop.permute.xlu0 %1405
      %vm1423 = vcmask 458112
      %1424 = vst.msk [vmem:[#allocation2] sm:$0xff] %vm1423, %v1376
      %1425 = vst.msk [vmem:[#allocation2 + $0x8] sm:$0xff] %vm1423, %v1378
      %1426 = vst.msk [vmem:[#allocation2 + $0x10] sm:$0xff] %vm1423, %v1380
      %1427 = vst.msk [vmem:[#allocation2 + $0x18] sm:$0xff] %vm1423, %v1382
      %1428 = vst.msk [vmem:[#allocation2 + $0x20] sm:$0xff] %vm1423, %v1384
      %1429 = vst.msk [vmem:[#allocation2 + $0x28] sm:$0xff] %vm1423, %v1386
      %1430 = vst.msk [vmem:[#allocation2 + $0x30] sm:$0xff] %vm1423, %v1388
      %1431 = vst.msk [vmem:[#allocation2 + $0x38] sm:$0xff] %vm1423, %v1390
      %1432 = vst.msk [vmem:[#allocation2 + $0x40] sm:$0xff] %vm1423, %v1392
      %1433 = vst.msk [vmem:[#allocation2 + $0x48] sm:$0xff] %vm1423, %v1394
      %1434 = vst.msk [vmem:[#allocation2 + $0x50] sm:$0xff] %vm1423, %v1396
      %1435 = vst.msk [vmem:[#allocation2 + $0x58] sm:$0xff] %vm1423, %v1398
      %1436 = vst.msk [vmem:[#allocation2 + $0x60] sm:$0xff] %vm1423, %v1400
      %1437 = vst.msk [vmem:[#allocation2 + $0x68] sm:$0xff] %vm1423, %v1402
      %1438 = vst.msk [vmem:[#allocation2 + $0x70] sm:$0xff] %vm1423, %v1404
      %1439 = vst.msk [vmem:[#allocation2 + $0x78] sm:$0xff] %vm1423, %v1406
      %v1441 = vshrl.u32 %v739, 16
      %v1443 = vshll.u32 %v739, 16
      %v1445 = vrot.slane %v1443, 1
      %v1446 = vor.u32 %v1441, %v1445
      %v1448 = vshll.u32 %v740, 16
      %v1450 = vrot.slane %v1448, 1
      %v1451 = vsel %vm758, %v1446, %v1450
      %1452 = vrot.lane.b32.xlu0 %v794, 56
      %v1453 = vpop.permute.xlu0 %1452
      %1454 = vrot.lane.b32.xlu0 %v806, 56
      %v1455 = vpop.permute.xlu0 %1454
      %1456 = vrot.lane.b32.xlu0 %v818, 56
      %v1457 = vpop.permute.xlu0 %1456
      %1458 = vrot.lane.b32.xlu0 %v830, 56
      %v1459 = vpop.permute.xlu0 %1458
      %1460 = vrot.lane.b32.xlu0 %v842, 56
      %v1461 = vpop.permute.xlu0 %1460
      %1462 = vrot.lane.b32.xlu0 %v854, 56
      %v1463 = vpop.permute.xlu0 %1462
      %1464 = vrot.lane.b32.xlu0 %v866, 56
      %v1465 = vpop.permute.xlu0 %1464
      %1466 = vrot.lane.b32.xlu0 %v878, 56
      %v1467 = vpop.permute.xlu0 %1466
      %1468 = vrot.lane.b32.xlu0 %v890, 56
      %v1469 = vpop.permute.xlu0 %1468
      %1470 = vrot.lane.b32.xlu0 %v902, 56
      %v1471 = vpop.permute.xlu0 %1470
      %1472 = vrot.lane.b32.xlu0 %v914, 56
      %v1473 = vpop.permute.xlu0 %1472
      %1474 = vrot.lane.b32.xlu0 %v926, 56
      %v1475 = vpop.permute.xlu0 %1474
      %1476 = vrot.lane.b32.xlu0 %v938, 56
      %v1477 = vpop.permute.xlu0 %1476
      %1478 = vrot.lane.b32.xlu0 %v950, 56
      %v1479 = vpop.permute.xlu0 %1478
      %1480 = vrot.lane.b32.xlu0 %v1239, 56
      %v1481 = vpop.permute.xlu0 %1480
      %1482 = vrot.lane.b32.xlu0 %v1451, 56
      %v1483 = vpop.permute.xlu0 %1482
      %vm1500 = vcmask 523712
      %1501 = vst.msk [vmem:[#allocation2] sm:$0xff] %vm1500, %v1453
      %1502 = vst.msk [vmem:[#allocation2 + $0x8] sm:$0xff] %vm1500, %v1455
      %1503 = vst.msk [vmem:[#allocation2 + $0x10] sm:$0xff] %vm1500, %v1457
      %1504 = vst.msk [vmem:[#allocation2 + $0x18] sm:$0xff] %vm1500, %v1459
      %1505 = vst.msk [vmem:[#allocation2 + $0x20] sm:$0xff] %vm1500, %v1461
      %1506 = vst.msk [vmem:[#allocation2 + $0x28] sm:$0xff] %vm1500, %v1463
      %1507 = vst.msk [vmem:[#allocation2 + $0x30] sm:$0xff] %vm1500, %v1465
      %1508 = vst.msk [vmem:[#allocation2 + $0x38] sm:$0xff] %vm1500, %v1467
      %1509 = vst.msk [vmem:[#allocation2 + $0x40] sm:$0xff] %vm1500, %v1469
      %1510 = vst.msk [vmem:[#allocation2 + $0x48] sm:$0xff] %vm1500, %v1471
      %1511 = vst.msk [vmem:[#allocation2 + $0x50] sm:$0xff] %vm1500, %v1473
      %1512 = vst.msk [vmem:[#allocation2 + $0x58] sm:$0xff] %vm1500, %v1475
      %1513 = vst.msk [vmem:[#allocation2 + $0x60] sm:$0xff] %vm1500, %v1477
      %1514 = vst.msk [vmem:[#allocation2 + $0x68] sm:$0xff] %vm1500, %v1479
      %1515 = vst.msk [vmem:[#allocation2 + $0x70] sm:$0xff] %vm1500, %v1481
      %1516 = vst.msk [vmem:[#allocation2 + $0x78] sm:$0xff] %vm1500, %v1483
      %v1518 = vrot.slane %v739, 1
      %v1519 = vrot.slane %v740, 1
      %v1520 = vsel %vm1048, %v1518, %v1519
      %1521 = vrot.lane.b32.xlu0 %v1057, 64
      %v1522 = vpop.permute.xlu0 %1521
      %1523 = vrot.lane.b32.xlu0 %v1060, 64
      %v1524 = vpop.permute.xlu0 %1523
      %1525 = vrot.lane.b32.xlu0 %v1063, 64
      %v1526 = vpop.permute.xlu0 %1525
      %1527 = vrot.lane.b32.xlu0 %v1066, 64
      %v1528 = vpop.permute.xlu0 %1527
      %1529 = vrot.lane.b32.xlu0 %v1069, 64
      %v1530 = vpop.permute.xlu0 %1529
      %1531 = vrot.lane.b32.xlu0 %v1072, 64
      %v1532 = vpop.permute.xlu0 %1531
      %1533 = vrot.lane.b32.xlu0 %v1075, 64
      %v1534 = vpop.permute.xlu0 %1533
      %1535 = vrot.lane.b32.xlu0 %v1078, 64
      %v1536 = vpop.permute.xlu0 %1535
      %1537 = vrot.lane.b32.xlu0 %v1081, 64
      %v1538 = vpop.permute.xlu0 %1537
      %1539 = vrot.lane.b32.xlu0 %v1084, 64
      %v1540 = vpop.permute.xlu0 %1539
      %1541 = vrot.lane.b32.xlu0 %v1087, 64
      %v1542 = vpop.permute.xlu0 %1541
      %1543 = vrot.lane.b32.xlu0 %v1090, 64
      %v1544 = vpop.permute.xlu0 %1543
      %1545 = vrot.lane.b32.xlu0 %v1093, 64
      %v1546 = vpop.permute.xlu0 %1545
      %1547 = vrot.lane.b32.xlu0 %v1096, 64
      %v1548 = vpop.permute.xlu0 %1547
      %1549 = vrot.lane.b32.xlu0 %v1308, 64
      %v1550 = vpop.permute.xlu0 %1549
      %1551 = vrot.lane.b32.xlu0 %v1520, 64
      %v1552 = vpop.permute.xlu0 %1551
      %vm1569 = vcmask 589312
      %1570 = vst.msk [vmem:[#allocation2] sm:$0xff] %vm1569, %v1522
      %1571 = vst.msk [vmem:[#allocation2 + $0x8] sm:$0xff] %vm1569, %v1524
      %1572 = vst.msk [vmem:[#allocation2 + $0x10] sm:$0xff] %vm1569, %v1526
      %1573 = vst.msk [vmem:[#allocation2 + $0x18] sm:$0xff] %vm1569, %v1528
      %1574 = vst.msk [vmem:[#allocation2 + $0x20] sm:$0xff] %vm1569, %v1530
      %1575 = vst.msk [vmem:[#allocation2 + $0x28] sm:$0xff] %vm1569, %v1532
      %1576 = vst.msk [vmem:[#allocation2 + $0x30] sm:$0xff] %vm1569, %v1534
      %1577 = vst.msk [vmem:[#allocation2 + $0x38] sm:$0xff] %vm1569, %v1536
      %1578 = vst.msk [vmem:[#allocation2 + $0x40] sm:$0xff] %vm1569, %v1538
      %1579 = vst.msk [vmem:[#allocation2 + $0x48] sm:$0xff] %vm1569, %v1540
      %1580 = vst.msk [vmem:[#allocation2 + $0x50] sm:$0xff] %vm1569, %v1542
      %1581 = vst.msk [vmem:[#allocation2 + $0x58] sm:$0xff] %vm1569, %v1544
      %1582 = vst.msk [vmem:[#allocation2 + $0x60] sm:$0xff] %vm1569, %v1546
      %1583 = vst.msk [vmem:[#allocation2 + $0x68] sm:$0xff] %vm1569, %v1548
      %1584 = vst.msk [vmem:[#allocation2 + $0x70] sm:$0xff] %vm1569, %v1550
      %1585 = vst.msk [vmem:[#allocation2 + $0x78] sm:$0xff] %vm1569, %v1552
      %v1586 = vld [vmem:[#allocation2] sm:$0xff]
      %v1587 = vld [vmem:[#allocation2 + $0x8] sm:$0xff]
      %v1588 = vld [vmem:[#allocation2 + $0x10] sm:$0xff]
      %v1589 = vld [vmem:[#allocation2 + $0x18] sm:$0xff]
      %v1590 = vld [vmem:[#allocation2 + $0x20] sm:$0xff]
      %v1591 = vld [vmem:[#allocation2 + $0x28] sm:$0xff]
      %v1592 = vld [vmem:[#allocation2 + $0x30] sm:$0xff]
      %v1593 = vld [vmem:[#allocation2 + $0x38] sm:$0xff]
      %v1594 = vld [vmem:[#allocation2 + $0x40] sm:$0xff]
      %v1595 = vld [vmem:[#allocation2 + $0x48] sm:$0xff]
      %v1596 = vld [vmem:[#allocation2 + $0x50] sm:$0xff]
      %v1597 = vld [vmem:[#allocation2 + $0x58] sm:$0xff]
      %v1598 = vld [vmem:[#allocation2 + $0x60] sm:$0xff]
      %v1599 = vld [vmem:[#allocation2 + $0x68] sm:$0xff]
      %v1600 = vld [vmem:[#allocation2 + $0x70] sm:$0xff]
      %v1601 = vld [vmem:[#allocation2 + $0x78] sm:$0xff]
      %v1602 = vld [vmem:[%s3] sm:$0xf]
      %v1603 = vld [vmem:[%s3 + $0x4] sm:$0xf]
      %v1604 = vld [vmem:[%s3 + $0x8] sm:$0xf]
      %v1605 = vld [vmem:[%s3 + $0xc] sm:$0xf]
      %v1606 = vld [vmem:[%s3 + $0x10] sm:$0xf]
      %v1607 = vld [vmem:[%s3 + $0x14] sm:$0xf]
      %v1608 = vld [vmem:[%s3 + $0x18] sm:$0xf]
      %v1609 = vld [vmem:[%s3 + $0x1c] sm:$0xf]
      %v1610 = vld [vmem:[%s3 + $0x20] sm:$0xf]
      %v1620 = vunpack.c.l.b16 %v1602
      %v1621 = vunpack.c.l.b16 %v1603
      %v1622 = vunpack.c.l.b16 %v1604
      %v1623 = vunpack.c.l.b16 %v1605
      %v1624 = vunpack.c.l.b16 %v1606
      %v1625 = vunpack.c.l.b16 %v1607
      %v1626 = vunpack.c.l.b16 %v1608
      %v1627 = vunpack.c.l.b16 %v1609
      %v1628 = vunpack.c.l.b16 %v1610
      %v1629 = vpack.c.b16 %v1621, %v1620
      %v1630 = vpack.c.b16 %v1623, %v1622
      %v1631 = vpack.c.b16 %v1625, %v1624
      %v1632 = vpack.c.b16 %v1627, %v1626
      %v1633 = vpack.c.b16 %v1628, %v1628
      %vm1638 = vcmask 588800
      %v1640 = vsel %vm1638, %v1586, 0
      %v1643 = vsel %vm1638, %v1587, 0
      %v1646 = vsel %vm1638, %v1588, 0
      %v1649 = vsel %vm1638, %v1589, 0
      %v1652 = vsel %vm1638, %v1590, 0
      %v1655 = vsel %vm1638, %v1591, 0
      %v1658 = vsel %vm1638, %v1592, 0
      %v1661 = vsel %vm1638, %v1593, 0
      %v1664 = vsel %vm1638, %v1594, 0
      %v1667 = vsel %vm1638, %v1595, 0
      %v1670 = vsel %vm1638, %v1596, 0
      %v1673 = vsel %vm1638, %v1597, 0
      %v1676 = vsel %vm1638, %v1598, 0
      %v1679 = vsel %vm1638, %v1599, 0
      %v1682 = vsel %vm1638, %v1600, 0
      %v1685 = vsel %vm1638, %v1601, 0
      %vm1687 = vcmask 1043456
      %v1689 = vsel %vm1687, %v1633, 0
      %1691 = vmatprep.subr.bf16.mxu0 0
      %1692 = vmatpush1.bf16.msra.mxu0 %v1629
      %1693 = vmatprep.subr.bf16.mxu0 0
      %1694 = vmatpush1.bf16.msra.mxu0 %v1630
      %1695 = vmatprep.subr.bf16.mxu0 0
      %1696 = vmatpush1.bf16.msra.mxu0 %v1631
      %1697 = vmatprep.subr.bf16.mxu0 0
      %1698 = vmatpush1.bf16.msra.mxu0 %v1632
      %1699 = vmatprep.subr.bf16.mxu0 0
      %1700 = vmatpush1.bf16.msra.mxu0 %v1689
      %1701 = vmatprep.subr.bf16.mxu0 0
      %1702 = vmatpush1.bf16.msra.mxu0 0
      %1703 = vmatprep.subr.bf16.mxu0 0
      %1704 = vmatpush1.bf16.msra.mxu0 0
      %1705 = vmatprep.subr.bf16.mxu0 0
      %1706 = vmatpush1.bf16.msra.mxu0 0
      %1707 = vmatprep.subr.bf16.mxu0 0
      %1708 = vmatpush1.bf16.msra.mxu0 0
      %1709 = vmatprep.subr.bf16.mxu0 0
      %1710 = vmatpush1.bf16.msra.mxu0 0
      %1711 = vmatprep.subr.bf16.mxu0 0
      %1712 = vmatpush1.bf16.msra.mxu0 0
      %1713 = vmatprep.subr.bf16.mxu0 0
      %1714 = vmatpush1.bf16.msra.mxu0 0
      %1715 = vmatprep.subr.bf16.mxu0 0
      %1716 = vmatpush1.bf16.msra.mxu0 0
      %1717 = vmatprep.subr.bf16.mxu0 0
      %1718 = vmatpush1.bf16.msra.mxu0 0
      %1719 = vmatprep.subr.bf16.mxu0 0
      %1720 = vmatpush1.bf16.msra.mxu0 0
      %1721 = vmatprep.subr.bf16.mxu0 0
      %1722 = vmatpush1.bf16.msra.mxu0 0
      %1723 = vmatprep.mubr.bf16.mxu0 0
      %1724 = vmatmul.mubr.bf16.gmra.mrb[0].mxu0 %v1640
      %v1725 = vpop.f32.mrb[0].mxu0
      %v1726 = vadd.f32 0.0, %v1725
      %v1727 = vpop.f32.mrb[0].mxu0
      %v1728 = vpop.f32.mrb[0].mxu0
      %v1729 = vadd.f32 0.0, %v1728
      %v1730 = vpop.f32.mrb[0].mxu0
      %1731 = vmatprep.mubr.bf16.mxu0 0
      %1732 = vmatmul.mubr.bf16.gmra.mrb[0].mxu0 %v1643
      %v1733 = vpop.f32.mrb[0].mxu0
      %v1734 = vadd.f32 0.0, %v1733
      %v1735 = vpop.f32.mrb[0].mxu0
      %v1736 = vpop.f32.mrb[0].mxu0
      %v1737 = vadd.f32 0.0, %v1736
      %v1738 = vpop.f32.mrb[0].mxu0
      %1739 = vmatprep.mubr.bf16.mxu0 0
      %1740 = vmatmul.mubr.bf16.gmra.mrb[0].mxu0 %v1646
      %v1741 = vpop.f32.mrb[0].mxu0
      %v1742 = vadd.f32 0.0, %v1741
      %v1743 = vpop.f32.mrb[0].mxu0
      %v1744 = vpop.f32.mrb[0].mxu0
      %v1745 = vadd.f32 0.0, %v1744
      %v1746 = vpop.f32.mrb[0].mxu0
      %1747 = vmatprep.mubr.bf16.mxu0 0
      %1748 = vmatmul.mubr.bf16.gmra.mrb[0].mxu0 %v1649
      %v1749 = vpop.f32.mrb[0].mxu0
      %v1750 = vadd.f32 0.0, %v1749
      %v1751 = vpop.f32.mrb[0].mxu0
      %v1752 = vpop.f32.mrb[0].mxu0
      %v1753 = vadd.f32 0.0, %v1752
      %v1754 = vpop.f32.mrb[0].mxu0
      %1755 = vmatprep.mubr.bf16.mxu0 0
      %1756 = vmatmul.mubr.bf16.gmra.mrb[0].mxu0 %v1652
      %v1757 = vpop.f32.mrb[0].mxu0
      %v1758 = vadd.f32 0.0, %v1757
      %v1759 = vpop.f32.mrb[0].mxu0
      %v1760 = vpop.f32.mrb[0].mxu0
      %v1761 = vadd.f32 0.0, %v1760
      %v1762 = vpop.f32.mrb[0].mxu0
      %1763 = vmatprep.mubr.bf16.mxu0 0
      %1764 = vmatmul.mubr.bf16.gmra.mrb[0].mxu0 %v1655
      %v1765 = vpop.f32.mrb[0].mxu0
      %v1766 = vadd.f32 0.0, %v1765
      %v1767 = vpop.f32.mrb[0].mxu0
      %v1768 = vpop.f32.mrb[0].mxu0
      %v1769 = vadd.f32 0.0, %v1768
      %v1770 = vpop.f32.mrb[0].mxu0
      %1771 = vmatprep.mubr.bf16.mxu0 0
      %1772 = vmatmul.mubr.bf16.gmra.mrb[0].mxu0 %v1658
      %v1773 = vpop.f32.mrb[0].mxu0
      %v1774 = vadd.f32 0.0, %v1773
      %v1775 = vpop.f32.mrb[0].mxu0
      %v1776 = vpop.f32.mrb[0].mxu0
      %v1777 = vadd.f32 0.0, %v1776
      %v1778 = vpop.f32.mrb[0].mxu0
      %1779 = vmatprep.mubr.bf16.mxu0 0
      %1780 = vmatmul.mubr.bf16.gmra.mrb[0].mxu0 %v1661
      %v1781 = vpop.f32.mrb[0].mxu0
      %v1782 = vadd.f32 0.0, %v1781
      %v1783 = vpop.f32.mrb[0].mxu0
      %v1784 = vpop.f32.mrb[0].mxu0
      %v1785 = vadd.f32 0.0, %v1784
      %v1786 = vpop.f32.mrb[0].mxu0
      %1787 = vmatprep.mubr.bf16.mxu0 0
      %1788 = vmatmul.mubr.bf16.gmra.mrb[0].mxu0 %v1664
      %v1789 = vpop.f32.mrb[0].mxu0
      %v1790 = vadd.f32 0.0, %v1789
      %v1791 = vpop.f32.mrb[0].mxu0
      %v1792 = vpop.f32.mrb[0].mxu0
      %v1793 = vadd.f32 0.0, %v1792
      %v1794 = vpop.f32.mrb[0].mxu0
      %1795 = vmatprep.mubr.bf16.mxu0 0
      %1796 = vmatmul.mubr.bf16.gmra.mrb[0].mxu0 %v1667
      %v1797 = vpop.f32.mrb[0].mxu0
      %v1798 = vadd.f32 0.0, %v1797
      %v1799 = vpop.f32.mrb[0].mxu0
      %v1800 = vpop.f32.mrb[0].mxu0
      %v1801 = vadd.f32 0.0, %v1800
      %v1802 = vpop.f32.mrb[0].mxu0
      %1803 = vmatprep.mubr.bf16.mxu0 0
      %1804 = vmatmul.mubr.bf16.gmra.mrb[0].mxu0 %v1670
      %v1805 = vpop.f32.mrb[0].mxu0
      %v1806 = vadd.f32 0.0, %v1805
      %v1807 = vpop.f32.mrb[0].mxu0
      %v1808 = vpop.f32.mrb[0].mxu0
      %v1809 = vadd.f32 0.0, %v1808
      %v1810 = vpop.f32.mrb[0].mxu0
      %1811 = vmatprep.mubr.bf16.mxu0 0
      %1812 = vmatmul.mubr.bf16.gmra.mrb[0].mxu0 %v1673
      %v1813 = vpop.f32.mrb[0].mxu0
      %v1814 = vadd.f32 0.0, %v1813
      %v1815 = vpop.f32.mrb[0].mxu0
      %v1816 = vpop.f32.mrb[0].mxu0
      %v1817 = vadd.f32 0.0, %v1816
      %v1818 = vpop.f32.mrb[0].mxu0
      %1819 = vmatprep.mubr.bf16.mxu0 0
      %1820 = vmatmul.mubr.bf16.gmra.mrb[0].mxu0 %v1676
      %v1821 = vpop.f32.mrb[0].mxu0
      %v1822 = vadd.f32 0.0, %v1821
      %v1823 = vpop.f32.mrb[0].mxu0
      %v1824 = vpop.f32.mrb[0].mxu0
      %v1825 = vadd.f32 0.0, %v1824
      %v1826 = vpop.f32.mrb[0].mxu0
      %1827 = vmatprep.mubr.bf16.mxu0 0
      %1828 = vmatmul.mubr.bf16.gmra.mrb[0].mxu0 %v1679
      %v1829 = vpop.f32.mrb[0].mxu0
      %v1830 = vadd.f32 0.0, %v1829
      %v1831 = vpop.f32.mrb[0].mxu0
      %v1832 = vpop.f32.mrb[0].mxu0
      %v1833 = vadd.f32 0.0, %v1832
      %v1834 = vpop.f32.mrb[0].mxu0
      %1835 = vmatprep.mubr.bf16.mxu0 0
      %1836 = vmatmul.mubr.bf16.gmra.mrb[0].mxu0 %v1682
      %v1837 = vpop.f32.mrb[0].mxu0
      %v1838 = vadd.f32 0.0, %v1837
      %v1839 = vpop.f32.mrb[0].mxu0
      %v1840 = vpop.f32.mrb[0].mxu0
      %v1841 = vadd.f32 0.0, %v1840
      %v1842 = vpop.f32.mrb[0].mxu0
      %1843 = vmatprep.mubr.bf16.mxu0 0
      %1844 = vmatmul.mubr.bf16.gmra.mrb[0].mxu0 %v1685
      %v1845 = vpop.f32.mrb[0].mxu0
      %v1846 = vadd.f32 0.0, %v1845
      %v1847 = vpop.f32.mrb[0].mxu0
      %v1848 = vpop.f32.mrb[0].mxu0
      %v1849 = vadd.f32 0.0, %v1848
      %v1850 = vpop.f32.mrb[0].mxu0
      %1851 = vdwg.mxu0
      %1852 = vst.msk [vmem:[%s231] sm:$0xff] %vm741, %v1726
      %1853 = vst.msk [vmem:[%s231 + $0x8] sm:$0xff] %vm741, %v1729
      %1854 = vst.msk [vmem:[%s231 + $0x10] sm:$0xff] %vm741, %v1734
      %1855 = vst.msk [vmem:[%s231 + $0x18] sm:$0xff] %vm741, %v1737
      %1856 = vst.msk [vmem:[%s231 + $0x20] sm:$0xff] %vm741, %v1742
      %1857 = vst.msk [vmem:[%s231 + $0x28] sm:$0xff] %vm741, %v1745
      %1858 = vst.msk [vmem:[%s231 + $0x30] sm:$0xff] %vm741, %v1750
      %1859 = vst.msk [vmem:[%s231 + $0x38] sm:$0xff] %vm741, %v1753
      %1860 = vst.msk [vmem:[%s231 + $0x40] sm:$0xff] %vm741, %v1758
      %1861 = vst.msk [vmem:[%s231 + $0x48] sm:$0xff] %vm741, %v1761
      %1862 = vst.msk [vmem:[%s231 + $0x50] sm:$0xff] %vm741, %v1766
      %1863 = vst.msk [vmem:[%s231 + $0x58] sm:$0xff] %vm741, %v1769
      %1864 = vst.msk [vmem:[%s231 + $0x60] sm:$0xff] %vm741, %v1774
      %1865 = vst.msk [vmem:[%s231 + $0x68] sm:$0xff] %vm741, %v1777
      %1866 = vst.msk [vmem:[%s231 + $0x70] sm:$0xff] %vm741, %v1782
      %1867 = vst.msk [vmem:[%s231 + $0x78] sm:$0xff] %vm741, %v1785
      %1868 = vst.msk [vmem:[%s231 + $0x80] sm:$0xff] %vm741, %v1790
      %1869 = vst.msk [vmem:[%s231 + $0x88] sm:$0xff] %vm741, %v1793
      %1870 = vst.msk [vmem:[%s231 + $0x90] sm:$0xff] %vm741, %v1798
      %1871 = vst.msk [vmem:[%s231 + $0x98] sm:$0xff] %vm741, %v1801
      %1872 = vst.msk [vmem:[%s231 + $0xa0] sm:$0xff] %vm741, %v1806
      %1873 = vst.msk [vmem:[%s231 + $0xa8] sm:$0xff] %vm741, %v1809
      %1874 = vst.msk [vmem:[%s231 + $0xb0] sm:$0xff] %vm741, %v1814
      %1875 = vst.msk [vmem:[%s231 + $0xb8] sm:$0xff] %vm741, %v1817
      %1876 = vst.msk [vmem:[%s231 + $0xc0] sm:$0xff] %vm741, %v1822
      %1877 = vst.msk [vmem:[%s231 + $0xc8] sm:$0xff] %vm741, %v1825
      %1878 = vst.msk [vmem:[%s231 + $0xd0] sm:$0xff] %vm741, %v1830
      %1879 = vst.msk [vmem:[%s231 + $0xd8] sm:$0xff] %vm741, %v1833
      %1880 = vst.msk [vmem:[%s231 + $0xe0] sm:$0xff] %vm741, %v1838
      %1881 = vst.msk [vmem:[%s231 + $0xe8] sm:$0xff] %vm741, %v1841
      %1882 = vst.msk [vmem:[%s231 + $0xf0] sm:$0xff] %vm741, %v1846
      %1883 = vst.msk [vmem:[%s231 + $0xf8] sm:$0xff] %vm741, %v1849
      %v1884 = vsel %vm741, %v1726, 0.0
      %v1885 = vsel %vm741, %v1729, 0.0
      %v1886 = vadd.f32 %v1884, %v1885
      %v1887 = vsel %vm741, %v1734, 0.0
      %v1888 = vadd.f32 %v1886, %v1887
      %v1889 = vsel %vm741, %v1737, 0.0
      %v1890 = vadd.f32 %v1888, %v1889
      %v1891 = vsel %vm741, %v1742, 0.0
      %v1892 = vadd.f32 %v1890, %v1891
      %v1893 = vsel %vm741, %v1745, 0.0
      %v1894 = vadd.f32 %v1892, %v1893
      %v1895 = vsel %vm741, %v1750, 0.0
      %v1896 = vadd.f32 %v1894, %v1895
      %v1897 = vsel %vm741, %v1753, 0.0
      %v1898 = vadd.f32 %v1896, %v1897
      %v1899 = vsel %vm741, %v1758, 0.0
      %v1900 = vadd.f32 %v1898, %v1899
      %v1901 = vsel %vm741, %v1761, 0.0
      %v1902 = vadd.f32 %v1900, %v1901
      %v1903 = vsel %vm741, %v1766, 0.0
      %v1904 = vadd.f32 %v1902, %v1903
      %v1905 = vsel %vm741, %v1769, 0.0
      %v1906 = vadd.f32 %v1904, %v1905
      %v1907 = vsel %vm741, %v1774, 0.0
      %v1908 = vadd.f32 %v1906, %v1907
      %v1909 = vsel %vm741, %v1777, 0.0
      %v1910 = vadd.f32 %v1908, %v1909
      %v1911 = vsel %vm741, %v1782, 0.0
      %v1912 = vadd.f32 %v1910, %v1911
      %v1913 = vsel %vm741, %v1785, 0.0
      %v1914 = vadd.f32 %v1912, %v1913
      %v1915 = vsel %vm741, %v1790, 0.0
      %v1916 = vadd.f32 %v1914, %v1915
      %v1917 = vsel %vm741, %v1793, 0.0
      %v1918 = vadd.f32 %v1916, %v1917
      %v1919 = vsel %vm741, %v1798, 0.0
      %v1920 = vadd.f32 %v1918, %v1919
      %v1921 = vsel %vm741, %v1801, 0.0
      %v1922 = vadd.f32 %v1920, %v1921
      %v1923 = vsel %vm741, %v1806, 0.0
      %v1924 = vadd.f32 %v1922, %v1923
      %v1925 = vsel %vm741, %v1809, 0.0
      %v1926 = vadd.f32 %v1924, %v1925
      %v1927 = vsel %vm741, %v1814, 0.0
      %v1928 = vadd.f32 %v1926, %v1927
      %v1929 = vsel %vm741, %v1817, 0.0
      %v1930 = vadd.f32 %v1928, %v1929
      %v1931 = vsel %vm741, %v1822, 0.0
      %v1932 = vadd.f32 %v1930, %v1931
      %v1933 = vsel %vm741, %v1825, 0.0
      %v1934 = vadd.f32 %v1932, %v1933
      %v1935 = vsel %vm741, %v1830, 0.0
      %v1936 = vadd.f32 %v1934, %v1935
      %v1937 = vsel %vm741, %v1833, 0.0
      %v1938 = vadd.f32 %v1936, %v1937
      %v1939 = vsel %vm741, %v1838, 0.0
      %v1940 = vadd.f32 %v1938, %v1939
      %v1941 = vsel %vm741, %v1841, 0.0
      %v1942 = vadd.f32 %v1940, %v1941
      %v1943 = vsel %vm741, %v1846, 0.0
      %v1944 = vadd.f32 %v1942, %v1943
      %v1945 = vsel %vm741, %v1849, 0.0
      %v1946 = vadd.f32 %v1944, %v1945
      %v1947 = vrot.slane %v1946, 4
      %v1948 = vadd.f32 %v1946, %v1947
      %v1949 = vrot.slane %v1948, 2
      %v1950 = vadd.f32 %v1948, %v1949
      %v1951 = vrot.slane %v1950, 1
      %v1952 = vadd.f32 %v1950, %v1951
      %v1953 = vmul.f32 %v1952, 0.00390625
      %v1954 = vsub.f32 %v1726, %v1953
      %v1955 = vsub.f32 %v1729, %v1953
      %v1956 = vsub.f32 %v1734, %v1953
      %v1957 = vsub.f32 %v1737, %v1953
      %v1958 = vsub.f32 %v1742, %v1953
      %v1959 = vsub.f32 %v1745, %v1953
      %v1960 = vsub.f32 %v1750, %v1953
      %v1961 = vsub.f32 %v1753, %v1953
      %v1962 = vsub.f32 %v1758, %v1953
      %v1963 = vsub.f32 %v1761, %v1953
      %v1964 = vsub.f32 %v1766, %v1953
      %v1965 = vsub.f32 %v1769, %v1953
      %v1966 = vsub.f32 %v1774, %v1953
      %v1967 = vsub.f32 %v1777, %v1953
      %v1968 = vsub.f32 %v1782, %v1953
      %v1969 = vsub.f32 %v1785, %v1953
      %v1970 = vsub.f32 %v1790, %v1953
      %v1971 = vsub.f32 %v1793, %v1953
      %v1972 = vsub.f32 %v1798, %v1953
      %v1973 = vsub.f32 %v1801, %v1953
      %v1974 = vsub.f32 %v1806, %v1953
      %v1975 = vsub.f32 %v1809, %v1953
      %v1976 = vsub.f32 %v1814, %v1953
      %v1977 = vsub.f32 %v1817, %v1953
      %v1978 = vsub.f32 %v1822, %v1953
      %v1979 = vsub.f32 %v1825, %v1953
      %v1980 = vsub.f32 %v1830, %v1953
      %v1981 = vsub.f32 %v1833, %v1953
      %v1982 = vsub.f32 %v1838, %v1953
      %v1983 = vsub.f32 %v1841, %v1953
      %v1984 = vsub.f32 %v1846, %v1953
      %v1985 = vsub.f32 %v1849, %v1953
      %vm1986 = vcmask 57344
      %1987 = vst.msk [vmem:[%s235] sm:$0x1] %vm1986, %v1953
      %v1988 = vmul.f32 %v1954, %v1954
      %v1989 = vmul.f32 %v1955, %v1955
      %v1990 = vmul.f32 %v1956, %v1956
      %v1991 = vmul.f32 %v1957, %v1957
      %v1992 = vmul.f32 %v1958, %v1958
      %v1993 = vmul.f32 %v1959, %v1959
      %v1994 = vmul.f32 %v1960, %v1960
      %v1995 = vmul.f32 %v1961, %v1961
      %v1996 = vmul.f32 %v1962, %v1962
      %v1997 = vmul.f32 %v1963, %v1963
      %v1998 = vmul.f32 %v1964, %v1964
      %v1999 = vmul.f32 %v1965, %v1965
      %v2000 = vmul.f32 %v1966, %v1966
      %v2001 = vmul.f32 %v1967, %v1967
      %v2002 = vmul.f32 %v1968, %v1968
      %v2003 = vmul.f32 %v1969, %v1969
      %v2004 = vmul.f32 %v1970, %v1970
      %v2005 = vmul.f32 %v1971, %v1971
      %v2006 = vmul.f32 %v1972, %v1972
      %v2007 = vmul.f32 %v1973, %v1973
      %v2008 = vmul.f32 %v1974, %v1974
      %v2009 = vmul.f32 %v1975, %v1975
      %v2010 = vmul.f32 %v1976, %v1976
      %v2011 = vmul.f32 %v1977, %v1977
      %v2012 = vmul.f32 %v1978, %v1978
      %v2013 = vmul.f32 %v1979, %v1979
      %v2014 = vmul.f32 %v1980, %v1980
      %v2015 = vmul.f32 %v1981, %v1981
      %v2016 = vmul.f32 %v1982, %v1982
      %v2017 = vmul.f32 %v1983, %v1983
      %v2018 = vmul.f32 %v1984, %v1984
      %v2019 = vmul.f32 %v1985, %v1985
      %v2020 = vsel %vm741, %v1988, 0.0
      %v2021 = vsel %vm741, %v1989, 0.0
      %v2022 = vadd.f32 %v2020, %v2021
      %v2023 = vsel %vm741, %v1990, 0.0
      %v2024 = vadd.f32 %v2022, %v2023
      %v2025 = vsel %vm741, %v1991, 0.0
      %v2026 = vadd.f32 %v2024, %v2025
      %v2027 = vsel %vm741, %v1992, 0.0
      %v2028 = vadd.f32 %v2026, %v2027
      %v2029 = vsel %vm741, %v1993, 0.0
      %v2030 = vadd.f32 %v2028, %v2029
      %v2031 = vsel %vm741, %v1994, 0.0
      %v2032 = vadd.f32 %v2030, %v2031
      %v2033 = vsel %vm741, %v1995, 0.0
      %v2034 = vadd.f32 %v2032, %v2033
      %v2035 = vsel %vm741, %v1996, 0.0
      %v2036 = vadd.f32 %v2034, %v2035
      %v2037 = vsel %vm741, %v1997, 0.0
      %v2038 = vadd.f32 %v2036, %v2037
      %v2039 = vsel %vm741, %v1998, 0.0
      %v2040 = vadd.f32 %v2038, %v2039
      %v2041 = vsel %vm741, %v1999, 0.0
      %v2042 = vadd.f32 %v2040, %v2041
      %v2043 = vsel %vm741, %v2000, 0.0
      %v2044 = vadd.f32 %v2042, %v2043
      %v2045 = vsel %vm741, %v2001, 0.0
      %v2046 = vadd.f32 %v2044, %v2045
      %v2047 = vsel %vm741, %v2002, 0.0
      %v2048 = vadd.f32 %v2046, %v2047
      %v2049 = vsel %vm741, %v2003, 0.0
      %v2050 = vadd.f32 %v2048, %v2049
      %v2051 = vsel %vm741, %v2004, 0.0
      %v2052 = vadd.f32 %v2050, %v2051
      %v2053 = vsel %vm741, %v2005, 0.0
      %v2054 = vadd.f32 %v2052, %v2053
      %v2055 = vsel %vm741, %v2006, 0.0
      %v2056 = vadd.f32 %v2054, %v2055
      %v2057 = vsel %vm741, %v2007, 0.0
      %v2058 = vadd.f32 %v2056, %v2057
      %v2059 = vsel %vm741, %v2008, 0.0
      %v2060 = vadd.f32 %v2058, %v2059
      %v2061 = vsel %vm741, %v2009, 0.0
      %v2062 = vadd.f32 %v2060, %v2061
      %v2063 = vsel %vm741, %v2010, 0.0
      %v2064 = vadd.f32 %v2062, %v2063
      %v2065 = vsel %vm741, %v2011, 0.0
      %v2066 = vadd.f32 %v2064, %v2065
      %v2067 = vsel %vm741, %v2012, 0.0
      %v2068 = vadd.f32 %v2066, %v2067
      %v2069 = vsel %vm741, %v2013, 0.0
      %v2070 = vadd.f32 %v2068, %v2069
      %v2071 = vsel %vm741, %v2014, 0.0
      %v2072 = vadd.f32 %v2070, %v2071
      %v2073 = vsel %vm741, %v2015, 0.0
      %v2074 = vadd.f32 %v2072, %v2073
      %v2075 = vsel %vm741, %v2016, 0.0
      %v2076 = vadd.f32 %v2074, %v2075
      %v2077 = vsel %vm741, %v2017, 0.0
      %v2078 = vadd.f32 %v2076, %v2077
      %v2079 = vsel %vm741, %v2018, 0.0
      %v2080 = vadd.f32 %v2078, %v2079
      %v2081 = vsel %vm741, %v2019, 0.0
      %v2082 = vadd.f32 %v2080, %v2081
      %v2083 = vrot.slane %v2082, 4
      %v2084 = vadd.f32 %v2082, %v2083
      %v2085 = vrot.slane %v2084, 2
      %v2086 = vadd.f32 %v2084, %v2085
      %v2087 = vrot.slane %v2086, 1
      %v2088 = vadd.f32 %v2086, %v2087
      %2089 = vst.msk [vmem:[%s235 + $0x1] sm:$0x1] %vm1986, %v2088
      %p2090 = scmp.lt.s32.totalorder %s17, 1
      %s2091 = scalar_select %p2090, %s17, 1
      %s2092 = smul.addr %s2091, 32
      %s2093 = smul.addr %s2092, 8
      %s2094 = scalar_lea.vmem %s4, %s2093
      %p2095 = scmp.lt.s32.totalorder %s17, 1
      %s2096 = scalar_select %p2095, %s17, 1
      %s2097 = smul.addr %s2096, 2
      %s2098 = scalar_lea.vmem %s5, %s2097
      // Predicated region
      $region37: #{residual_conv3x3_block.4} parent=35 // pred_check
        %p2099 = pneg %p124
      $region38: #{residual_conv3x3_block.4} parent=35 // pred_check_branch
        %2101 = sbr.rel (%p2099) target = $region40
      $region39: #{residual_conv3x3_block.4} parent=35 // pred_region
        _
      $region40: #{residual_conv3x3_block.4} parent=35 // pred_fallthru
        _
      // Predicated region
      $region41: #{residual_conv3x3_block.4} parent=35 // pred_check
        %p2102 = pneg %p150
      $region42: #{residual_conv3x3_block.4} parent=35 // pred_check_branch
        %2104 = sbr.rel (%p2102) target = $region44
      $region43: #{residual_conv3x3_block.4} parent=35 // pred_region
        _
      $region44: #{residual_conv3x3_block.4} parent=35 // pred_fallthru
        _
    $region36: #{residual_conv3x3_block.4} parent=5 // pred_fallthru
      _
    %p2105 = scmp.le.s32.totalorder 2, %s12
    // Predicated region
    $region45: #{residual_conv3x3_block.4} parent=5 // pred_check
      %p2106 = pneg %p2105
    $region46: #{residual_conv3x3_block.4} parent=5 // pred_check_branch
      %2108 = sbr.rel (%p2106) target = $region48
    $region47: #{residual_conv3x3_block.4} parent=5 // pred_region
      %s2109 = ssub.s32 %s12, 2
      // Predicated region
      $region49: #{residual_conv3x3_block.4} parent=47 // pred_check
        %p2110 = pneg %p130
      $region50: #{residual_conv3x3_block.4} parent=47 // pred_check_branch
        %2112 = sbr.rel (%p2110) target = $region52
      $region51: #{residual_conv3x3_block.4} parent=47 // pred_region
        %p2113 = scmp.lt.s32.totalorder %s18, 1
        %s2114 = scalar_select %p2113, %s18, 1
        %s2115 = smul.addr %s2114, 32
        %s2116 = smul.addr %s2115, 8
        %s2117 = scalar_lea.vmem %s4, %s2116
      $region52: #{residual_conv3x3_block.4} parent=47 // pred_fallthru
        _
      // Predicated region
      $region53: #{residual_conv3x3_block.4} parent=47 // pred_check
        %p2118 = pneg %p156
      $region54: #{residual_conv3x3_block.4} parent=47 // pred_check_branch
        %2120 = sbr.rel (%p2118) target = $region56
      $region55: #{residual_conv3x3_block.4} parent=47 // pred_region
        %p2121 = scmp.lt.s32.totalorder %s18, 1
        %s2122 = scalar_select %p2121, %s18, 1
        %s2123 = smul.addr %s2122, 2
        %s2124 = scalar_lea.vmem %s5, %s2123
      $region56: #{residual_conv3x3_block.4} parent=47 // pred_fallthru
        _
    $region48: #{residual_conv3x3_block.4} parent=5 // pred_fallthru
      _
  $region6: #{residual_conv3x3_block.4} parent=0 // loop_footer
    %s16 = sadd.s32 1, %s12
  $region7: #{residual_conv3x3_block.4} parent=0 // loop_footer_branch
    %11 = sbr.rel target = $region3
  $region8: #{residual_conv3x3_block.4} parent=0 // loop_exit
    _

// kernel: residual_conv3x3_block.3
$region0: #{residual_conv3x3_block.3}
  #allocation0 [shape = 'u32[]', space=smem, size = 0x4, offset = 0x4, fixed_abs, tag = 'smem constant byte address 0x4 - core index']
  #allocation1 [shape = 'u32[144,128]{1,0:T(1,128)}', space=vmem, size = 0x12000, scoped, tag = 'internal scratch']
  #allocation2 [shape = 'bf16[256,72]{1,0:T(16,128)(2,1)}', space=vmem, size = 0x10000, scoped, tag = 'scratch operand']
  %s0 = inlined_call_operand.vmem [shape: bf16[2,18,18,8], index: 0, kind: input, shape index: {}]
  %s1 = inlined_call_operand.vmem [shape: bf16[72,8], index: 1, kind: input, shape index: {}]
  %s2 = inlined_call_operand.vmem [shape: bf16[2,16,16,8], index: 2, kind: output, shape index: {0}]
  %s3 = inlined_call_operand.vmem [shape: f32[2,2,8], index: 3, kind: output, shape index: {1}]
  %4 = xla_tuple %s2, %s3
  %s5 = sld [smem:[#allocation0]]
  $region49: #{residual_conv3x3_block.3} parent=0
    _
  %s7 = ssub.s32 1, %s5
  %s8 = scalar_select 0, %s7, %s5
  loop: start=0, step=1, limit=4
  $region2: #{residual_conv3x3_block.3} parent=0 // loop_pre_header
    _
  $region3: #{residual_conv3x3_block.3} parent=0 // loop_header
    %s10 = sphi 0, %s14
    %p11 = scmp.ge.s32.totalorder %s10, 4
    %s20 = sphi 0, %s22
    %s23 = sphi 0, %s20
    %s24 = sphi 0, %s23
    %s40 = sphi 0, %s24
    %s44 = sphi 0, %s44
    %s46 = sphi 0, %s44
    %s47 = sphi 0, %s46
    %s61 = sphi 0, %s47
    %s67 = sphi 0, %s69
    %s70 = sphi 0, %s67
    %s71 = sphi 0, %s70
    %s87 = sphi 0, %s71
    %s93 = sphi 0, %s95
    %s96 = sphi 0, %s93
    %s97 = sphi 0, %s96
    %s113 = sphi 0, %s97
  $region4: #{residual_conv3x3_block.3} parent=0 // loop_header_branch
    %13 = sbr.rel (%p11) target = $region8
  $region5: #{residual_conv3x3_block.3} parent=0 // loop_body
    %s15 = ssub.s32 %s10, 1
    %s16 = ssub.s32 %s10, 2
    %s17 = sadd.s32 %s10, 1
    %s18 = ssub.s32 %s10, %s17
    %p19 = scmp.eq.s32.totalorder %s18, 0
    %s21 = sadd.s32 %s20, 1
    %s22 = scalar_select %p19, %s20, %s21
    %p25 = pneg %p19
    %p26 = scmp.eq.s32.totalorder %s10, 1
    %p27 = por %p25, %p26
    %p28 = scmp.ne.s32.totalorder %s20, %s23
    %p29 = scmp.eq.s32.totalorder %s10, 0
    %p30 = por %p28, %p29
    %p31 = scmp.ne.s32.totalorder %s20, %s23
    %p32 = scmp.eq.s32.totalorder %s15, 1
    %p33 = por %p31, %p32
    %p34 = scmp.ne.s32.totalorder %s23, %s24
    %p35 = scmp.eq.s32.totalorder %s15, 0
    %p36 = por %p34, %p35
    %p37 = scmp.ne.s32.totalorder %s23, %s24
    %p38 = scmp.eq.s32.totalorder %s16, 1
    %p39 = por %p37, %p38
    %p41 = scmp.ne.s32.totalorder %s24, %s40
    %p42 = scmp.eq.s32.totalorder %s16, 0
    %p43 = por %p41, %p42
    %s45 = sadd.s32 %s44, 1
    %p48 = scmp.eq.s32.totalorder %s10, 1
    %p49 = scmp.ne.s32.totalorder %s44, %s46
    %p50 = scmp.eq.s32.totalorder %s10, 0
    %p51 = por %p49, %p50
    %p52 = scmp.ne.s32.totalorder %s44, %s46
    %p53 = scmp.eq.s32.totalorder %s15, 1
    %p54 = por %p52, %p53
    %p55 = scmp.ne.s32.totalorder %s46, %s47
    %p56 = scmp.eq.s32.totalorder %s15, 0
    %p57 = por %p55, %p56
    %p58 = scmp.ne.s32.totalorder %s46, %s47
    %p59 = scmp.eq.s32.totalorder %s16, 1
    %p60 = por %p58, %p59
    %p62 = scmp.ne.s32.totalorder %s47, %s61
    %p63 = scmp.eq.s32.totalorder %s16, 0
    %p64 = por %p62, %p63
    %s65 = ssub.s32 %s10, %s17
    %p66 = scmp.eq.s32.totalorder %s65, 0
    %s68 = sadd.s32 %s67, 1
    %s69 = scalar_select %p66, %s67, %s68
    %p72 = pneg %p66
    %p73 = scmp.eq.s32.totalorder %s10, 1
    %p74 = por %p72, %p73
    %p75 = scmp.ne.s32.totalorder %s67, %s70
    %p76 = scmp.eq.s32.totalorder %s10, 0
    %p77 = por %p75, %p76
    %p78 = scmp.ne.s32.totalorder %s67, %s70
    %p79 = scmp.eq.s32.totalorder %s15, 1
    %p80 = por %p78, %p79
    %p81 = scmp.ne.s32.totalorder %s70, %s71
    %p82 = scmp.eq.s32.totalorder %s15, 0
    %p83 = por %p81, %p82
    %p84 = scmp.ne.s32.totalorder %s70, %s71
    %p85 = scmp.eq.s32.totalorder %s16, 1
    %p86 = por %p84, %p85
    %p88 = scmp.ne.s32.totalorder %s71, %s87
    %p89 = scmp.eq.s32.totalorder %s16, 0
    %p90 = por %p88, %p89
    %s91 = ssub.s32 %s10, %s17
    %p92 = scmp.eq.s32.totalorder %s91, 0
    %s94 = sadd.s32 %s93, 1
    %s95 = scalar_select %p92, %s93, %s94
    %p98 = pneg %p92
    %p99 = scmp.eq.s32.totalorder %s10, 1
    %p100 = por %p98, %p99
    %p101 = scmp.ne.s32.totalorder %s93, %s96
    %p102 = scmp.eq.s32.totalorder %s10, 0
    %p103 = por %p101, %p102
    %p104 = scmp.ne.s32.totalorder %s93, %s96
    %p105 = scmp.eq.s32.totalorder %s15, 1
    %p106 = por %p104, %p105
    %p107 = scmp.ne.s32.totalorder %s96, %s97
    %p108 = scmp.eq.s32.totalorder %s15, 0
    %p109 = por %p107, %p108
    %p110 = scmp.ne.s32.totalorder %s96, %s97
    %p111 = scmp.eq.s32.totalorder %s16, 1
    %p112 = por %p110, %p111
    %p114 = scmp.ne.s32.totalorder %s97, %s113
    %p115 = scmp.eq.s32.totalorder %s16, 0
    %p116 = por %p114, %p115
    %p117 = scmp.le.s32.totalorder 1, %s10
    %p118 = scmp.lt.s32.totalorder %s10, 3
    %p119 = pnand %p117, %p118
    %p120 = pneg %p119
    // Predicated region
    $region9: #{residual_conv3x3_block.3} parent=5 // pred_check
      _
    $region10: #{residual_conv3x3_block.3} parent=5 // pred_check_branch
      %122 = sbr.rel (%p119) target = $region12
    $region11: #{residual_conv3x3_block.3} parent=5 // pred_region
      %s123 = ssub.s32 %s10, 1
      // Predicated region
      $region13: #{residual_conv3x3_block.3} parent=11 // pred_check
        %p124 = pneg %p57
      $region14: #{residual_conv3x3_block.3} parent=11 // pred_check_branch
        %126 = sbr.rel (%p124) target = $region16
      $region15: #{residual_conv3x3_block.3} parent=11 // pred_region
        _
      $region16: #{residual_conv3x3_block.3} parent=11 // pred_fallthru
        _
    $region12: #{residual_conv3x3_block.3} parent=5 // pred_fallthru
      _
    %p127 = scmp.lt.s32.totalorder %s10, 2
    // Predicated region
    $region17: #{residual_conv3x3_block.3} parent=5 // pred_check
      %p128 = pneg %p127
    $region18: #{residual_conv3x3_block.3} parent=5 // pred_check_branch
      %130 = sbr.rel (%p128) target = $region20
    $region19: #{residual_conv3x3_block.3} parent=5 // pred_region
      // Predicated region
      $region21: #{residual_conv3x3_block.3} parent=19 // pred_check
        %p131 = pneg %p30
      $region22: #{residual_conv3x3_block.3} parent=19 // pred_check_branch
        %133 = sbr.rel (%p131) target = $region24
      $region23: #{residual_conv3x3_block.3} parent=19 // pred_region
        %p134 = scmp.lt.s32.totalorder %s10, 1
        %s135 = scalar_select %p134, %s10, 1
        %s136 = smul.addr %s135, 54
        %s137 = smul.addr %s136, 4
        %s138 = scalar_lea.vmem %s0, %s137
      $region24: #{residual_conv3x3_block.3} parent=19 // pred_fallthru
        _
    $region20: #{residual_conv3x3_block.3} parent=5 // pred_fallthru
      _
    %p139 = scmp.le.s32.totalorder 1, %s10
    %p140 = scmp.lt.s32.totalorder %s10, 3
    %p141 = pnand %p139, %p140
    %p142 = pneg %p141
    // Predicated region
    $region25: #{residual_conv3x3_block.3} parent=5 // pred_check
      _
    $region26: #{residual_conv3x3_block.3} parent=5 // pred_check_branch
      %144 = sbr.rel (%p141) target = $region28
    $region27: #{residual_conv3x3_block.3} parent=5 // pred_region
      %s145 = ssub.s32 %s10, 1
      %p146 = scmp.lt.s32.totalorder %s15, 1
      %s147 = scalar_select %p146, %s15, 1
      %s148 = smul.addr %s147, 54
      %s149 = smul.addr %s148, 4
      %s150 = scalar_lea.vmem %s0, %s149
      %p151 = pneg %p36
      %p152 = pneg %p33
      %p153 = pneg %p57
      %p154 = pneg %p54
      %p155 = pneg %p83
      %p156 = pneg %p80
      %p157 = scmp.lt.s32.totalorder %s15, 1
      %s158 = scalar_select %p157, %s15, 1
      %s159 = smul.addr %s158, 32
      %s160 = smul.addr %s159, 4
      %s161 = scalar_lea.vmem %s2, %s160
      %p162 = pneg %p109
      %p163 = pneg %p106
      %p164 = scmp.lt.s32.totalorder %s15, 1
      %s165 = scalar_select %p164, %s15, 1
      %s166 = smul.addr %s165, 2
      %s167 = scalar_lea.vmem %s3, %s166
      %p168 = scmp.lt.s32.totalorder %s15, 1
      %s169 = scalar_select %p168, %s15, 1
      %s170 = smul.addr %s169, 54
      %s171 = smul.addr %s170, 4
      %s172 = scalar_lea.vmem %s0, %s171
      %p173 = scmp.lt.s32.totalorder %s15, 1
      %s174 = scalar_select %p173, %s15, 1
      %s175 = smul.addr %s174, 32
      %s176 = smul.addr %s175, 4
      %s177 = scalar_lea.vmem %s2, %s176
      %p178 = scmp.lt.s32.totalorder %s15, 1
      %s179 = scalar_select %p178, %s15, 1
      %s180 = smul.addr %s179, 2
      %s181 = scalar_lea.vmem %s3, %s180
      %v183 = vld [vmem:[%s172] sm:$0xf]
      %v184 = vld [vmem:[%s172 + $0x4] sm:$0xf]
      %v185 = vld [vmem:[%s172 + $0x8] sm:$0x1]
      %v186 = vld [vmem:[%s172 + $0xc] sm:$0xf]
      %v187 = vld [vmem:[%s172 + $0x10] sm:$0xf]
      %v188 = vld [vmem:[%s172 + $0x14] sm:$0x1]
      %v189 = vld [vmem:[%s172 + $0x18] sm:$0xf]
      %v190 = vld [vmem:[%s172 + $0x1c] sm:$0xf]
      %v191 = vld [vmem:[%s172 + $0x20] sm:$0x1]
      %v192 = vld [vmem:[%s172 + $0x24] sm:$0xf]
      %v193 = vld [vmem:[%s172 + $0x28] sm:$0xf]
      %v194 = vld [vmem:[%s172 + $0x2c] sm:$0x1]
      %v195 = vld [vmem:[%s172 + $0x30] sm:$0xf]
      %v196 = vld [vmem:[%s172 + $0x34] sm:$0xf]
      %v197 = vld [vmem:[%s172 + $0x38] sm:$0x1]
      %v198 = vld [vmem:[%s172 + $0x3c] sm:$0xf]
      %v199 = vld [vmem:[%s172 + $0x40] sm:$0xf]
      %v200 = vld [vmem:[%s172 + $0x44] sm:$0x1]
      %v201 = vld [vmem:[%s172 + $0x48] sm:$0xf]
      %v202 = vld [vmem:[%s172 + $0x4c] sm:$0xf]
      %v203 = vld [vmem:[%s172 + $0x50] sm:$0x1]
      %v204 = vld [vmem:[%s172 + $0x54] sm:$0xf]
      %v205 = vld [vmem:[%s172 + $0x58] sm:$0xf]
      %v206 = vld [vmem:[%s172 + $0x5c] sm:$0x1]
      %v207 = vld [vmem:[%s172 + $0x60] sm:$0xf]
      %v208 = vld [vmem:[%s172 + $0x64] sm:$0xf]
      %v209 = vld [vmem:[%s172 + $0x68] sm:$0x1]
      %v210 = vld [vmem:[%s172 + $0x6c] sm:$0xf]
      %v211 = vld [vmem:[%s172 + $0x70] sm:$0xf]
      %v212 = vld [vmem:[%s172 + $0x74] sm:$0x1]
      %v213 = vld [vmem:[%s172 + $0x78] sm:$0xf]
      %v214 = vld [vmem:[%s172 + $0x7c] sm:$0xf]
      %v215 = vld [vmem:[%s172 + $0x80] sm:$0x1]
      %v216 = vld [vmem:[%s172 + $0x84] sm:$0xf]
      %v217 = vld [vmem:[%s172 + $0x88] sm:$0xf]
      %v218 = vld [vmem:[%s172 + $0x8c] sm:$0x1]
      %v219 = vld [vmem:[%s172 + $0x90] sm:$0xf]
      %v220 = vld [vmem:[%s172 + $0x94] sm:$0xf]
      %v221 = vld [vmem:[%s172 + $0x98] sm:$0x1]
      %v222 = vld [vmem:[%s172 + $0x9c] sm:$0xf]
      %v223 = vld [vmem:[%s172 + $0xa0] sm:$0xf]
      %v224 = vld [vmem:[%s172 + $0xa4] sm:$0x1]
      %v225 = vld [vmem:[%s172 + $0xa8] sm:$0xf]
      %v226 = vld [vmem:[%s172 + $0xac] sm:$0xf]
      %v227 = vld [vmem:[%s172 + $0xb0] sm:$0x1]
      %v228 = vld [vmem:[%s172 + $0xb4] sm:$0xf]
      %v229 = vld [vmem:[%s172 + $0xb8] sm:$0xf]
      %v230 = vld [vmem:[%s172 + $0xbc] sm:$0x1]
      %v231 = vld [vmem:[%s172 + $0xc0] sm:$0xf]
      %v232 = vld [vmem:[%s172 + $0xc4] sm:$0xf]
      %v233 = vld [vmem:[%s172 + $0xc8] sm:$0x1]
      %v234 = vld [vmem:[%s172 + $0xcc] sm:$0xf]
      %v235 = vld [vmem:[%s172 + $0xd0] sm:$0xf]
      %v236 = vld [vmem:[%s172 + $0xd4] sm:$0x1]
      %v269 = vunpack.c.l.b16 %v183
      %v270 = vunpack.c.l.b16 %v184
      %v271 = vunpack.c.l.b16 %v186
      %v272 = vunpack.c.l.b16 %v187
      %v273 = vunpack.c.l.b16 %v189
      %v274 = vunpack.c.l.b16 %v190
      %v275 = vunpack.c.l.b16 %v192
      %v276 = vunpack.c.l.b16 %v193
      %v277 = vunpack.c.l.b16 %v195
      %v278 = vunpack.c.l.b16 %v196
      %v279 = vunpack.c.l.b16 %v198
      %v280 = vunpack.c.l.b16 %v199
      %v281 = vunpack.c.l.b16 %v201
      %v282 = vunpack.c.l.b16 %v202
      %v283 = vunpack.c.l.b16 %v204
      %v284 = vunpack.c.l.b16 %v205
      %v285 = vunpack.c.l.b16 %v207
      %v286 = vunpack.c.l.b16 %v208
      %v287 = vunpack.c.l.b16 %v210
      %v288 = vunpack.c.l.b16 %v211
      %v289 = vunpack.c.l.b16 %v213
      %v290 = vunpack.c.l.b16 %v214
      %v291 = vunpack.c.l.b16 %v216
      %v292 = vunpack.c.l.b16 %v217
      %v293 = vunpack.c.l.b16 %v219
      %v294 = vunpack.c.l.b16 %v220
      %v295 = vunpack.c.l.b16 %v222
      %v296 = vunpack.c.l.b16 %v223
      %v297 = vunpack.c.l.b16 %v225
      %v298 = vunpack.c.l.b16 %v226
      %v299 = vunpack.c.l.b16 %v228
      %v300 = vunpack.c.l.b16 %v229
      %v301 = vpack.c.b16 %v270, %v269
      %v302 = vpack.c.b16 %v272, %v271
      %v303 = vpack.c.b16 %v274, %v273
      %v304 = vpack.c.b16 %v276, %v275
      %v305 = vpack.c.b16 %v278, %v277
      %v306 = vpack.c.b16 %v280, %v279
      %v307 = vpack.c.b16 %v282, %v281
      %v308 = vpack.c.b16 %v284, %v283
      %v309 = vpack.c.b16 %v286, %v285
      %v310 = vpack.c.b16 %v288, %v287
      %v311 = vpack.c.b16 %v290, %v289
      %v312 = vpack.c.b16 %v292, %v291
      %v313 = vpack.c.b16 %v294, %v293
      %v314 = vpack.c.b16 %v296, %v295
      %v315 = vpack.c.b16 %v298, %v297
      %v316 = vpack.c.b16 %v300, %v299
      %vm333 = vcmask 64512
      %334 = vst.msk [vmem:[#allocation2] sm:$0xff] %vm333, %v301
      %335 = vst.msk [vmem:[#allocation2 + $0x8] sm:$0xff] %vm333, %v302
      %336 = vst.msk [vmem:[#allocation2 + $0x10] sm:$0xff] %vm333, %v303
      %337 = vst.msk [vmem:[#allocation2 + $0x18] sm:$0xff] %vm333, %v304
      %338 = vst.msk [vmem:[#allocation2 + $0x20] sm:$0xff] %vm333, %v305
      %339 = vst.msk [vmem:[#allocation2 + $0x28] sm:$0xff] %vm333, %v306
      %340 = vst.msk [vmem:[#allocation2 + $0x30] sm:$0xff] %vm333, %v307
      %341 = vst.msk [vmem:[#allocation2 + $0x38] sm:$0xff] %vm333, %v308
      %342 = vst.msk [vmem:[#allocation2 + $0x40] sm:$0xff] %vm333, %v309
      %343 = vst.msk [vmem:[#allocation2 + $0x48] sm:$0xff] %vm333, %v310
      %344 = vst.msk [vmem:[#allocation2 + $0x50] sm:$0xff] %vm333, %v311
      %345 = vst.msk [vmem:[#allocation2 + $0x58] sm:$0xff] %vm333, %v312
      %346 = vst.msk [vmem:[#allocation2 + $0x60] sm:$0xff] %vm333, %v313
      %347 = vst.msk [vmem:[#allocation2 + $0x68] sm:$0xff] %vm333, %v314
      %348 = vst.msk [vmem:[#allocation2 + $0x70] sm:$0xff] %vm333, %v315
      %349 = vst.msk [vmem:[#allocation2 + $0x78] sm:$0xff] %vm333, %v316
      %vm350 = vsmask.f32 3328
      %vm351 = vsmask.f32 7440
      %vm352 = vmor %vm350, %vm351
      %v354 = vshrl.u32 %v183, 16
      %v356 = vrot.slane %v354, 4
      %v357 = vshll.u32 %v183, 16
      %v359 = vrot.slane %v357, 5
      %v360 = vor.u32 %v356, %v359
      %v361 = vrot.slane %v360, 4
      %v363 = vshll.u32 %v184, 16
      %v365 = vrot.slane %v363, 5
      %v366 = vsel %vm352, %v361, %v365
      %v367 = vshrl.u32 %v184, 16
      %v369 = vrot.slane %v367, 4
      %v370 = vor.u32 %v369, %v365
      %v371 = vrot.slane %v370, 4
      %v373 = vshll.u32 %v185, 16
      %v375 = vrot.slane %v373, 5
      %v376 = vsel %vm352, %v371, %v375
      %v378 = vshrl.u32 %v186, 16
      %v380 = vrot.slane %v378, 4
      %v381 = vshll.u32 %v186, 16
      %v383 = vrot.slane %v381, 5
      %v384 = vor.u32 %v380, %v383
      %v385 = vrot.slane %v384, 4
      %v387 = vshll.u32 %v187, 16
      %v389 = vrot.slane %v387, 5
      %v390 = vsel %vm352, %v385, %v389
      %v391 = vshrl.u32 %v187, 16
      %v393 = vrot.slane %v391, 4
      %v394 = vor.u32 %v393, %v389
      %v395 = vrot.slane %v394, 4
      %v397 = vshll.u32 %v188, 16
      %v399 = vrot.slane %v397, 5
      %v400 = vsel %vm352, %v395, %v399
      %v402 = vshrl.u32 %v189, 16
      %v404 = vrot.slane %v402, 4
      %v405 = vshll.u32 %v189, 16
      %v407 = vrot.slane %v405, 5
      %v408 = vor.u32 %v404, %v407
      %v409 = vrot.slane %v408, 4
      %v411 = vshll.u32 %v190, 16
      %v413 = vrot.slane %v411, 5
      %v414 = vsel %vm352, %v409, %v413
      %v415 = vshrl.u32 %v190, 16
      %v417 = vrot.slane %v415, 4
      %v418 = vor.u32 %v417, %v413
      %v419 = vrot.slane %v418, 4
      %v421 = vshll.u32 %v191, 16
      %v423 = vrot.slane %v421, 5
      %v424 = vsel %vm352, %v419, %v423
      %v426 = vshrl.u32 %v192, 16
      %v428 = vrot.slane %v426, 4
      %v429 = vshll.u32 %v192, 16
      %v431 = vrot.slane %v429, 5
      %v432 = vor.u32 %v428, %v431
      %v433 = vrot.slane %v432, 4
      %v435 = vshll.u32 %v193, 16
      %v437 = vrot.slane %v435, 5
      %v438 = vsel %vm352, %v433, %v437
      %v439 = vshrl.u32 %v193, 16
      %v441 = vrot.slane %v439, 4
      %v442 = vor.u32 %v441, %v437
      %v443 = vrot.slane %v442, 4
      %v445 = vshll.u32 %v194, 16
      %v447 = vrot.slane %v445, 5
      %v448 = vsel %vm352, %v443, %v447
      %v450 = vshrl.u32 %v195, 16
      %v452 = vrot.slane %v450, 4
      %v453 = vshll.u32 %v195, 16
      %v455 = vrot.slane %v453, 5
      %v456 = vor.u32 %v452, %v455
      %v457 = vrot.slane %v456, 4
      %v459 = vshll.u32 %v196, 16
      %v461 = vrot.slane %v459, 5
      %v462 = vsel %vm352, %v457, %v461
      %v463 = vshrl.u32 %v196, 16
      %v465 = vrot.slane %v463, 4
      %v466 = vor.u32 %v465, %v461
      %v467 = vrot.slane %v466, 4
      %v469 = vshll.u32 %v197, 16
      %v471 = vrot.slane %v469, 5
      %v472 = vsel %vm352, %v467, %v471
      %v474 = vshrl.u32 %v198, 16
      %v476 = vrot.slane %v474, 4
      %v477 = vshll.u32 %v198, 16
      %v479 = vrot.slane %v477, 5
      %v480 = vor.u32 %v476, %v479
      %v481 = vrot.slane %v480, 4
      %v483 = vshll.u32 %v199, 16
      %v485 = vrot.slane %v483, 5
      %v486 = vsel %vm352, %v481, %v485
      %v487 = vshrl.u32 %v199, 16
      %v489 = vrot.slane %v487, 4
      %v490 = vor.u32 %v489, %v485
      %v491 = vrot.slane %v490, 4
      %v493 = vshll.u32 %v200, 16
      %v495 = vrot.slane %v493, 5
      %v496 = vsel %vm352, %v491, %v495
      %v498 = vshrl.u32 %v201, 16
      %v500 = vrot.slane %v498, 4
      %v501 = vshll.u32 %v201, 16
      %v503 = vrot.slane %v501, 5
      %v504 = vor.u32 %v500, %v503
      %v505 = vrot.slane %v504, 4
      %v507 = vshll.u32 %v202, 16
      %v509 = vrot.slane %v507, 5
      %v510 = vsel %vm352, %v505, %v509
      %v511 = vshrl.u32 %v202, 16
      %v513 = vrot.slane %v511, 4
      %v514 = vor.u32 %v513, %v509
      %v515 = vrot.slane %v514, 4
      %v517 = vshll.u32 %v203, 16
      %v519 = vrot.slane %v517, 5
      %v520 = vsel %vm352, %v515, %v519
      %v522 = vshrl.u32 %v204, 16
      %v524 = vrot.slane %v522, 4
      %v525 = vshll.u32 %v204, 16
      %v527 = vrot.slane %v525, 5
      %v528 = vor.u32 %v524, %v527
      %v529 = vrot.slane %v528, 4
      %v531 = vshll.u32 %v205, 16
      %v533 = vrot.slane %v531, 5
      %v534 = vsel %vm352, %v529, %v533
      %v535 = vshrl.u32 %v205, 16
      %v537 = vrot.slane %v535, 4
      %v538 = vor.u32 %v537, %v533
      %v539 = vrot.slane %v538, 4
      %v541 = vshll.u32 %v206, 16
      %v543 = vrot.slane %v541, 5
      %v544 = vsel %vm352, %v539, %v543
      %v546 = vshrl.u32 %v207, 16
      %v548 = vrot.slane %v546, 4
      %v549 = vshll.u32 %v207, 16
      %v551 = vrot.slane %v549, 5
      %v552 = vor.u32 %v548, %v551
      %v553 = vrot.slane %v552, 4
      %v555 = vshll.u32 %v208, 16
      %v557 = vrot.slane %v555, 5
      %v558 = vsel %vm352, %v553, %v557
      %v559 = vshrl.u32 %v208, 16
      %v561 = vrot.slane %v559, 4
      %v562 = vor.u32 %v561, %v557
      %v563 = vrot.slane %v562, 4
      %v565 = vshll.u32 %v209, 16
      %v567 = vrot.slane %v565, 5
      %v568 = vsel %vm352, %v563, %v567
      %v570 = vshrl.u32 %v210, 16
      %v572 = vrot.slane %v570, 4
      %v573 = vshll.u32 %v210, 16
      %v575 = vrot.slane %v573, 5
      %v576 = vor.u32 %v572, %v575
      %v577 = vrot.slane %v576, 4
      %v579 = vshll.u32 %v211, 16
      %v581 = vrot.slane %v579, 5
      %v582 = vsel %vm352, %v577, %v581
      %v583 = vshrl.u32 %v211, 16
      %v585 = vrot.slane %v583, 4
      %v586 = vor.u32 %v585, %v581
      %v587 = vrot.slane %v586, 4
      %v589 = vshll.u32 %v212, 16
      %v591 = vrot.slane %v589, 5
      %v592 = vsel %vm352, %v587, %v591
      %v594 = vshrl.u32 %v213, 16
      %v596 = vrot.slane %v594, 4
      %v597 = vshll.u32 %v213, 16
      %v599 = vrot.slane %v597, 5
      %v600 = vor.u32 %v596, %v599
      %v601 = vrot.slane %v600, 4
      %v603 = vshll.u32 %v214, 16
      %v605 = vrot.slane %v603, 5
      %v606 = vsel %vm352, %v601, %v605
      %v607 = vshrl.u32 %v214, 16
      %v609 = vrot.slane %v607, 4
      %v610 = vor.u32 %v609, %v605
      %v611 = vrot.slane %v610, 4
      %v613 = vshll.u32 %v215, 16
      %v615 = vrot.slane %v613, 5
      %v616 = vsel %vm352, %v611, %v615
      %v618 = vshrl.u32 %v216, 16
      %v620 = vrot.slane %v618, 4
      %v621 = vshll.u32 %v216, 16
      %v623 = vrot.slane %v621, 5
      %v624 = vor.u32 %v620, %v623
      %v625 = vrot.slane %v624, 4
      %v627 = vshll.u32 %v217, 16
      %v629 = vrot.slane %v627, 5
      %v630 = vsel %vm352, %v625, %v629
      %v631 = vshrl.u32 %v217, 16
      %v633 = vrot.slane %v631, 4
      %v634 = vor.u32 %v633, %v629
      %v635 = vrot.slane %v634, 4
      %v637 = vshll.u32 %v218, 16
      %v639 = vrot.slane %v637, 5
      %v640 = vsel %vm352, %v635, %v639
      %v642 = vshrl.u32 %v219, 16
      %v644 = vrot.slane %v642, 4
      %v645 = vshll.u32 %v219, 16
      %v647 = vrot.slane %v645, 5
      %v648 = vor.u32 %v644, %v647
      %v649 = vrot.slane %v648, 4
      %v651 = vshll.u32 %v220, 16
      %v653 = vrot.slane %v651, 5
      %v654 = vsel %vm352, %v649, %v653
      %v655 = vshrl.u32 %v220, 16
      %v657 = vrot.slane %v655, 4
      %v658 = vor.u32 %v657, %v653
      %v659 = vrot.slane %v658, 4
      %v661 = vshll.u32 %v221, 16
      %v663 = vrot.slane %v661, 5
      %v664 = vsel %vm352, %v659, %v663
      %v666 = vshrl.u32 %v222, 16
      %v668 = vrot.slane %v666, 4
      %v669 = vshll.u32 %v222, 16
      %v671 = vrot.slane %v669, 5
      %v672 = vor.u32 %v668, %v671
      %v673 = vrot.slane %v672, 4
      %v675 = vshll.u32 %v223, 16
      %v677 = vrot.slane %v675, 5
      %v678 = vsel %vm352, %v673, %v677
      %v679 = vshrl.u32 %v223, 16
      %v681 = vrot.slane %v679, 4
      %v682 = vor.u32 %v681, %v677
      %v683 = vrot.slane %v682, 4
      %v685 = vshll.u32 %v224, 16
      %v687 = vrot.slane %v685, 5
      %v688 = vsel %vm352, %v683, %v687
      %v690 = vshrl.u32 %v225, 16
      %v692 = vrot.slane %v690, 4
      %v693 = vshll.u32 %v225, 16
      %v695 = vrot.slane %v693, 5
      %v696 = vor.u32 %v692, %v695
      %v697 = vrot.slane %v696, 4
      %v699 = vshll.u32 %v226, 16
      %v701 = vrot.slane %v699, 5
      %v702 = vsel %vm352, %v697, %v701
      %v703 = vshrl.u32 %v226, 16
      %v705 = vrot.slane %v703, 4
      %v706 = vor.u32 %v705, %v701
      %v707 = vrot.slane %v706, 4
      %v709 = vshll.u32 %v227, 16
      %v711 = vrot.slane %v709, 5
      %v712 = vsel %vm352, %v707, %v711
      %v714 = vshrl.u32 %v228, 16
      %v716 = vrot.slane %v714, 4
      %v717 = vshll.u32 %v228, 16
      %v719 = vrot.slane %v717, 5
      %v720 = vor.u32 %v716, %v719
      %v721 = vrot.slane %v720, 4
      %v723 = vshll.u32 %v229, 16
      %v725 = vrot.slane %v723, 5
      %v726 = vsel %vm352, %v721, %v725
      %v727 = vshrl.u32 %v229, 16
      %v729 = vrot.slane %v727, 4
      %v730 = vor.u32 %v729, %v725
      %v731 = vrot.slane %v730, 4
      %v733 = vshll.u32 %v230, 16
      %v735 = vrot.slane %v733, 5
      %v736 = vsel %vm352, %v731, %v735
      %v737 = vunpack.c.l.b16 %v366
      %v738 = vunpack.c.l.b16 %v376
      %v739 = vunpack.c.l.b16 %v390
      %v740 = vunpack.c.l.b16 %v400
      %v741 = vunpack.c.l.b16 %v414
      %v742 = vunpack.c.l.b16 %v424
      %v743 = vunpack.c.l.b16 %v438
      %v744 = vunpack.c.l.b16 %v448
      %v745 = vunpack.c.l.b16 %v462
      %v746 = vunpack.c.l.b16 %v472
      %v747 = vunpack.c.l.b16 %v486
      %v748 = vunpack.c.l.b16 %v496
      %v749 = vunpack.c.l.b16 %v510
      %v750 = vunpack.c.l.b16 %v520
      %v751 = vunpack.c.l.b16 %v534
      %v752 = vunpack.c.l.b16 %v544
      %v753 = vunpack.c.l.b16 %v558
      %v754 = vunpack.c.l.b16 %v568
      %v755 = vunpack.c.l.b16 %v582
      %v756 = vunpack.c.l.b16 %v592
      %v757 = vunpack.c.l.b16 %v606
      %v758 = vunpack.c.l.b16 %v616
      %v759 = vunpack.c.l.b16 %v630
      %v760 = vunpack.c.l.b16 %v640
      %v761 = vunpack.c.l.b16 %v654
      %v762 = vunpack.c.l.b16 %v664
      %v763 = vunpack.c.l.b16 %v678
      %v764 = vunpack.c.l.b16 %v688
      %v765 = vunpack.c.l.b16 %v702
      %v766 = vunpack.c.l.b16 %v712
      %v767 = vunpack.c.l.b16 %v726
      %v768 = vunpack.c.l.b16 %v736
      %v769 = vpack.c.b16 %v738, %v737
      %v770 = vpack.c.b16 %v740, %v739
      %v771 = vpack.c.b16 %v742, %v741
      %v772 = vpack.c.b16 %v744, %v743
      %v773 = vpack.c.b16 %v746, %v745
      %v774 = vpack.c.b16 %v748, %v747
      %v775 = vpack.c.b16 %v750, %v749
      %v776 = vpack.c.b16 %v752, %v751
      %v777 = vpack.c.b16 %v754, %v753
      %v778 = vpack.c.b16 %v756, %v755
      %v779 = vpack.c.b16 %v758, %v757
      %v780 = vpack.c.b16 %v760, %v759
      %v781 = vpack.c.b16 %v762, %v761
      %v782 = vpack.c.b16 %v764, %v763
      %v783 = vpack.c.b16 %v766, %v765
      %v784 = vpack.c.b16 %v768, %v767
      %785 = vrot.lane.b32.xlu0 %v769, 8
      %v786 = vpop.permute.xlu0 %785
      %787 = vrot.lane.b32.xlu0 %v770, 8
      %v788 = vpop.permute.xlu0 %787
      %789 = vrot.lane.b32.xlu0 %v771, 8
      %v790 = vpop.permute.xlu0 %789
      %791 = vrot.lane.b32.xlu0 %v772, 8
      %v792 = vpop.permute.xlu0 %791
      %793 = vrot.lane.b32.xlu0 %v773, 8
      %v794 = vpop.permute.xlu0 %793
      %795 = vrot.lane.b32.xlu0 %v774, 8
      %v796 = vpop.permute.xlu0 %795
      %797 = vrot.lane.b32.xlu0 %v775, 8
      %v798 = vpop.permute.xlu0 %797
      %799 = vrot.lane.b32.xlu0 %v776, 8
      %v800 = vpop.permute.xlu0 %799
      %801 = vrot.lane.b32.xlu0 %v777, 8
      %v802 = vpop.permute.xlu0 %801
      %803 = vrot.lane.b32.xlu0 %v778, 8
      %v804 = vpop.permute.xlu0 %803
      %805 = vrot.lane.b32.xlu0 %v779, 8
      %v806 = vpop.permute.xlu0 %805
      %807 = vrot.lane.b32.xlu0 %v780, 8
      %v808 = vpop.permute.xlu0 %807
      %809 = vrot.lane.b32.xlu0 %v781, 8
      %v810 = vpop.permute.xlu0 %809
      %811 = vrot.lane.b32.xlu0 %v782, 8
      %v812 = vpop.permute.xlu0 %811
      %813 = vrot.lane.b32.xlu0 %v783, 8
      %v814 = vpop.permute.xlu0 %813
      %815 = vrot.lane.b32.xlu0 %v784, 8
      %v816 = vpop.permute.xlu0 %815
      %vm833 = vcmask 130112
      %834 = vst.msk [vmem:[#allocation2] sm:$0xff] %vm833, %v786
      %835 = vst.msk [vmem:[#allocation2 + $0x8] sm:$0xff] %vm833, %v788
      %836 = vst.msk [vmem:[#allocation2 + $0x10] sm:$0xff] %vm833, %v790
      %837 = vst.msk [vmem:[#allocation2 + $0x18] sm:$0xff] %vm833, %v792
      %838 = vst.msk [vmem:[#allocation2 + $0x20] sm:$0xff] %vm833, %v794
      %839 = vst.msk [vmem:[#allocation2 + $0x28] sm:$0xff] %vm833, %v796
      %840 = vst.msk [vmem:[#allocation2 + $0x30] sm:$0xff] %vm833, %v798
      %841 = vst.msk [vmem:[#allocation2 + $0x38] sm:$0xff] %vm833, %v800
      %842 = vst.msk [vmem:[#allocation2 + $0x40] sm:$0xff] %vm833, %v802
      %843 = vst.msk [vmem:[#allocation2 + $0x48] sm:$0xff] %vm833, %v804
      %844 = vst.msk [vmem:[#allocation2 + $0x50] sm:$0xff] %vm833, %v806
      %845 = vst.msk [vmem:[#allocation2 + $0x58] sm:$0xff] %vm833, %v808
      %846 = vst.msk [vmem:[#allocation2 + $0x60] sm:$0xff] %vm833, %v810
      %847 = vst.msk [vmem:[#allocation2 + $0x68] sm:$0xff] %vm833, %v812
      %848 = vst.msk [vmem:[#allocation2 + $0x70] sm:$0xff] %vm833, %v814
      %849 = vst.msk [vmem:[#allocation2 + $0x78] sm:$0xff] %vm833, %v816
      %vm866 = vcmask 1042432
      %vm867 = vcmask 1046532
      %vm868 = vmor %vm866, %vm867
      %v869 = vrot.slane %v183, 5
      %v870 = vrot.slane %v869, 4
      %v871 = vrot.slane %v184, 5
      %v872 = vsel %vm868, %v870, %v871
      %v873 = vrot.slane %v871, 4
      %v874 = vrot.slane %v185, 5
      %v875 = vsel %vm868, %v873, %v874
      %v876 = vrot.slane %v186, 5
      %v877 = vrot.slane %v876, 4
      %v878 = vrot.slane %v187, 5
      %v879 = vsel %vm868, %v877, %v878
      %v880 = vrot.slane %v878, 4
      %v881 = vrot.slane %v188, 5
      %v882 = vsel %vm868, %v880, %v881
      %v883 = vrot.slane %v189, 5
      %v884 = vrot.slane %v883, 4
      %v885 = vrot.slane %v190, 5
      %v886 = vsel %vm868, %v884, %v885
      %v887 = vrot.slane %v885, 4
      %v888 = vrot.slane %v191, 5
      %v889 = vsel %vm868, %v887, %v888
      %v890 = vrot.slane %v192, 5
      %v891 = vrot.slane %v890, 4
      %v892 = vrot.slane %v193, 5
      %v893 = vsel %vm868, %v891, %v892
      %v894 = vrot.slane %v892, 4
      %v895 = vrot.slane %v194, 5
      %v896 = vsel %vm868, %v894, %v895
      %v897 = vrot.slane %v195, 5
      %v898 = vrot.slane %v897, 4
      %v899 = vrot.slane %v196, 5
      %v900 = vsel %vm868, %v898, %v899
      %v901 = vrot.slane %v899, 4
      %v902 = vrot.slane %v197, 5
      %v903 = vsel %vm868, %v901, %v902
      %v904 = vrot.slane %v198, 5
      %v905 = vrot.slane %v904, 4
      %v906 = vrot.slane %v199, 5
      %v907 = vsel %vm868, %v905, %v906
      %v908 = vrot.slane %v906, 4
      %v909 = vrot.slane %v200, 5
      %v910 = vsel %vm868, %v908, %v909
      %v911 = vrot.slane %v201, 5
      %v912 = vrot.slane %v911, 4
      %v913 = vrot.slane %v202, 5
      %v914 = vsel %vm868, %v912, %v913
      %v915 = vrot.slane %v913, 4
      %v916 = vrot.slane %v203, 5
      %v917 = vsel %vm868, %v915, %v916
      %v918 = vrot.slane %v204, 5
      %v919 = vrot.slane %v918, 4
      %v920 = vrot.slane %v205, 5
      %v921 = vsel %vm868, %v919, %v920
      %v922 = vrot.slane %v920, 4
      %v923 = vrot.slane %v206, 5
      %v924 = vsel %vm868, %v922, %v923
      %v925 = vrot.slane %v207, 5
      %v926 = vrot.slane %v925, 4
      %v927 = vrot.slane %v208, 5
      %v928 = vsel %vm868, %v926, %v927
      %v929 = vrot.slane %v927, 4
      %v930 = vrot.slane %v209, 5
      %v931 = vsel %vm868, %v929, %v930
      %v932 = vrot.slane %v210, 5
      %v933 = vrot.slane %v932, 4
      %v934 = vrot.slane %v211, 5
      %v935 = vsel %vm868, %v933, %v934
      %v936 = vrot.slane %v934, 4
      %v937 = vrot.slane %v212, 5
      %v938 = vsel %vm868, %v936, %v937
      %v939 = vrot.slane %v213, 5
      %v940 = vrot.slane %v939, 4
      %v941 = vrot.slane %v214, 5
      %v942 = vsel %vm868, %v940, %v941
      %v943 = vrot.slane %v941, 4
      %v944 = vrot.slane %v215, 5
      %v945 = vsel %vm868, %v943, %v944
      %v946 = vrot.slane %v216, 5
      %v947 = vrot.slane %v946, 4
      %v948 = vrot.slane %v217, 5
      %v949 = vsel %vm868, %v947, %v948
      %v950 = vrot.slane %v948, 4
      %v951 = vrot.slane %v218, 5
      %v952 = vsel %vm868, %v950, %v951
      %v953 = vrot.slane %v219, 5
      %v954 = vrot.slane %v953, 4
      %v955 = vrot.slane %v220, 5
      %v956 = vsel %vm868, %v954, %v955
      %v957 = vrot.slane %v955, 4
      %v958 = vrot.slane %v221, 5
      %v959 = vsel %vm868, %v957, %v958
      %v960 = vrot.slane %v222, 5
      %v961 = vrot.slane %v960, 4
      %v962 = vrot.slane %v223, 5
      %v963 = vsel %vm868, %v961, %v962
      %v964 = vrot.slane %v962, 4
      %v965 = vrot.slane %v224, 5
      %v966 = vsel %vm868, %v964, %v965
      %v967 = vrot.slane %v225, 5
      %v968 = vrot.slane %v967, 4
      %v969 = vrot.slane %v226, 5
      %v970 = vsel %vm868, %v968, %v969
      %v971 = vrot.slane %v969, 4
      %v972 = vrot.slane %v227, 5
      %v973 = vsel %vm868, %v971, %v972
      %v974 = vrot.slane %v228, 5
      %v975 = vrot.slane %v974, 4
      %v976 = vrot.slane %v229, 5
      %v977 = vsel %vm868, %v975, %v976
      %v978 = vrot.slane %v976, 4
      %v979 = vrot.slane %v230, 5
      %v980 = vsel %vm868, %v978, %v979
      %v981 = vunpack.c.l.b16 %v872
      %v982 = vunpack.c.l.b16 %v875
      %v983 = vunpack.c.l.b16 %v879
      %v984 = vunpack.c.l.b16 %v882
      %v985 = vunpack.c.l.b16 %v886
      %v986 = vunpack.c.l.b16 %v889
      %v987 = vunpack.c.l.b16 %v893
      %v988 = vunpack.c.l.b16 %v896
      %v989 = vunpack.c.l.b16 %v900
      %v990 = vunpack.c.l.b16 %v903
      %v991 = vunpack.c.l.b16 %v907
      %v992 = vunpack.c.l.b16 %v910
      %v993 = vunpack.c.l.b16 %v914
      %v994 = vunpack.c.l.b16 %v917
      %v995 = vunpack.c.l.b16 %v921
      %v996 = vunpack.c.l.b16 %v924
      %v997 = vunpack.c.l.b16 %v928
      %v998 = vunpack.c.l.b16 %v931
      %v999 = vunpack.c.l.b16 %v935
      %v1000 = vunpack.c.l.b16 %v938
      %v1001 = vunpack.c.l.b16 %v942
      %v1002 = vunpack.c.l.b16 %v945
      %v1003 = vunpack.c.l.b16 %v949
      %v1004 = vunpack.c.l.b16 %v952
      %v1005 = vunpack.c.l.b16 %v956
      %v1006 = vunpack.c.l.b16 %v959
      %v1007 = vunpack.c.l.b16 %v963
      %v1008 = vunpack.c.l.b16 %v966
      %v1009 = vunpack.c.l.b16 %v970
      %v1010 = vunpack.c.l.b16 %v973
      %v1011 = vunpack.c.l.b16 %v977
      %v1012 = vunpack.c.l.b16 %v980
      %v1013 = vpack.c.b16 %v982, %v981
      %v1014 = vpack.c.b16 %v984, %v983
      %v1015 = vpack.c.b16 %v986, %v985
      %v1016 = vpack.c.b16 %v988, %v987
      %v1017 = vpack.c.b16 %v990, %v989
      %v1018 = vpack.c.b16 %v992, %v991
      %v1019 = vpack.c.b16 %v994, %v993
      %v1020 = vpack.c.b16 %v996, %v995
      %v1021 = vpack.c.b16 %v998, %v997
      %v1022 = vpack.c.b16 %v1000, %v999
      %v1023 = vpack.c.b16 %v1002, %v1001
      %v1024 = vpack.c.b16 %v1004, %v1003
      %v1025 = vpack.c.b16 %v1006, %v1005
      %v1026 = vpack.c.b16 %v1008, %v1007
      %v1027 = vpack.c.b16 %v1010, %v1009
      %v1028 = vpack.c.b16 %v1012, %v1011
      %1029 = vrot.lane.b32.xlu0 %v1013, 16
      %v1030 = vpop.permute.xlu0 %1029
      %1031 = vrot.lane.b32.xlu0 %v1014, 16
      %v1032 = vpop.permute.xlu0 %1031
      %1033 = vrot.lane.b32.xlu0 %v1015, 16
      %v1034 = vpop.permute.xlu0 %1033
      %1035 = vrot.lane.b32.xlu0 %v1016, 16
      %v1036 = vpop.permute.xlu0 %1035
      %1037 = vrot.lane.b32.xlu0 %v1017, 16
      %v1038 = vpop.permute.xlu0 %1037
      %1039 = vrot.lane.b32.xlu0 %v1018, 16
      %v1040 = vpop.permute.xlu0 %1039
      %1041 = vrot.lane.b32.xlu0 %v1019, 16
      %v1042 = vpop.permute.xlu0 %1041
      %1043 = vrot.lane.b32.xlu0 %v1020, 16
      %v1044 = vpop.permute.xlu0 %1043
      %1045 = vrot.lane.b32.xlu0 %v1021, 16
      %v1046 = vpop.permute.xlu0 %1045
      %1047 = vrot.lane.b32.xlu0 %v1022, 16
      %v1048 = vpop.permute.xlu0 %1047
      %1049 = vrot.lane.b32.xlu0 %v1023, 16
      %v1050 = vpop.permute.xlu0 %1049
      %1051 = vrot.lane.b32.xlu0 %v1024, 16
      %v1052 = vpop.permute.xlu0 %1051
      %1053 = vrot.lane.b32.xlu0 %v1025, 16
      %v1054 = vpop.permute.xlu0 %1053
      %1055 = vrot.lane.b32.xlu0 %v1026, 16
      %v1056 = vpop.permute.xlu0 %1055
      %1057 = vrot.lane.b32.xlu0 %v1027, 16
      %v1058 = vpop.permute.xlu0 %1057
      %1059 = vrot.lane.b32.xlu0 %v1028, 16
      %v1060 = vpop.permute.xlu0 %1059
      %vm1077 = vcmask 195712
      %1078 = vst.msk [vmem:[#allocation2] sm:$0xff] %vm1077, %v1030
      %1079 = vst.msk [vmem:[#allocation2 + $0x8] sm:$0xff] %vm1077, %v1032
      %1080 = vst.msk [vmem:[#allocation2 + $0x10] sm:$0xff] %vm1077, %v1034
      %1081 = vst.msk [vmem:[#allocation2 + $0x18] sm:$0xff] %vm1077, %v1036
      %1082 = vst.msk [vmem:[#allocation2 + $0x20] sm:$0xff] %vm1077, %v1038
      %1083 = vst.msk [vmem:[#allocation2 + $0x28] sm:$0xff] %vm1077, %v1040
      %1084 = vst.msk [vmem:[#allocation2 + $0x30] sm:$0xff] %vm1077, %v1042
      %1085 = vst.msk [vmem:[#allocation2 + $0x38] sm:$0xff] %vm1077, %v1044
      %1086 = vst.msk [vmem:[#allocation2 + $0x40] sm:$0xff] %vm1077, %v1046
      %1087 = vst.msk [vmem:[#allocation2 + $0x48] sm:$0xff] %vm1077, %v1048
      %1088 = vst.msk [vmem:[#allocation2 + $0x50] sm:$0xff] %vm1077, %v1050
      %1089 = vst.msk [vmem:[#allocation2 + $0x58] sm:$0xff] %vm1077, %v1052
      %1090 = vst.msk [vmem:[#allocation2 + $0x60] sm:$0xff] %vm1077, %v1054
      %1091 = vst.msk [vmem:[#allocation2 + $0x68] sm:$0xff] %vm1077, %v1056
      %1092 = vst.msk [vmem:[#allocation2 + $0x70] sm:$0xff] %vm1077, %v1058
      %1093 = vst.msk [vmem:[#allocation2 + $0x78] sm:$0xff] %vm1077, %v1060
      %v1096 = vunpack.c.l.b16 %v231
      %v1097 = vunpack.c.l.b16 %v232
      %v1098 = vpack.c.b16 %v1097, %v1096
      %1099 = vrot.lane.b32.xlu0 %v302, 24
      %v1100 = vpop.permute.xlu0 %1099
      %1101 = vrot.lane.b32.xlu0 %v303, 24
      %v1102 = vpop.permute.xlu0 %1101
      %1103 = vrot.lane.b32.xlu0 %v304, 24
      %v1104 = vpop.permute.xlu0 %1103
      %1105 = vrot.lane.b32.xlu0 %v305, 24
      %v1106 = vpop.permute.xlu0 %1105
      %1107 = vrot.lane.b32.xlu0 %v306, 24
      %v1108 = vpop.permute.xlu0 %1107
      %1109 = vrot.lane.b32.xlu0 %v307, 24
      %v1110 = vpop.permute.xlu0 %1109
      %1111 = vrot.lane.b32.xlu0 %v308, 24
      %v1112 = vpop.permute.xlu0 %1111
      %1113 = vrot.lane.b32.xlu0 %v309, 24
      %v1114 = vpop.permute.xlu0 %1113
      %1115 = vrot.lane.b32.xlu0 %v310, 24
      %v1116 = vpop.permute.xlu0 %1115
      %1117 = vrot.lane.b32.xlu0 %v311, 24
      %v1118 = vpop.permute.xlu0 %1117
      %1119 = vrot.lane.b32.xlu0 %v312, 24
      %v1120 = vpop.permute.xlu0 %1119
      %1121 = vrot.lane.b32.xlu0 %v313, 24
      %v1122 = vpop.permute.xlu0 %1121
      %1123 = vrot.lane.b32.xlu0 %v314, 24
      %v1124 = vpop.permute.xlu0 %1123
      %1125 = vrot.lane.b32.xlu0 %v315, 24
      %v1126 = vpop.permute.xlu0 %1125
      %1127 = vrot.lane.b32.xlu0 %v316, 24
      %v1128 = vpop.permute.xlu0 %1127
      %1129 = vrot.lane.b32.xlu0 %v1098, 24
      %v1130 = vpop.permute.xlu0 %1129
      %vm1147 = vcmask 261312
      %1148 = vst.msk [vmem:[#allocation2] sm:$0xff] %vm1147, %v1100
      %1149 = vst.msk [vmem:[#allocation2 + $0x8] sm:$0xff] %vm1147, %v1102
      %1150 = vst.msk [vmem:[#allocation2 + $0x10] sm:$0xff] %vm1147, %v1104
      %1151 = vst.msk [vmem:[#allocation2 + $0x18] sm:$0xff] %vm1147, %v1106
      %1152 = vst.msk [vmem:[#allocation2 + $0x20] sm:$0xff] %vm1147, %v1108
      %1153 = vst.msk [vmem:[#allocation2 + $0x28] sm:$0xff] %vm1147, %v1110
      %1154 = vst.msk [vmem:[#allocation2 + $0x30] sm:$0xff] %vm1147, %v1112
      %1155 = vst.msk [vmem:[#allocation2 + $0x38] sm:$0xff] %vm1147, %v1114
      %1156 = vst.msk [vmem:[#allocation2 + $0x40] sm:$0xff] %vm1147, %v1116
      %1157 = vst.msk [vmem:[#allocation2 + $0x48] sm:$0xff] %vm1147, %v1118
      %1158 = vst.msk [vmem:[#allocation2 + $0x50] sm:$0xff] %vm1147, %v1120
      %1159 = vst.msk [vmem:[#allocation2 + $0x58] sm:$0xff] %vm1147, %v1122
      %1160 = vst.msk [vmem:[#allocation2 + $0x60] sm:$0xff] %vm1147, %v1124
      %1161 = vst.msk [vmem:[#allocation2 + $0x68] sm:$0xff] %vm1147, %v1126
      %1162 = vst.msk [vmem:[#allocation2 + $0x70] sm:$0xff] %vm1147, %v1128
      %1163 = vst.msk [vmem:[#allocation2 + $0x78] sm:$0xff] %vm1147, %v1130
      %v1165 = vshrl.u32 %v231, 16
      %v1167 = vrot.slane %v1165, 4
      %v1168 = vshll.u32 %v231, 16
      %v1170 = vrot.slane %v1168, 5
      %v1171 = vor.u32 %v1167, %v1170
      %v1172 = vrot.slane %v1171, 4
      %v1174 = vshll.u32 %v232, 16
      %v1176 = vrot.slane %v1174, 5
      %v1177 = vsel %vm352, %v1172, %v1176
      %v1178 = vshrl.u32 %v232, 16
      %v1180 = vrot.slane %v1178, 4
      %v1181 = vor.u32 %v1180, %v1176
      %v1182 = vrot.slane %v1181, 4
      %v1184 = vshll.u32 %v233, 16
      %v1186 = vrot.slane %v1184, 5
      %v1187 = vsel %vm352, %v1182, %v1186
      %v1188 = vunpack.c.l.b16 %v1177
      %v1189 = vunpack.c.l.b16 %v1187
      %v1190 = vpack.c.b16 %v1189, %v1188
      %1191 = vrot.lane.b32.xlu0 %v770, 32
      %v1192 = vpop.permute.xlu0 %1191
      %1193 = vrot.lane.b32.xlu0 %v771, 32
      %v1194 = vpop.permute.xlu0 %1193
      %1195 = vrot.lane.b32.xlu0 %v772, 32
      %v1196 = vpop.permute.xlu0 %1195
      %1197 = vrot.lane.b32.xlu0 %v773, 32
      %v1198 = vpop.permute.xlu0 %1197
      %1199 = vrot.lane.b32.xlu0 %v774, 32
      %v1200 = vpop.permute.xlu0 %1199
      %1201 = vrot.lane.b32.xlu0 %v775, 32
      %v1202 = vpop.permute.xlu0 %1201
      %1203 = vrot.lane.b32.xlu0 %v776, 32
      %v1204 = vpop.permute.xlu0 %1203
      %1205 = vrot.lane.b32.xlu0 %v777, 32
      %v1206 = vpop.permute.xlu0 %1205
      %1207 = vrot.lane.b32.xlu0 %v778, 32
      %v1208 = vpop.permute.xlu0 %1207
      %1209 = vrot.lane.b32.xlu0 %v779, 32
      %v1210 = vpop.permute.xlu0 %1209
      %1211 = vrot.lane.b32.xlu0 %v780, 32
      %v1212 = vpop.permute.xlu0 %1211
      %1213 = vrot.lane.b32.xlu0 %v781, 32
      %v1214 = vpop.permute.xlu0 %1213
      %1215 = vrot.lane.b32.xlu0 %v782, 32
      %v1216 = vpop.permute.xlu0 %1215
      %1217 = vrot.lane.b32.xlu0 %v783, 32
      %v1218 = vpop.permute.xlu0 %1217
      %1219 = vrot.lane.b32.xlu0 %v784, 32
      %v1220 = vpop.permute.xlu0 %1219
      %1221 = vrot.lane.b32.xlu0 %v1190, 32
      %v1222 = vpop.permute.xlu0 %1221
      %vm1239 = vcmask 326912
      %1240 = vst.msk [vmem:[#allocation2] sm:$0xff] %vm1239, %v1192
      %1241 = vst.msk [vmem:[#allocation2 + $0x8] sm:$0xff] %vm1239, %v1194
      %1242 = vst.msk [vmem:[#allocation2 + $0x10] sm:$0xff] %vm1239, %v1196
      %1243 = vst.msk [vmem:[#allocation2 + $0x18] sm:$0xff] %vm1239, %v1198
      %1244 = vst.msk [vmem:[#allocation2 + $0x20] sm:$0xff] %vm1239, %v1200
      %1245 = vst.msk [vmem:[#allocation2 + $0x28] sm:$0xff] %vm1239, %v1202
      %1246 = vst.msk [vmem:[#allocation2 + $0x30] sm:$0xff] %vm1239, %v1204
      %1247 = vst.msk [vmem:[#allocation2 + $0x38] sm:$0xff] %vm1239, %v1206
      %1248 = vst.msk [vmem:[#allocation2 + $0x40] sm:$0xff] %vm1239, %v1208
      %1249 = vst.msk [vmem:[#allocation2 + $0x48] sm:$0xff] %vm1239, %v1210
      %1250 = vst.msk [vmem:[#allocation2 + $0x50] sm:$0xff] %vm1239, %v1212
      %1251 = vst.msk [vmem:[#allocation2 + $0x58] sm:$0xff] %vm1239, %v1214
      %1252 = vst.msk [vmem:[#allocation2 + $0x60] sm:$0xff] %vm1239, %v1216
      %1253 = vst.msk [vmem:[#allocation2 + $0x68] sm:$0xff] %vm1239, %v1218
      %1254 = vst.msk [vmem:[#allocation2 + $0x70] sm:$0xff] %vm1239, %v1220
      %1255 = vst.msk [vmem:[#allocation2 + $0x78] sm:$0xff] %vm1239, %v1222
      %v1257 = vrot.slane %v231, 5
      %v1258 = vrot.slane %v1257, 4
      %v1259 = vrot.slane %v232, 5
      %v1260 = vsel %vm868, %v1258, %v1259
      %v1261 = vrot.slane %v1259, 4
      %v1262 = vrot.slane %v233, 5
      %v1263 = vsel %vm868, %v1261, %v1262
      %v1264 = vunpack.c.l.b16 %v1260
      %v1265 = vunpack.c.l.b16 %v1263
      %v1266 = vpack.c.b16 %v1265, %v1264
      %1267 = vrot.lane.b32.xlu0 %v1014, 40
      %v1268 = vpop.permute.xlu0 %1267
      %1269 = vrot.lane.b32.xlu0 %v1015, 40
      %v1270 = vpop.permute.xlu0 %1269
      %1271 = vrot.lane.b32.xlu0 %v1016, 40
      %v1272 = vpop.permute.xlu0 %1271
      %1273 = vrot.lane.b32.xlu0 %v1017, 40
      %v1274 = vpop.permute.xlu0 %1273
      %1275 = vrot.lane.b32.xlu0 %v1018, 40
      %v1276 = vpop.permute.xlu0 %1275
      %1277 = vrot.lane.b32.xlu0 %v1019, 40
      %v1278 = vpop.permute.xlu0 %1277
      %1279 = vrot.lane.b32.xlu0 %v1020, 40
      %v1280 = vpop.permute.xlu0 %1279
      %1281 = vrot.lane.b32.xlu0 %v1021, 40
      %v1282 = vpop.permute.xlu0 %1281
      %1283 = vrot.lane.b32.xlu0 %v1022, 40
      %v1284 = vpop.permute.xlu0 %1283
      %1285 = vrot.lane.b32.xlu0 %v1023, 40
      %v1286 = vpop.permute.xlu0 %1285
      %1287 = vrot.lane.b32.xlu0 %v1024, 40
      %v1288 = vpop.permute.xlu0 %1287
      %1289 = vrot.lane.b32.xlu0 %v1025, 40
      %v1290 = vpop.permute.xlu0 %1289
      %1291 = vrot.lane.b32.xlu0 %v1026, 40
      %v1292 = vpop.permute.xlu0 %1291
      %1293 = vrot.lane.b32.xlu0 %v1027, 40
      %v1294 = vpop.permute.xlu0 %1293
      %1295 = vrot.lane.b32.xlu0 %v1028, 40
      %v1296 = vpop.permute.xlu0 %1295
      %1297 = vrot.lane.b32.xlu0 %v1266, 40
      %v1298 = vpop.permute.xlu0 %1297
      %vm1315 = vcmask 392512
      %1316 = vst.msk [vmem:[#allocation2] sm:$0xff] %vm1315, %v1268
      %1317 = vst.msk [vmem:[#allocation2 + $0x8] sm:$0xff] %vm1315, %v1270
      %1318 = vst.msk [vmem:[#allocation2 + $0x10] sm:$0xff] %vm1315, %v1272
      %1319 = vst.msk [vmem:[#allocation2 + $0x18] sm:$0xff] %vm1315, %v1274
      %1320 = vst.msk [vmem:[#allocation2 + $0x20] sm:$0xff] %vm1315, %v1276
      %1321 = vst.msk [vmem:[#allocation2 + $0x28] sm:$0xff] %vm1315, %v1278
      %1322 = vst.msk [vmem:[#allocation2 + $0x30] sm:$0xff] %vm1315, %v1280
      %1323 = vst.msk [vmem:[#allocation2 + $0x38] sm:$0xff] %vm1315, %v1282
      %1324 = vst.msk [vmem:[#allocation2 + $0x40] sm:$0xff] %vm1315, %v1284
      %1325 = vst.msk [vmem:[#allocation2 + $0x48] sm:$0xff] %vm1315, %v1286
      %1326 = vst.msk [vmem:[#allocation2 + $0x50] sm:$0xff] %vm1315, %v1288
      %1327 = vst.msk [vmem:[#allocation2 + $0x58] sm:$0xff] %vm1315, %v1290
      %1328 = vst.msk [vmem:[#allocation2 + $0x60] sm:$0xff] %vm1315, %v1292
      %1329 = vst.msk [vmem:[#allocation2 + $0x68] sm:$0xff] %vm1315, %v1294
      %1330 = vst.msk [vmem:[#allocation2 + $0x70] sm:$0xff] %vm1315, %v1296
      %1331 = vst.msk [vmem:[#allocation2 + $0x78] sm:$0xff] %vm1315, %v1298
      %v1334 = vunpack.c.l.b16 %v234
      %v1335 = vunpack.c.l.b16 %v235
      %v1336 = vpack.c.b16 %v1335, %v1334
      %1337 = vrot.lane.b32.xlu0 %v303, 48
      %v1338 = vpop.permute.xlu0 %1337
      %1339 = vrot.lane.b32.xlu0 %v304, 48
      %v1340 = vpop.permute.xlu0 %1339
      %1341 = vrot.lane.b32.xlu0 %v305, 48
      %v1342 = vpop.permute.xlu0 %1341
      %1343 = vrot.lane.b32.xlu0 %v306, 48
      %v1344 = vpop.permute.xlu0 %1343
      %1345 = vrot.lane.b32.xlu0 %v307, 48
      %v1346 = vpop.permute.xlu0 %1345
      %1347 = vrot.lane.b32.xlu0 %v308, 48
      %v1348 = vpop.permute.xlu0 %1347
      %1349 = vrot.lane.b32.xlu0 %v309, 48
      %v1350 = vpop.permute.xlu0 %1349
      %1351 = vrot.lane.b32.xlu0 %v310, 48
      %v1352 = vpop.permute.xlu0 %1351
      %1353 = vrot.lane.b32.xlu0 %v311, 48
      %v1354 = vpop.permute.xlu0 %1353
      %1355 = vrot.lane.b32.xlu0 %v312, 48
      %v1356 = vpop.permute.xlu0 %1355
      %1357 = vrot.lane.b32.xlu0 %v313, 48
      %v1358 = vpop.permute.xlu0 %1357
      %1359 = vrot.lane.b32.xlu0 %v314, 48
      %v1360 = vpop.permute.xlu0 %1359
      %1361 = vrot.lane.b32.xlu0 %v315, 48
      %v1362 = vpop.permute.xlu0 %1361
      %1363 = vrot.lane.b32.xlu0 %v316, 48
      %v1364 = vpop.permute.xlu0 %1363
      %1365 = vrot.lane.b32.xlu0 %v1098, 48
      %v1366 = vpop.permute.xlu0 %1365
      %1367 = vrot.lane.b32.xlu0 %v1336, 48
      %v1368 = vpop.permute.xlu0 %1367
      %vm1385 = vcmask 458112
      %1386 = vst.msk [vmem:[#allocation2] sm:$0xff] %vm1385, %v1338
      %1387 = vst.msk [vmem:[#allocation2 + $0x8] sm:$0xff] %vm1385, %v1340
      %1388 = vst.msk [vmem:[#allocation2 + $0x10] sm:$0xff] %vm1385, %v1342
      %1389 = vst.msk [vmem:[#allocation2 + $0x18] sm:$0xff] %vm1385, %v1344
      %1390 = vst.msk [vmem:[#allocation2 + $0x20] sm:$0xff] %vm1385, %v1346
      %1391 = vst.msk [vmem:[#allocation2 + $0x28] sm:$0xff] %vm1385, %v1348
      %1392 = vst.msk [vmem:[#allocation2 + $0x30] sm:$0xff] %vm1385, %v1350
      %1393 = vst.msk [vmem:[#allocation2 + $0x38] sm:$0xff] %vm1385, %v1352
      %1394 = vst.msk [vmem:[#allocation2 + $0x40] sm:$0xff] %vm1385, %v1354
      %1395 = vst.msk [vmem:[#allocation2 + $0x48] sm:$0xff] %vm1385, %v1356
      %1396 = vst.msk [vmem:[#allocation2 + $0x50] sm:$0xff] %vm1385, %v1358
      %1397 = vst.msk [vmem:[#allocation2 + $0x58] sm:$0xff] %vm1385, %v1360
      %1398 = vst.msk [vmem:[#allocation2 + $0x60] sm:$0xff] %vm1385, %v1362
      %1399 = vst.msk [vmem:[#allocation2 + $0x68] sm:$0xff] %vm1385, %v1364
      %1400 = vst.msk [vmem:[#allocation2 + $0x70] sm:$0xff] %vm1385, %v1366
      %1401 = vst.msk [vmem:[#allocation2 + $0x78] sm:$0xff] %vm1385, %v1368
      %v1403 = vshrl.u32 %v234, 16
      %v1405 = vrot.slane %v1403, 4
      %v1406 = vshll.u32 %v234, 16
      %v1408 = vrot.slane %v1406, 5
      %v1409 = vor.u32 %v1405, %v1408
      %v1410 = vrot.slane %v1409, 4
      %v1412 = vshll.u32 %v235, 16
      %v1414 = vrot.slane %v1412, 5
      %v1415 = vsel %vm352, %v1410, %v1414
      %v1416 = vshrl.u32 %v235, 16
      %v1418 = vrot.slane %v1416, 4
      %v1419 = vor.u32 %v1418, %v1414
      %v1420 = vrot.slane %v1419, 4
      %v1422 = vshll.u32 %v236, 16
      %v1424 = vrot.slane %v1422, 5
      %v1425 = vsel %vm352, %v1420, %v1424
      %v1426 = vunpack.c.l.b16 %v1415
      %v1427 = vunpack.c.l.b16 %v1425
      %v1428 = vpack.c.b16 %v1427, %v1426
      %1429 = vrot.lane.b32.xlu0 %v771, 56
      %v1430 = vpop.permute.xlu0 %1429
      %1431 = vrot.lane.b32.xlu0 %v772, 56
      %v1432 = vpop.permute.xlu0 %1431
      %1433 = vrot.lane.b32.xlu0 %v773, 56
      %v1434 = vpop.permute.xlu0 %1433
      %1435 = vrot.lane.b32.xlu0 %v774, 56
      %v1436 = vpop.permute.xlu0 %1435
      %1437 = vrot.lane.b32.xlu0 %v775, 56
      %v1438 = vpop.permute.xlu0 %1437
      %1439 = vrot.lane.b32.xlu0 %v776, 56
      %v1440 = vpop.permute.xlu0 %1439
      %1441 = vrot.lane.b32.xlu0 %v777, 56
      %v1442 = vpop.permute.xlu0 %1441
      %1443 = vrot.lane.b32.xlu0 %v778, 56
      %v1444 = vpop.permute.xlu0 %1443
      %1445 = vrot.lane.b32.xlu0 %v779, 56
      %v1446 = vpop.permute.xlu0 %1445
      %1447 = vrot.lane.b32.xlu0 %v780, 56
      %v1448 = vpop.permute.xlu0 %1447
      %1449 = vrot.lane.b32.xlu0 %v781, 56
      %v1450 = vpop.permute.xlu0 %1449
      %1451 = vrot.lane.b32.xlu0 %v782, 56
      %v1452 = vpop.permute.xlu0 %1451
      %1453 = vrot.lane.b32.xlu0 %v783, 56
      %v1454 = vpop.permute.xlu0 %1453
      %1455 = vrot.lane.b32.xlu0 %v784, 56
      %v1456 = vpop.permute.xlu0 %1455
      %1457 = vrot.lane.b32.xlu0 %v1190, 56
      %v1458 = vpop.permute.xlu0 %1457
      %1459 = vrot.lane.b32.xlu0 %v1428, 56
      %v1460 = vpop.permute.xlu0 %1459
      %vm1477 = vcmask 523712
      %1478 = vst.msk [vmem:[#allocation2] sm:$0xff] %vm1477, %v1430
      %1479 = vst.msk [vmem:[#allocation2 + $0x8] sm:$0xff] %vm1477, %v1432
      %1480 = vst.msk [vmem:[#allocation2 + $0x10] sm:$0xff] %vm1477, %v1434
      %1481 = vst.msk [vmem:[#allocation2 + $0x18] sm:$0xff] %vm1477, %v1436
      %1482 = vst.msk [vmem:[#allocation2 + $0x20] sm:$0xff] %vm1477, %v1438
      %1483 = vst.msk [vmem:[#allocation2 + $0x28] sm:$0xff] %vm1477, %v1440
      %1484 = vst.msk [vmem:[#allocation2 + $0x30] sm:$0xff] %vm1477, %v1442
      %1485 = vst.msk [vmem:[#allocation2 + $0x38] sm:$0xff] %vm1477, %v1444
      %1486 = vst.msk [vmem:[#allocation2 + $0x40] sm:$0xff] %vm1477, %v1446
      %1487 = vst.msk [vmem:[#allocation2 + $0x48] sm:$0xff] %vm1477, %v1448
      %1488 = vst.msk [vmem:[#allocation2 + $0x50] sm:$0xff] %vm1477, %v1450
      %1489 = vst.msk [vmem:[#allocation2 + $0x58] sm:$0xff] %vm1477, %v1452
      %1490 = vst.msk [vmem:[#allocation2 + $0x60] sm:$0xff] %vm1477, %v1454
      %1491 = vst.msk [vmem:[#allocation2 + $0x68] sm:$0xff] %vm1477, %v1456
      %1492 = vst.msk [vmem:[#allocation2 + $0x70] sm:$0xff] %vm1477, %v1458
      %1493 = vst.msk [vmem:[#allocation2 + $0x78] sm:$0xff] %vm1477, %v1460
      %v1495 = vrot.slane %v234, 5
      %v1496 = vrot.slane %v1495, 4
      %v1497 = vrot.slane %v235, 5
      %v1498 = vsel %vm868, %v1496, %v1497
      %v1499 = vrot.slane %v1497, 4
      %v1500 = vrot.slane %v236, 5
      %v1501 = vsel %vm868, %v1499, %v1500
      %v1502 = vunpack.c.l.b16 %v1498
      %v1503 = vunpack.c.l.b16 %v1501
      %v1504 = vpack.c.b16 %v1503, %v1502
      %1505 = vrot.lane.b32.xlu0 %v1015, 64
      %v1506 = vpop.permute.xlu0 %1505
      %1507 = vrot.lane.b32.xlu0 %v1016, 64
      %v1508 = vpop.permute.xlu0 %1507
      %1509 = vrot.lane.b32.xlu0 %v1017, 64
      %v1510 = vpop.permute.xlu0 %1509
      %1511 = vrot.lane.b32.xlu0 %v1018, 64
      %v1512 = vpop.permute.xlu0 %1511
      %1513 = vrot.lane.b32.xlu0 %v1019, 64
      %v1514 = vpop.permute.xlu0 %1513
      %1515 = vrot.lane.b32.xlu0 %v1020, 64
      %v1516 = vpop.permute.xlu0 %1515
      %1517 = vrot.lane.b32.xlu0 %v1021, 64
      %v1518 = vpop.permute.xlu0 %1517
      %1519 = vrot.lane.b32.xlu0 %v1022, 64
      %v1520 = vpop.permute.xlu0 %1519
      %1521 = vrot.lane.b32.xlu0 %v1023, 64
      %v1522 = vpop.permute.xlu0 %1521
      %1523 = vrot.lane.b32.xlu0 %v1024, 64
      %v1524 = vpop.permute.xlu0 %1523
      %1525 = vrot.lane.b32.xlu0 %v1025, 64
      %v1526 = vpop.permute.xlu0 %1525
      %1527 = vrot.lane.b32.xlu0 %v1026, 64
      %v1528 = vpop.permute.xlu0 %1527
      %1529 = vrot.lane.b32.xlu0 %v1027, 64
      %v1530 = vpop.permute.xlu0 %1529
      %1531 = vrot.lane.b32.xlu0 %v1028, 64
      %v1532 = vpop.permute.xlu0 %1531
      %1533 = vrot.lane.b32.xlu0 %v1266, 64
      %v1534 = vpop.permute.xlu0 %1533
      %1535 = vrot.lane.b32.xlu0 %v1504, 64
      %v1536 = vpop.permute.xlu0 %1535
      %vm1553 = vcmask 589312
      %1554 = vst.msk [vmem:[#allocation2] sm:$0xff] %vm1553, %v1506
      %1555 = vst.msk [vmem:[#allocation2 + $0x8] sm:$0xff] %vm1553, %v1508
      %1556 = vst.msk [vmem:[#allocation2 + $0x10] sm:$0xff] %vm1553, %v1510
      %1557 = vst.msk [vmem:[#allocation2 + $0x18] sm:$0xff] %vm1553, %v1512
      %1558 = vst.msk [vmem:[#allocation2 + $0x20] sm:$0xff] %vm1553, %v1514
      %1559 = vst.msk [vmem:[#allocation2 + $0x28] sm:$0xff] %vm1553, %v1516
      %1560 = vst.msk [vmem:[#allocation2 + $0x30] sm:$0xff] %vm1553, %v1518
      %1561 = vst.msk [vmem:[#allocation2 + $0x38] sm:$0xff] %vm1553, %v1520
      %1562 = vst.msk [vmem:[#allocation2 + $0x40] sm:$0xff] %vm1553, %v1522
      %1563 = vst.msk [vmem:[#allocation2 + $0x48] sm:$0xff] %vm1553, %v1524
      %1564 = vst.msk [vmem:[#allocation2 + $0x50] sm:$0xff] %vm1553, %v1526
      %1565 = vst.msk [vmem:[#allocation2 + $0x58] sm:$0xff] %vm1553, %v1528
      %1566 = vst.msk [vmem:[#allocation2 + $0x60] sm:$0xff] %vm1553, %v1530
      %1567 = vst.msk [vmem:[#allocation2 + $0x68] sm:$0xff] %vm1553, %v1532
      %1568 = vst.msk [vmem:[#allocation2 + $0x70] sm:$0xff] %vm1553, %v1534
      %1569 = vst.msk [vmem:[#allocation2 + $0x78] sm:$0xff] %vm1553, %v1536
      %v1570 = vld [vmem:[#allocation2] sm:$0xff]
      %v1571 = vld [vmem:[#allocation2 + $0x8] sm:$0xff]
      %v1572 = vld [vmem:[#allocation2 + $0x10] sm:$0xff]
      %v1573 = vld [vmem:[#allocation2 + $0x18] sm:$0xff]
      %v1574 = vld [vmem:[#allocation2 + $0x20] sm:$0xff]
      %v1575 = vld [vmem:[#allocation2 + $0x28] sm:$0xff]
      %v1576 = vld [vmem:[#allocation2 + $0x30] sm:$0xff]
      %v1577 = vld [vmem:[#allocation2 + $0x38] sm:$0xff]
      %v1578 = vld [vmem:[#allocation2 + $0x40] sm:$0xff]
      %v1579 = vld [vmem:[#allocation2 + $0x48] sm:$0xff]
      %v1580 = vld [vmem:[#allocation2 + $0x50] sm:$0xff]
      %v1581 = vld [vmem:[#allocation2 + $0x58] sm:$0xff]
      %v1582 = vld [vmem:[#allocation2 + $0x60] sm:$0xff]
      %v1583 = vld [vmem:[#allocation2 + $0x68] sm:$0xff]
      %v1584 = vld [vmem:[#allocation2 + $0x70] sm:$0xff]
      %v1585 = vld [vmem:[#allocation2 + $0x78] sm:$0xff]
      %v1586 = vld [vmem:[%s1] sm:$0xf]
      %v1587 = vld [vmem:[%s1 + $0x4] sm:$0xf]
      %v1588 = vld [vmem:[%s1 + $0x8] sm:$0xf]
      %v1589 = vld [vmem:[%s1 + $0xc] sm:$0xf]
      %v1590 = vld [vmem:[%s1 + $0x10] sm:$0xf]
      %v1591 = vld [vmem:[%s1 + $0x14] sm:$0xf]
      %v1592 = vld [vmem:[%s1 + $0x18] sm:$0xf]
      %v1593 = vld [vmem:[%s1 + $0x1c] sm:$0xf]
      %v1594 = vld [vmem:[%s1 + $0x20] sm:$0xf]
      %v1604 = vunpack.c.l.b16 %v1586
      %v1605 = vunpack.c.l.b16 %v1587
      %v1606 = vunpack.c.l.b16 %v1588
      %v1607 = vunpack.c.l.b16 %v1589
      %v1608 = vunpack.c.l.b16 %v1590
      %v1609 = vunpack.c.l.b16 %v1591
      %v1610 = vunpack.c.l.b16 %v1592
      %v1611 = vunpack.c.l.b16 %v1593
      %v1612 = vunpack.c.l.b16 %v1594
      %v1613 = vpack.c.b16 %v1605, %v1604
      %v1614 = vpack.c.b16 %v1607, %v1606
      %v1615 = vpack.c.b16 %v1609, %v1608
      %v1616 = vpack.c.b16 %v1611, %v1610
      %v1617 = vpack.c.b16 %v1612, %v1612
      %vm1622 = vcmask 588800
      %v1624 = vsel %vm1622, %v1570, 0
      %v1627 = vsel %vm1622, %v1571, 0
      %v1630 = vsel %vm1622, %v1572, 0
      %v1633 = vsel %vm1622, %v1573, 0
      %v1636 = vsel %vm1622, %v1574, 0
      %v1639 = vsel %vm1622, %v1575, 0
      %v1642 = vsel %vm1622, %v1576, 0
      %v1645 = vsel %vm1622, %v1577, 0
      %v1648 = vsel %vm1622, %v1578, 0
      %v1651 = vsel %vm1622, %v1579, 0
      %v1654 = vsel %vm1622, %v1580, 0
      %v1657 = vsel %vm1622, %v1581, 0
      %v1660 = vsel %vm1622, %v1582, 0
      %v1663 = vsel %vm1622, %v1583, 0
      %v1666 = vsel %vm1622, %v1584, 0
      %v1669 = vsel %vm1622, %v1585, 0
      %vm1671 = vcmask 1043456
      %v1673 = vsel %vm1671, %v1617, 0
      %1675 = vmatprep.subr.bf16.mxu0 0
      %1676 = vmatpush1.bf16.msra.mxu0 %v1613
      %1677 = vmatprep.subr.bf16.mxu0 0
      %1678 = vmatpush1.bf16.msra.mxu0 %v1614
      %1679 = vmatprep.subr.bf16.mxu0 0
      %1680 = vmatpush1.bf16.msra.mxu0 %v1615
      %1681 = vmatprep.subr.bf16.mxu0 0
      %1682 = vmatpush1.bf16.msra.mxu0 %v1616
      %1683 = vmatprep.subr.bf16.mxu0 0
      %1684 = vmatpush1.bf16.msra.mxu0 %v1673
      %1685 = vmatprep.subr.bf16.mxu0 0
      %1686 = vmatpush1.bf16.msra.mxu0 0
      %1687 = vmatprep.subr.bf16.mxu0 0
      %1688 = vmatpush1.bf16.msra.mxu0 0
      %1689 = vmatprep.subr.bf16.mxu0 0
      %1690 = vmatpush1.bf16.msra.mxu0 0
      %1691 = vmatprep.subr.bf16.mxu0 0
      %1692 = vmatpush1.bf16.msra.mxu0 0
      %1693 = vmatprep.subr.bf16.mxu0 0
      %1694 = vmatpush1.bf16.msra.mxu0 0
      %1695 = vmatprep.subr.bf16.mxu0 0
      %1696 = vmatpush1.bf16.msra.mxu0 0
      %1697 = vmatprep.subr.bf16.mxu0 0
      %1698 = vmatpush1.bf16.msra.mxu0 0
      %1699 = vmatprep.subr.bf16.mxu0 0
      %1700 = vmatpush1.bf16.msra.mxu0 0
      %1701 = vmatprep.subr.bf16.mxu0 0
      %1702 = vmatpush1.bf16.msra.mxu0 0
      %1703 = vmatprep.subr.bf16.mxu0 0
      %1704 = vmatpush1.bf16.msra.mxu0 0
      %1705 = vmatprep.subr.bf16.mxu0 0
      %1706 = vmatpush1.bf16.msra.mxu0 0
      %1707 = vmatprep.mubr.bf16.mxu0 0
      %1708 = vmatmul.mubr.bf16.gmra.mrb[0].mxu0 %v1624
      %v1709 = vpop.f32.mrb[0].mxu0
      %v1710 = vadd.f32 0.0, %v1709
      %v1711 = vpop.f32.mrb[0].mxu0
      %v1712 = vpop.f32.mrb[0].mxu0
      %v1713 = vadd.f32 0.0, %v1712
      %v1714 = vpop.f32.mrb[0].mxu0
      %1715 = vmatprep.mubr.bf16.mxu0 0
      %1716 = vmatmul.mubr.bf16.gmra.mrb[0].mxu0 %v1627
      %v1717 = vpop.f32.mrb[0].mxu0
      %v1718 = vadd.f32 0.0, %v1717
      %v1719 = vpop.f32.mrb[0].mxu0
      %v1720 = vpop.f32.mrb[0].mxu0
      %v1721 = vadd.f32 0.0, %v1720
      %v1722 = vpop.f32.mrb[0].mxu0
      %1723 = vmatprep.mubr.bf16.mxu0 0
      %1724 = vmatmul.mubr.bf16.gmra.mrb[0].mxu0 %v1630
      %v1725 = vpop.f32.mrb[0].mxu0
      %v1726 = vadd.f32 0.0, %v1725
      %v1727 = vpop.f32.mrb[0].mxu0
      %v1728 = vpop.f32.mrb[0].mxu0
      %v1729 = vadd.f32 0.0, %v1728
      %v1730 = vpop.f32.mrb[0].mxu0
      %1731 = vmatprep.mubr.bf16.mxu0 0
      %1732 = vmatmul.mubr.bf16.gmra.mrb[0].mxu0 %v1633
      %v1733 = vpop.f32.mrb[0].mxu0
      %v1734 = vadd.f32 0.0, %v1733
      %v1735 = vpop.f32.mrb[0].mxu0
      %v1736 = vpop.f32.mrb[0].mxu0
      %v1737 = vadd.f32 0.0, %v1736
      %v1738 = vpop.f32.mrb[0].mxu0
      %1739 = vmatprep.mubr.bf16.mxu0 0
      %1740 = vmatmul.mubr.bf16.gmra.mrb[0].mxu0 %v1636
      %v1741 = vpop.f32.mrb[0].mxu0
      %v1742 = vadd.f32 0.0, %v1741
      %v1743 = vpop.f32.mrb[0].mxu0
      %v1744 = vpop.f32.mrb[0].mxu0
      %v1745 = vadd.f32 0.0, %v1744
      %v1746 = vpop.f32.mrb[0].mxu0
      %1747 = vmatprep.mubr.bf16.mxu0 0
      %1748 = vmatmul.mubr.bf16.gmra.mrb[0].mxu0 %v1639
      %v1749 = vpop.f32.mrb[0].mxu0
      %v1750 = vadd.f32 0.0, %v1749
      %v1751 = vpop.f32.mrb[0].mxu0
      %v1752 = vpop.f32.mrb[0].mxu0
      %v1753 = vadd.f32 0.0, %v1752
      %v1754 = vpop.f32.mrb[0].mxu0
      %1755 = vmatprep.mubr.bf16.mxu0 0
      %1756 = vmatmul.mubr.bf16.gmra.mrb[0].mxu0 %v1642
      %v1757 = vpop.f32.mrb[0].mxu0
      %v1758 = vadd.f32 0.0, %v1757
      %v1759 = vpop.f32.mrb[0].mxu0
      %v1760 = vpop.f32.mrb[0].mxu0
      %v1761 = vadd.f32 0.0, %v1760
      %v1762 = vpop.f32.mrb[0].mxu0
      %1763 = vmatprep.mubr.bf16.mxu0 0
      %1764 = vmatmul.mubr.bf16.gmra.mrb[0].mxu0 %v1645
      %v1765 = vpop.f32.mrb[0].mxu0
      %v1766 = vadd.f32 0.0, %v1765
      %v1767 = vpop.f32.mrb[0].mxu0
      %v1768 = vpop.f32.mrb[0].mxu0
      %v1769 = vadd.f32 0.0, %v1768
      %v1770 = vpop.f32.mrb[0].mxu0
      %1771 = vmatprep.mubr.bf16.mxu0 0
      %1772 = vmatmul.mubr.bf16.gmra.mrb[0].mxu0 %v1648
      %v1773 = vpop.f32.mrb[0].mxu0
      %v1774 = vadd.f32 0.0, %v1773
      %v1775 = vpop.f32.mrb[0].mxu0
      %v1776 = vpop.f32.mrb[0].mxu0
      %v1777 = vadd.f32 0.0, %v1776
      %v1778 = vpop.f32.mrb[0].mxu0
      %1779 = vmatprep.mubr.bf16.mxu0 0
      %1780 = vmatmul.mubr.bf16.gmra.mrb[0].mxu0 %v1651
      %v1781 = vpop.f32.mrb[0].mxu0
      %v1782 = vadd.f32 0.0, %v1781
      %v1783 = vpop.f32.mrb[0].mxu0
      %v1784 = vpop.f32.mrb[0].mxu0
      %v1785 = vadd.f32 0.0, %v1784
      %v1786 = vpop.f32.mrb[0].mxu0
      %1787 = vmatprep.mubr.bf16.mxu0 0
      %1788 = vmatmul.mubr.bf16.gmra.mrb[0].mxu0 %v1654
      %v1789 = vpop.f32.mrb[0].mxu0
      %v1790 = vadd.f32 0.0, %v1789
      %v1791 = vpop.f32.mrb[0].mxu0
      %v1792 = vpop.f32.mrb[0].mxu0
      %v1793 = vadd.f32 0.0, %v1792
      %v1794 = vpop.f32.mrb[0].mxu0
      %1795 = vmatprep.mubr.bf16.mxu0 0
      %1796 = vmatmul.mubr.bf16.gmra.mrb[0].mxu0 %v1657
      %v1797 = vpop.f32.mrb[0].mxu0
      %v1798 = vadd.f32 0.0, %v1797
      %v1799 = vpop.f32.mrb[0].mxu0
      %v1800 = vpop.f32.mrb[0].mxu0
      %v1801 = vadd.f32 0.0, %v1800
      %v1802 = vpop.f32.mrb[0].mxu0
      %1803 = vmatprep.mubr.bf16.mxu0 0
      %1804 = vmatmul.mubr.bf16.gmra.mrb[0].mxu0 %v1660
      %v1805 = vpop.f32.mrb[0].mxu0
      %v1806 = vadd.f32 0.0, %v1805
      %v1807 = vpop.f32.mrb[0].mxu0
      %v1808 = vpop.f32.mrb[0].mxu0
      %v1809 = vadd.f32 0.0, %v1808
      %v1810 = vpop.f32.mrb[0].mxu0
      %1811 = vmatprep.mubr.bf16.mxu0 0
      %1812 = vmatmul.mubr.bf16.gmra.mrb[0].mxu0 %v1663
      %v1813 = vpop.f32.mrb[0].mxu0
      %v1814 = vadd.f32 0.0, %v1813
      %v1815 = vpop.f32.mrb[0].mxu0
      %v1816 = vpop.f32.mrb[0].mxu0
      %v1817 = vadd.f32 0.0, %v1816
      %v1818 = vpop.f32.mrb[0].mxu0
      %1819 = vmatprep.mubr.bf16.mxu0 0
      %1820 = vmatmul.mubr.bf16.gmra.mrb[0].mxu0 %v1666
      %v1821 = vpop.f32.mrb[0].mxu0
      %v1822 = vadd.f32 0.0, %v1821
      %v1823 = vpop.f32.mrb[0].mxu0
      %v1824 = vpop.f32.mrb[0].mxu0
      %v1825 = vadd.f32 0.0, %v1824
      %v1826 = vpop.f32.mrb[0].mxu0
      %1827 = vmatprep.mubr.bf16.mxu0 0
      %1828 = vmatmul.mubr.bf16.gmra.mrb[0].mxu0 %v1669
      %v1829 = vpop.f32.mrb[0].mxu0
      %v1830 = vadd.f32 0.0, %v1829
      %v1831 = vpop.f32.mrb[0].mxu0
      %v1832 = vpop.f32.mrb[0].mxu0
      %v1833 = vadd.f32 0.0, %v1832
      %v1834 = vpop.f32.mrb[0].mxu0
      %1835 = vdwg.mxu0
      %v1836 = vpack.c.bf16 %v1713, %v1710
      %v1837 = vpack.c.bf16 %v1721, %v1718
      %v1838 = vpack.c.bf16 %v1729, %v1726
      %v1839 = vpack.c.bf16 %v1737, %v1734
      %v1840 = vpack.c.bf16 %v1745, %v1742
      %v1841 = vpack.c.bf16 %v1753, %v1750
      %v1842 = vpack.c.bf16 %v1761, %v1758
      %v1843 = vpack.c.bf16 %v1769, %v1766
      %v1844 = vpack.c.bf16 %v1777, %v1774
      %v1845 = vpack.c.bf16 %v1785, %v1782
      %v1846 = vpack.c.bf16 %v1793, %v1790
      %v1847 = vpack.c.bf16 %v1801, %v1798
      %v1848 = vpack.c.bf16 %v1809, %v1806
      %v1849 = vpack.c.bf16 %v1817, %v1814
      %v1850 = vpack.c.bf16 %v1825, %v1822
      %v1851 = vpack.c.bf16 %v1833, %v1830
      %v1868 = vunpack.c.l.b16 %v1836
      %v1869 = vunpack.c.h.b16 %v1836
      %v1870 = vunpack.c.l.b16 %v1837
      %v1871 = vunpack.c.h.b16 %v1837
      %v1872 = vunpack.c.l.b16 %v1838
      %v1873 = vunpack.c.h.b16 %v1838
      %v1874 = vunpack.c.l.b16 %v1839
      %v1875 = vunpack.c.h.b16 %v1839
      %v1876 = vunpack.c.l.b16 %v1840
      %v1877 = vunpack.c.h.b16 %v1840
      %v1878 = vunpack.c.l.b16 %v1841
      %v1879 = vunpack.c.h.b16 %v1841
      %v1880 = vunpack.c.l.b16 %v1842
      %v1881 = vunpack.c.h.b16 %v1842
      %v1882 = vunpack.c.l.b16 %v1843
      %v1883 = vunpack.c.h.b16 %v1843
      %v1884 = vunpack.c.l.b16 %v1844
      %v1885 = vunpack.c.h.b16 %v1844
      %v1886 = vunpack.c.l.b16 %v1845
      %v1887 = vunpack.c.h.b16 %v1845
      %v1888 = vunpack.c.l.b16 %v1846
      %v1889 = vunpack.c.h.b16 %v1846
      %v1890 = vunpack.c.l.b16 %v1847
      %v1891 = vunpack.c.h.b16 %v1847
      %v1892 = vunpack.c.l.b16 %v1848
      %v1893 = vunpack.c.h.b16 %v1848
      %v1894 = vunpack.c.l.b16 %v1849
      %v1895 = vunpack.c.h.b16 %v1849
      %v1896 = vunpack.c.l.b16 %v1850
      %v1897 = vunpack.c.h.b16 %v1850
      %v1898 = vunpack.c.l.b16 %v1851
      %v1899 = vunpack.c.h.b16 %v1851
      %v1900 = vpack.c.b16 %v1868, %v1868
      %v1901 = vpack.c.b16 %v1869, %v1869
      %v1902 = vpack.c.b16 %v1870, %v1870
      %v1903 = vpack.c.b16 %v1871, %v1871
      %v1904 = vpack.c.b16 %v1872, %v1872
      %v1905 = vpack.c.b16 %v1873, %v1873
      %v1906 = vpack.c.b16 %v1874, %v1874
      %v1907 = vpack.c.b16 %v1875, %v1875
      %v1908 = vpack.c.b16 %v1876, %v1876
      %v1909 = vpack.c.b16 %v1877, %v1877
      %v1910 = vpack.c.b16 %v1878, %v1878
      %v1911 = vpack.c.b16 %v1879, %v1879
      %v1912 = vpack.c.b16 %v1880, %v1880
      %v1913 = vpack.c.b16 %v1881, %v1881
      %v1914 = vpack.c.b16 %v1882, %v1882
      %v1915 = vpack.c.b16 %v1883, %v1883
      %v1916 = vpack.c.b16 %v1884, %v1884
      %v1917 = vpack.c.b16 %v1885, %v1885
      %v1918 = vpack.c.b16 %v1886, %v1886
      %v1919 = vpack.c.b16 %v1887, %v1887
      %v1920 = vpack.c.b16 %v1888, %v1888
      %v1921 = vpack.c.b16 %v1889, %v1889
      %v1922 = vpack.c.b16 %v1890, %v1890
      %v1923 = vpack.c.b16 %v1891, %v1891
      %v1924 = vpack.c.b16 %v1892, %v1892
      %v1925 = vpack.c.b16 %v1893, %v1893
      %v1926 = vpack.c.b16 %v1894, %v1894
      %v1927 = vpack.c.b16 %v1895, %v1895
      %v1928 = vpack.c.b16 %v1896, %v1896
      %v1929 = vpack.c.b16 %v1897, %v1897
      %v1930 = vpack.c.b16 %v1898, %v1898
      %v1931 = vpack.c.b16 %v1899, %v1899
      %vm1964 = vcmask 60416
      %1965 = vst.msk [vmem:[%s177] sm:$0xf] %vm1964, %v1900
      %1966 = vst.msk [vmem:[%s177 + $0x4] sm:$0xf] %vm1964, %v1901
      %1967 = vst.msk [vmem:[%s177 + $0x8] sm:$0xf] %vm1964, %v1902
      %1968 = vst.msk [vmem:[%s177 + $0xc] sm:$0xf] %vm1964, %v1903
      %1969 = vst.msk [vmem:[%s177 + $0x10] sm:$0xf] %vm1964, %v1904
      %1970 = vst.msk [vmem:[%s177 + $0x14] sm:$0xf] %vm1964, %v1905
      %1971 = vst.msk [vmem:[%s177 + $0x18] sm:$0xf] %vm1964, %v1906
      %1972 = vst.msk [vmem:[%s177 + $0x1c] sm:$0xf] %vm1964, %v1907
      %1973 = vst.msk [vmem:[%s177 + $0x20] sm:$0xf] %vm1964, %v1908
      %1974 = vst.msk [vmem:[%s177 + $0x24] sm:$0xf] %vm1964, %v1909
      %1975 = vst.msk [vmem:[%s177 + $0x28] sm:$0xf] %vm1964, %v1910
      %1976 = vst.msk [vmem:[%s177 + $0x2c] sm:$0xf] %vm1964, %v1911
      %1977 = vst.msk [vmem:[%s177 + $0x30] sm:$0xf] %vm1964, %v1912
      %1978 = vst.msk [vmem:[%s177 + $0x34] sm:$0xf] %vm1964, %v1913
      %1979 = vst.msk [vmem:[%s177 + $0x38] sm:$0xf] %vm1964, %v1914
      %1980 = vst.msk [vmem:[%s177 + $0x3c] sm:$0xf] %vm1964, %v1915
      %1981 = vst.msk [vmem:[%s177 + $0x40] sm:$0xf] %vm1964, %v1916
      %1982 = vst.msk [vmem:[%s177 + $0x44] sm:$0xf] %vm1964, %v1917
      %1983 = vst.msk [vmem:[%s177 + $0x48] sm:$0xf] %vm1964, %v1918
      %1984 = vst.msk [vmem:[%s177 + $0x4c] sm:$0xf] %vm1964, %v1919
      %1985 = vst.msk [vmem:[%s177 + $0x50] sm:$0xf] %vm1964, %v1920
      %1986 = vst.msk [vmem:[%s177 + $0x54] sm:$0xf] %vm1964, %v1921
      %1987 = vst.msk [vmem:[%s177 + $0x58] sm:$0xf] %vm1964, %v1922
      %1988 = vst.msk [vmem:[%s177 + $0x5c] sm:$0xf] %vm1964, %v1923
      %1989 = vst.msk [vmem:[%s177 + $0x60] sm:$0xf] %vm1964, %v1924
      %1990 = vst.msk [vmem:[%s177 + $0x64] sm:$0xf] %vm1964, %v1925
      %1991 = vst.msk [vmem:[%s177 + $0x68] sm:$0xf] %vm1964, %v1926
      %1992 = vst.msk [vmem:[%s177 + $0x6c] sm:$0xf] %vm1964, %v1927
      %1993 = vst.msk [vmem:[%s177 + $0x70] sm:$0xf] %vm1964, %v1928
      %1994 = vst.msk [vmem:[%s177 + $0x74] sm:$0xf] %vm1964, %v1929
      %1995 = vst.msk [vmem:[%s177 + $0x78] sm:$0xf] %vm1964, %v1930
      %1996 = vst.msk [vmem:[%s177 + $0x7c] sm:$0xf] %vm1964, %v1931
      %v1997 = vsel %vm333, %v1710, 0.0
      %v1998 = vsel %vm333, %v1713, 0.0
      %v1999 = vadd.f32 %v1997, %v1998
      %v2000 = vsel %vm333, %v1718, 0.0
      %v2001 = vadd.f32 %v1999, %v2000
      %v2002 = vsel %vm333, %v1721, 0.0
      %v2003 = vadd.f32 %v2001, %v2002
      %v2004 = vsel %vm333, %v1726, 0.0
      %v2005 = vadd.f32 %v2003, %v2004
      %v2006 = vsel %vm333, %v1729, 0.0
      %v2007 = vadd.f32 %v2005, %v2006
      %v2008 = vsel %vm333, %v1734, 0.0
      %v2009 = vadd.f32 %v2007, %v2008
      %v2010 = vsel %vm333, %v1737, 0.0
      %v2011 = vadd.f32 %v2009, %v2010
      %v2012 = vsel %vm333, %v1742, 0.0
      %v2013 = vadd.f32 %v2011, %v2012
      %v2014 = vsel %vm333, %v1745, 0.0
      %v2015 = vadd.f32 %v2013, %v2014
      %v2016 = vsel %vm333, %v1750, 0.0
      %v2017 = vadd.f32 %v2015, %v2016
      %v2018 = vsel %vm333, %v1753, 0.0
      %v2019 = vadd.f32 %v2017, %v2018
      %v2020 = vsel %vm333, %v1758, 0.0
      %v2021 = vadd.f32 %v2019, %v2020
      %v2022 = vsel %vm333, %v1761, 0.0
      %v2023 = vadd.f32 %v2021, %v2022
      %v2024 = vsel %vm333, %v1766, 0.0
      %v2025 = vadd.f32 %v2023, %v2024
      %v2026 = vsel %vm333, %v1769, 0.0
      %v2027 = vadd.f32 %v2025, %v2026
      %v2028 = vsel %vm333, %v1774, 0.0
      %v2029 = vadd.f32 %v2027, %v2028
      %v2030 = vsel %vm333, %v1777, 0.0
      %v2031 = vadd.f32 %v2029, %v2030
      %v2032 = vsel %vm333, %v1782, 0.0
      %v2033 = vadd.f32 %v2031, %v2032
      %v2034 = vsel %vm333, %v1785, 0.0
      %v2035 = vadd.f32 %v2033, %v2034
      %v2036 = vsel %vm333, %v1790, 0.0
      %v2037 = vadd.f32 %v2035, %v2036
      %v2038 = vsel %vm333, %v1793, 0.0
      %v2039 = vadd.f32 %v2037, %v2038
      %v2040 = vsel %vm333, %v1798, 0.0
      %v2041 = vadd.f32 %v2039, %v2040
      %v2042 = vsel %vm333, %v1801, 0.0
      %v2043 = vadd.f32 %v2041, %v2042
      %v2044 = vsel %vm333, %v1806, 0.0
      %v2045 = vadd.f32 %v2043, %v2044
      %v2046 = vsel %vm333, %v1809, 0.0
      %v2047 = vadd.f32 %v2045, %v2046
      %v2048 = vsel %vm333, %v1814, 0.0
      %v2049 = vadd.f32 %v2047, %v2048
      %v2050 = vsel %vm333, %v1817, 0.0
      %v2051 = vadd.f32 %v2049, %v2050
      %v2052 = vsel %vm333, %v1822, 0.0
      %v2053 = vadd.f32 %v2051, %v2052
      %v2054 = vsel %vm333, %v1825, 0.0
      %v2055 = vadd.f32 %v2053, %v2054
      %v2056 = vsel %vm333, %v1830, 0.0
      %v2057 = vadd.f32 %v2055, %v2056
      %v2058 = vsel %vm333, %v1833, 0.0
      %v2059 = vadd.f32 %v2057, %v2058
      %v2060 = vrot.slane %v2059, 4
      %v2061 = vadd.f32 %v2059, %v2060
      %v2062 = vrot.slane %v2061, 2
      %v2063 = vadd.f32 %v2061, %v2062
      %v2064 = vrot.slane %v2063, 1
      %v2065 = vadd.f32 %v2063, %v2064
      %v2066 = vmul.f32 %v2065, 0.00390625
      %v2067 = vsub.f32 %v1710, %v2066
      %v2068 = vsub.f32 %v1713, %v2066
      %v2069 = vsub.f32 %v1718, %v2066
      %v2070 = vsub.f32 %v1721, %v2066
      %v2071 = vsub.f32 %v1726, %v2066
      %v2072 = vsub.f32 %v1729, %v2066
      %v2073 = vsub.f32 %v1734, %v2066
      %v2074 = vsub.f32 %v1737, %v2066
      %v2075 = vsub.f32 %v1742, %v2066
      %v2076 = vsub.f32 %v1745, %v2066
      %v2077 = vsub.f32 %v1750, %v2066
      %v2078 = vsub.f32 %v1753, %v2066
      %v2079 = vsub.f32 %v1758, %v2066
      %v2080 = vsub.f32 %v1761, %v2066
      %v2081 = vsub.f32 %v1766, %v2066
      %v2082 = vsub.f32 %v1769, %v2066
      %v2083 = vsub.f32 %v1774, %v2066
      %v2084 = vsub.f32 %v1777, %v2066
      %v2085 = vsub.f32 %v1782, %v2066
      %v2086 = vsub.f32 %v1785, %v2066
      %v2087 = vsub.f32 %v1790, %v2066
      %v2088 = vsub.f32 %v1793, %v2066
      %v2089 = vsub.f32 %v1798, %v2066
      %v2090 = vsub.f32 %v1801, %v2066
      %v2091 = vsub.f32 %v1806, %v2066
      %v2092 = vsub.f32 %v1809, %v2066
      %v2093 = vsub.f32 %v1814, %v2066
      %v2094 = vsub.f32 %v1817, %v2066
      %v2095 = vsub.f32 %v1822, %v2066
      %v2096 = vsub.f32 %v1825, %v2066
      %v2097 = vsub.f32 %v1830, %v2066
      %v2098 = vsub.f32 %v1833, %v2066
      %vm2099 = vcmask 57344
      %2100 = vst.msk [vmem:[%s181] sm:$0x1] %vm2099, %v2066
      %v2101 = vmul.f32 %v2067, %v2067
      %v2102 = vmul.f32 %v2068, %v2068
      %v2103 = vmul.f32 %v2069, %v2069
      %v2104 = vmul.f32 %v2070, %v2070
      %v2105 = vmul.f32 %v2071, %v2071
      %v2106 = vmul.f32 %v2072, %v2072
      %v2107 = vmul.f32 %v2073, %v2073
      %v2108 = vmul.f32 %v2074, %v2074
      %v2109 = vmul.f32 %v2075, %v2075
      %v2110 = vmul.f32 %v2076, %v2076
      %v2111 = vmul.f32 %v2077, %v2077
      %v2112 = vmul.f32 %v2078, %v2078
      %v2113 = vmul.f32 %v2079, %v2079
      %v2114 = vmul.f32 %v2080, %v2080
      %v2115 = vmul.f32 %v2081, %v2081
      %v2116 = vmul.f32 %v2082, %v2082
      %v2117 = vmul.f32 %v2083, %v2083
      %v2118 = vmul.f32 %v2084, %v2084
      %v2119 = vmul.f32 %v2085, %v2085
      %v2120 = vmul.f32 %v2086, %v2086
      %v2121 = vmul.f32 %v2087, %v2087
      %v2122 = vmul.f32 %v2088, %v2088
      %v2123 = vmul.f32 %v2089, %v2089
      %v2124 = vmul.f32 %v2090, %v2090
      %v2125 = vmul.f32 %v2091, %v2091
      %v2126 = vmul.f32 %v2092, %v2092
      %v2127 = vmul.f32 %v2093, %v2093
      %v2128 = vmul.f32 %v2094, %v2094
      %v2129 = vmul.f32 %v2095, %v2095
      %v2130 = vmul.f32 %v2096, %v2096
      %v2131 = vmul.f32 %v2097, %v2097
      %v2132 = vmul.f32 %v2098, %v2098
      %v2133 = vsel %vm333, %v2101, 0.0
      %v2134 = vsel %vm333, %v2102, 0.0
      %v2135 = vadd.f32 %v2133, %v2134
      %v2136 = vsel %vm333, %v2103, 0.0
      %v2137 = vadd.f32 %v2135, %v2136
      %v2138 = vsel %vm333, %v2104, 0.0
      %v2139 = vadd.f32 %v2137, %v2138
      %v2140 = vsel %vm333, %v2105, 0.0
      %v2141 = vadd.f32 %v2139, %v2140
      %v2142 = vsel %vm333, %v2106, 0.0
      %v2143 = vadd.f32 %v2141, %v2142
      %v2144 = vsel %vm333, %v2107, 0.0
      %v2145 = vadd.f32 %v2143, %v2144
      %v2146 = vsel %vm333, %v2108, 0.0
      %v2147 = vadd.f32 %v2145, %v2146
      %v2148 = vsel %vm333, %v2109, 0.0
      %v2149 = vadd.f32 %v2147, %v2148
      %v2150 = vsel %vm333, %v2110, 0.0
      %v2151 = vadd.f32 %v2149, %v2150
      %v2152 = vsel %vm333, %v2111, 0.0
      %v2153 = vadd.f32 %v2151, %v2152
      %v2154 = vsel %vm333, %v2112, 0.0
      %v2155 = vadd.f32 %v2153, %v2154
      %v2156 = vsel %vm333, %v2113, 0.0
      %v2157 = vadd.f32 %v2155, %v2156
      %v2158 = vsel %vm333, %v2114, 0.0
      %v2159 = vadd.f32 %v2157, %v2158
      %v2160 = vsel %vm333, %v2115, 0.0
      %v2161 = vadd.f32 %v2159, %v2160
      %v2162 = vsel %vm333, %v2116, 0.0
      %v2163 = vadd.f32 %v2161, %v2162
      %v2164 = vsel %vm333, %v2117, 0.0
      %v2165 = vadd.f32 %v2163, %v2164
      %v2166 = vsel %vm333, %v2118, 0.0
      %v2167 = vadd.f32 %v2165, %v2166
      %v2168 = vsel %vm333, %v2119, 0.0
      %v2169 = vadd.f32 %v2167, %v2168
      %v2170 = vsel %vm333, %v2120, 0.0
      %v2171 = vadd.f32 %v2169, %v2170
      %v2172 = vsel %vm333, %v2121, 0.0
      %v2173 = vadd.f32 %v2171, %v2172
      %v2174 = vsel %vm333, %v2122, 0.0
      %v2175 = vadd.f32 %v2173, %v2174
      %v2176 = vsel %vm333, %v2123, 0.0
      %v2177 = vadd.f32 %v2175, %v2176
      %v2178 = vsel %vm333, %v2124, 0.0
      %v2179 = vadd.f32 %v2177, %v2178
      %v2180 = vsel %vm333, %v2125, 0.0
      %v2181 = vadd.f32 %v2179, %v2180
      %v2182 = vsel %vm333, %v2126, 0.0
      %v2183 = vadd.f32 %v2181, %v2182
      %v2184 = vsel %vm333, %v2127, 0.0
      %v2185 = vadd.f32 %v2183, %v2184
      %v2186 = vsel %vm333, %v2128, 0.0
      %v2187 = vadd.f32 %v2185, %v2186
      %v2188 = vsel %vm333, %v2129, 0.0
      %v2189 = vadd.f32 %v2187, %v2188
      %v2190 = vsel %vm333, %v2130, 0.0
      %v2191 = vadd.f32 %v2189, %v2190
      %v2192 = vsel %vm333, %v2131, 0.0
      %v2193 = vadd.f32 %v2191, %v2192
      %v2194 = vsel %vm333, %v2132, 0.0
      %v2195 = vadd.f32 %v2193, %v2194
      %v2196 = vrot.slane %v2195, 4
      %v2197 = vadd.f32 %v2195, %v2196
      %v2198 = vrot.slane %v2197, 2
      %v2199 = vadd.f32 %v2197, %v2198
      %v2200 = vrot.slane %v2199, 1
      %v2201 = vadd.f32 %v2199, %v2200
      %2202 = vst.msk [vmem:[%s181 + $0x1] sm:$0x1] %vm2099, %v2201
      %p2203 = scmp.lt.s32.totalorder %s15, 1
      %s2204 = scalar_select %p2203, %s15, 1
      %s2205 = smul.addr %s2204, 32
      %s2206 = smul.addr %s2205, 4
      %s2207 = scalar_lea.vmem %s2, %s2206
      %p2208 = scmp.lt.s32.totalorder %s15, 1
      %s2209 = scalar_select %p2208, %s15, 1
      %s2210 = smul.addr %s2209, 2
      %s2211 = scalar_lea.vmem %s3, %s2210
      // Predicated region
      $region29: #{residual_conv3x3_block.3} parent=27 // pred_check
        %p2212 = pneg %p80
      $region30: #{residual_conv3x3_block.3} parent=27 // pred_check_branch
        %2214 = sbr.rel (%p2212) target = $region32
      $region31: #{residual_conv3x3_block.3} parent=27 // pred_region
        _
      $region32: #{residual_conv3x3_block.3} parent=27 // pred_fallthru
        _
      // Predicated region
      $region33: #{residual_conv3x3_block.3} parent=27 // pred_check
        %p2215 = pneg %p106
      $region34: #{residual_conv3x3_block.3} parent=27 // pred_check_branch
        %2217 = sbr.rel (%p2215) target = $region36
      $region35: #{residual_conv3x3_block.3} parent=27 // pred_region
        _
      $region36: #{residual_conv3x3_block.3} parent=27 // pred_fallthru
        _
    $region28: #{residual_conv3x3_block.3} parent=5 // pred_fallthru
      _
    %p2218 = scmp.le.s32.totalorder 2, %s10
    // Predicated region
    $region37: #{residual_conv3x3_block.3} parent=5 // pred_check
      %p2219 = pneg %p2218
    $region38: #{residual_conv3x3_block.3} parent=5 // pred_check_branch
      %2221 = sbr.rel (%p2219) target = $region40
    $region39: #{residual_conv3x3_block.3} parent=5 // pred_region
      %s2222 = ssub.s32 %s10, 2
      // Predicated region
      $region41: #{residual_conv3x3_block.3} parent=39 // pred_check
        %p2223 = pneg %p86
      $region42: #{residual_conv3x3_block.3} parent=39 // pred_check_branch
        %2225 = sbr.rel (%p2223) target = $region44
      $region43: #{residual_conv3x3_block.3} parent=39 // pred_region
        %p2226 = scmp.lt.s32.totalorder %s16, 1
        %s2227 = scalar_select %p2226, %s16, 1
        %s2228 = smul.addr %s2227, 32
        %s2229 = smul.addr %s2228, 4
        %s2230 = scalar_lea.vmem %s2, %s2229
      $region44: #{residual_conv3x3_block.3} parent=39 // pred_fallthru
        _
      // Predicated region
      $region45: #{residual_conv3x3_block.3} parent=39 // pred_check
        %p2231 = pneg %p112
      $region46: #{residual_conv3x3_block.3} parent=39 // pred_check_branch
        %2233 = sbr.rel (%p2231) target = $region48
      $region47: #{residual_conv3x3_block.3} parent=39 // pred_region
        %p2234 = scmp.lt.s32.totalorder %s16, 1
        %s2235 = scalar_select %p2234, %s16, 1
        %s2236 = smul.addr %s2235, 2
        %s2237 = scalar_lea.vmem %s3, %s2236
      $region48: #{residual_conv3x3_block.3} parent=39 // pred_fallthru
        _
    $region40: #{residual_conv3x3_block.3} parent=5 // pred_fallthru
      _
  $region6: #{residual_conv3x3_block.3} parent=0 // loop_footer
    %s14 = sadd.s32 1, %s10
  $region7: #{residual_conv3x3_block.3} parent=0 // loop_footer_branch
    %9 = sbr.rel target = $region3
  $region8: #{residual_conv3x3_block.3} parent=0 // loop_exit
    _

</llo_original>
